<compile_context>
chip_gen: v7x
topology: tpu7x:2x2x1
jax: 0.10.0
libtpu: 0.0.40
codegen_flags: <defaults>
</compile_context>

<pallas_src>
import functools

import jax
import jax.numpy as jnp
import numpy as np
from jax.experimental import pallas as pl
from jax.experimental.pallas import tpu as pltpu

SUBLANE = 8      # batch padding (vreg sublane count)
GATE_PAD = 32    # per-gate hidden-width quantum; 4 gates * 32 = 128 = one lane block


def _round_up(x, m):
    return (x + m - 1) // m * m


# ------------------------------------------------------------------
# Fused kernel: encoder L0 -> encoder L1 -> (last h) -> decoder L0 -> decoder L1
# ------------------------------------------------------------------
def _fused_autoencoder_kernel(
    x_ref,
    we0_ref, ue0_ref, be0_ref,      # encoder layer 0
    we1_ref, ue1_ref, be1_ref,      # encoder layer 1
    wd0_ref, ud0_ref, bd0_ref,      # decoder layer 0
    wd1_ref, ud1_ref, bd1_ref,      # decoder layer 1
    out_ref,
    gx_scr, seq_scr,
    *, T, B, Bp, F, PH,
):
    def sigmoid(v):
        # One EUP push (tanh) instead of exp + reciprocal; the mul/add ride spare VALU slots.
        return 0.5 * jnp.tanh(0.5 * v) + 0.5

    def project(lhs_f32, w_ref, b_ref):
        # bf16 MXU operands, f32 accumulation, f32 bias (element-wise math stays f32).
        return jnp.dot(lhs_f32.astype(jnp.bfloat16), w_ref[...],
                       preferred_element_type=jnp.float32) + b_ref[...]

    def recurrence(read_gx, whh_ref, write_h):
        """Serial LSTM recurrence; only h @ W_hh sits on the per-step critical path."""
        # TODO(synk): for larger T switch to lax.fori_loop(..., unroll=2..4); T=8 here.
        # TODO(synk): keep W_hh resident in the MXU (pltpu.matmul_push_rhs once per layer).
        h = jnp.zeros((Bp, PH), jnp.float32)
        c = jnp.zeros((Bp, PH), jnp.float32)
        for t in range(T):  # small, static -> fully unrolled, static slices
            gates = read_gx(t) + jnp.dot(
                h.astype(jnp.bfloat16), whh_ref[...],
                preferred_element_type=jnp.float32)
            i = sigmoid(gates[:, 0 * PH:1 * PH])
            f = sigmoid(gates[:, 1 * PH:2 * PH])
            g = jnp.tanh(gates[:, 2 * PH:3 * PH])
            o = sigmoid(gates[:, 3 * PH:4 * PH])
            c = f * c + i * g
            h = o * jnp.tanh(c)
            write_h(t, h)
        return h

    def gx_from_scr(t):
        return gx_scr[pl.ds(t * Bp, Bp), :]

    def write_seq(t, h):
        seq_scr[pl.ds(t * Bp, Bp), :] = h

    def write_out(t, h):
        out_ref[:, t * F:(t + 1) * F] = h[:B, :F].astype(out_ref.dtype)

    # ---- stage the (B, T*F) batch-major input as a zero-padded time-major slab in VMEM
    # (zero-padding keeps padded lanes/rows finite & harmless through the matmuls).
    seq_scr[...] = jnp.zeros_like(seq_scr)
    for t in range(T):
        seq_scr[pl.ds(t * Bp, B), :F] = x_ref[:, t * F:(t + 1) * F]

    # ---- encoder layer 0: hoisted batched input projection, then serial recurrence
    gx_scr[...] = project(seq_scr[...], we0_ref, be0_ref)
    recurrence(gx_from_scr, ue0_ref, write_seq)

    # ---- encoder layer 1 (only the last-step h is consumed downstream)
    gx_scr[...] = project(seq_scr[...], we1_ref, be1_ref)
    h_enc = recurrence(gx_from_scr, ue1_ref, lambda t, h: None)  # == encoder out[:, -1, :]

    # ---- decoder layer 0: constant input at every timestep -> project ONCE
    gx_d0 = project(h_enc, wd0_ref, bd0_ref)
    recurrence(lambda t: gx_d0, ud0_ref, write_seq)

    # ---- decoder layer 1: writes straight into the (B, T*F) output slab
    gx_scr[...] = project(seq_scr[...], wd1_ref, bd1_ref)
    recurrence(gx_from_scr, ud1_ref, write_out)


# ------------------------------------------------------------------
# Parameter construction (deterministic, synthetic) + packing to TPU layout.
# ------------------------------------------------------------------
def _pad_lstm_params(w_ih, w_hh, b_ih, b_hh, in_pad, hid_pad):
    """PyTorch-shaped (4H,In)/(4H,H)/(4H,) -> lane-packed (in_pad, 4*hid_pad) etc.

    Gate k occupies lanes [k*hid_pad, k*hid_pad+H); padding is exactly zero, which keeps
    padded h/c lanes identically zero through the recurrence (asserted below).
    Weights are returned in bf16 (MXU operands only); bias stays f32.
    """
    fourH, In = w_ih.shape
    H = fourH // 4
    wih_t = np.asarray(w_ih, np.float32).T   # (In, 4H)
    whh_t = np.asarray(w_hh, np.float32).T   # (H, 4H)
    b = np.asarray(b_ih, np.float32) + np.asarray(b_hh, np.float32)

    wih_p = np.zeros((in_pad, 4 * hid_pad), np.float32)
    whh_p = np.zeros((hid_pad, 4 * hid_pad), np.float32)
    b_p = np.zeros((1, 4 * hid_pad), np.float32)
    for k in range(4):
        wih_p[:In, k * hid_pad:k * hid_pad + H] = wih_t[:, k * H:(k + 1) * H]
        whh_p[:H, k * hid_pad:k * hid_pad + H] = whh_t[:, k * H:(k + 1) * H]
        b_p[0, k * hid_pad:k * hid_pad + H] = b[k * H:(k + 1) * H]

    # Zero-padding invariant (review correctness concern): padded rows/lanes must be 0.
    assert not wih_p[In:, :].any() and not whh_p[H:, :].any()
    for k in range(4):
        assert not wih_p[:, k * hid_pad + H:(k + 1) * hid_pad].any()
        assert not whh_p[:, k * hid_pad + H:(k + 1) * hid_pad].any()
        assert not b_p[:, k * hid_pad + H:(k + 1) * hid_pad].any()

    return (jnp.asarray(wih_p, jnp.bfloat16),
            jnp.asarray(whh_p, jnp.bfloat16),
            jnp.asarray(b_p, jnp.float32))


def init_autoencoder_params(input_size, hidden_size, n_layers=2, seed=0):
    assert n_layers == 2, "fused kernel is written for the module's n_layers=2"
    PH = _round_up(max(input_size, hidden_size), GATE_PAD)
    assert PH <= 128, "TODO(synk): tile the 4H gate dimension for hidden sizes > 128"

    key = jax.random.PRNGKey(seed)

    def make_layer(key, in_size, hid_size, scale=0.1):
        key, k1, k2, k3, k4 = jax.random.split(key, 5)
        w_ih = scale * jax.random.normal(k1, (4 * hid_size, in_size), jnp.float32)
        w_hh = scale * jax.random.normal(k2, (4 * hid_size, hid_size), jnp.float32)
        b_ih = scale * jax.random.normal(k3, (4 * hid_size,), jnp.float32)
        b_hh = scale * jax.random.normal(k4, (4 * hid_size,), jnp.float32)
        return key, (w_ih, w_hh, b_ih, b_hh)

    layer_defs = [
        (input_size, hidden_size),   # encoder layer 0
        (hidden_size, hidden_size),  # encoder layer 1
        (hidden_size, input_size),   # decoder layer 0 (hidden = output_size = input_size)
        (input_size, input_size),    # decoder layer 1
    ]
    raw = []
    for in_s, hid_s in layer_defs:
        key, lw = make_layer(key, in_s, hid_s)
        raw.append(lw)

    padded = [_pad_lstm_params(*lw, in_pad=PH, hid_pad=PH) for lw in raw]
    ref = [(w_ih.T, w_hh.T, (b_ih + b_hh)[None, :]) for (w_ih, w_hh, b_ih, b_hh) in raw]
    return {"padded": padded, "ref": ref}


# ------------------------------------------------------------------
# Forward pass (matches AutoEncoderLSTM.forward, eval-mode).
# ------------------------------------------------------------------
@jax.jit
def autoencoder_lstm_forward(x, params):
    """x: (B, T, input_size) -> (B, T, input_size)"""
    B, T, F = x.shape
    Bp = _round_up(max(B, 1), SUBLANE)
    PH = params["padded"][0][0].shape[1] // 4

    flat_w = [w for layer in params["padded"] for w in layer]

    kernel = functools.partial(_fused_autoencoder_kernel, T=T, B=B, Bp=Bp, F=F, PH=PH)

    # (B, T, F) -> (B, T*F) is a contiguous (metadata-only) reshape: no transpose / pad /
    # scatter in the wrapper; padding & time-major staging happen inside the kernel.
    x2 = x.reshape(B, T * F).astype(jnp.float32)

    out2 = pl.pallas_call(
        kernel,
        out_shape=jax.ShapeDtypeStruct((B, T * F), jnp.float32),
        grid_spec=pltpu.PrefetchScalarGridSpec(
            num_scalar_prefetch=0,
            grid=(1,),
            in_specs=[pl.BlockSpec((B, T * F), lambda i: (0, 0))]
            + [pl.BlockSpec(w.shape, lambda i: (0, 0)) for w in flat_w],
            out_specs=pl.BlockSpec((B, T * F), lambda i: (0, 0)),
            scratch_shapes=[
                # TODO(synk): chunk gx over T (emit_pipeline) for very long sequences on v7x.
                pltpu.VMEM((T * Bp, 4 * PH), jnp.float32),  # hoisted gate pre-activations
                pltpu.VMEM((T * Bp, PH), jnp.float32),      # staged input / per-layer out seq
            ],
        ),
        compiler_params=pltpu.CompilerParams(
            # TODO(synk): add a "parallel" batch-block grid axis for v7x dual TensorCores
            # once the batch is large enough to split.
            dimension_semantics=("arbitrary",),
            vmem_limit_bytes=32 * 1024 * 1024,
        ),
    )(x2, *flat_w)

    return out2.reshape(B, T, F)


# ------------------------------------------------------------------
# Pure-JAX reference (lax.scan, all-f32) for correctness checking.
# ------------------------------------------------------------------
def _ref_lstm_layer(x_tbf, wih_t, whh_t, bias):
    T, B, _ = x_tbf.shape
    H = whh_t.shape[0]

    def step(carry, x_t):
        h, c = carry
        gates = x_t @ wih_t + h @ whh_t + bias
        i = jax.nn.sigmoid(gates[:, 0 * H:1 * H])
        f = jax.nn.sigmoid(gates[:, 1 * H:2 * H])
        g = jnp.tanh(gates[:, 2 * H:3 * H])
        o = jax.nn.sigmoid(gates[:, 3 * H:4 * H])
        c = f * c + i * g
        h = o * jnp.tanh(c)
        return (h, c), h

    init = (jnp.zeros((B, H), jnp.float32), jnp.zeros((B, H), jnp.float32))
    _, out = jax.lax.scan(step, init, x_tbf)
    return out


def _ref_forward(x, params):
    B, T, _ = x.shape
    e0, e1, d0, d1 = params["ref"]
    h = jnp.transpose(x, (1, 0, 2)).astype(jnp.float32)
    h = _ref_lstm_layer(h, *e0)
    h = _ref_lstm_layer(h, *e1)
    enc_last = h[-1]
    d = jnp.broadcast_to(enc_last[None], (T, B, enc_last.shape[-1]))
    d = _ref_lstm_layer(d, *d0)
    d = _ref_lstm_layer(d, *d1)
    return jnp.transpose(d, (1, 0, 2))


# ------------------------------------------------------------------
if __name__ == "__main__":
    B, T = 2, 8
    input_size, hidden_size, n_layers = 8, 32, 2

    key = jax.random.PRNGKey(0)
    x = jax.random.normal(key, (B, T, input_size), jnp.float32)
    params = init_autoencoder_params(input_size, hidden_size, n_layers, seed=0)

    out = jax.block_until_ready(autoencoder_lstm_forward(x, params))
    ref = jax.block_until_ready(_ref_forward(x, params))
    assert out.shape == (B, T, input_size)
    # bf16 MXU operands (f32 accumulation) -> tolerance loosened vs. the all-f32 reference.
    np.testing.assert_allclose(np.asarray(out), np.asarray(ref), rtol=3e-2, atol=3e-2)

    print("KERNEL_OK")
</pallas_src>

<mosaic_0001>
module attributes {stable_mosaic.version = 11 : i64} {
  func.func @_fused_autoencoder_kernel(%arg0: i32, %arg1: memref<2x64xf32, #tpu.memory_space<vmem>>, %arg2: memref<32x128xbf16, #tpu.memory_space<vmem>>, %arg3: memref<32x128xbf16, #tpu.memory_space<vmem>>, %arg4: memref<1x128xf32, #tpu.memory_space<vmem>>, %arg5: memref<32x128xbf16, #tpu.memory_space<vmem>>, %arg6: memref<32x128xbf16, #tpu.memory_space<vmem>>, %arg7: memref<1x128xf32, #tpu.memory_space<vmem>>, %arg8: memref<32x128xbf16, #tpu.memory_space<vmem>>, %arg9: memref<32x128xbf16, #tpu.memory_space<vmem>>, %arg10: memref<1x128xf32, #tpu.memory_space<vmem>>, %arg11: memref<32x128xbf16, #tpu.memory_space<vmem>>, %arg12: memref<32x128xbf16, #tpu.memory_space<vmem>>, %arg13: memref<1x128xf32, #tpu.memory_space<vmem>>, %arg14: memref<2x64xf32, #tpu.memory_space<vmem>>, %arg15: memref<64x128xf32, #tpu.memory_space<vmem>>, %arg16: memref<64x32xf32, #tpu.memory_space<vmem>>) attributes {dimension_semantics = [#tpu.dimension_semantics<arbitrary>], iteration_bounds = array<i64: 1>, scalar_prefetch = 0 : i64, scratch_operands = 2 : i64, tpu.core_type = #tpu.core_type<tc>, window_params = [{pipeline_mode = #tpu.pipeline_mode<synchronous>, transform_indices = @transform_0, window_bounds = array<i64: 2, 64>}, {pipeline_mode = #tpu.pipeline_mode<synchronous>, transform_indices = @transform_1, window_bounds = array<i64: 32, 128>}, {pipeline_mode = #tpu.pipeline_mode<synchronous>, transform_indices = @transform_2, window_bounds = array<i64: 32, 128>}, {pipeline_mode = #tpu.pipeline_mode<synchronous>, transform_indices = @transform_3, window_bounds = array<i64: 1, 128>}, {pipeline_mode = #tpu.pipeline_mode<synchronous>, transform_indices = @transform_4, window_bounds = array<i64: 32, 128>}, {pipeline_mode = #tpu.pipeline_mode<synchronous>, transform_indices = @transform_5, window_bounds = array<i64: 32, 128>}, {pipeline_mode = #tpu.pipeline_mode<synchronous>, transform_indices = @transform_6, window_bounds = array<i64: 1, 128>}, {pipeline_mode = #tpu.pipeline_mode<synchronous>, transform_indices = @transform_7, window_bounds = array<i64: 32, 128>}, {pipeline_mode = #tpu.pipeline_mode<synchronous>, transform_indices = @transform_8, window_bounds = array<i64: 32, 128>}, {pipeline_mode = #tpu.pipeline_mode<synchronous>, transform_indices = @transform_9, window_bounds = array<i64: 1, 128>}, {pipeline_mode = #tpu.pipeline_mode<synchronous>, transform_indices = @transform_10, window_bounds = array<i64: 32, 128>}, {pipeline_mode = #tpu.pipeline_mode<synchronous>, transform_indices = @transform_11, window_bounds = array<i64: 32, 128>}, {pipeline_mode = #tpu.pipeline_mode<synchronous>, transform_indices = @transform_12, window_bounds = array<i64: 1, 128>}, {pipeline_mode = #tpu.pipeline_mode<synchronous>, transform_indices = @transform_13, window_bounds = array<i64: 2, 64>}]} {
    %cst = arith.constant 0.000000e+00 : f32
    %0 = vector.broadcast %cst : f32 to vector<64x32xf32>
    %c0 = arith.constant 0 : index
    %c0_0 = arith.constant 0 : index
    %1 = vector.load %arg16[%c0, %c0_0] : memref<64x32xf32, #tpu.memory_space<vmem>>, vector<64x32xf32>
    tpu.vector_store %arg16[%c0, %c0_0], %0 {strides = array<i32>} : memref<64x32xf32, #tpu.memory_space<vmem>>, vector<64x32xf32>,
    %c0_1 = arith.constant 0 : index
    %c0_2 = arith.constant 0 : index
    %2 = vector.load %arg1[%c0_1, %c0_2] : memref<2x64xf32, #tpu.memory_space<vmem>>, vector<2x8xf32>
    %c0_3 = arith.constant 0 : index
    %c0_4 = arith.constant 0 : index
    %3 = vector.load %arg16[%c0_3, %c0_4] : memref<64x32xf32, #tpu.memory_space<vmem>>, vector<2x8xf32>
    tpu.vector_store %arg16[%c0_3, %c0_4], %2 {strides = array<i32>} : memref<64x32xf32, #tpu.memory_space<vmem>>, vector<2x8xf32>,
    %c0_5 = arith.constant 0 : index
    %c8 = arith.constant 8 : index
    %4 = vector.load %arg1[%c0_5, %c8] : memref<2x64xf32, #tpu.memory_space<vmem>>, vector<2x8xf32>
    %c8_6 = arith.constant 8 : index
    %c0_7 = arith.constant 0 : index
    %5 = vector.load %arg16[%c8_6, %c0_7] : memref<64x32xf32, #tpu.memory_space<vmem>>, vector<2x8xf32>
    tpu.vector_store %arg16[%c8_6, %c0_7], %4 {strides = array<i32>} : memref<64x32xf32, #tpu.memory_space<vmem>>, vector<2x8xf32>,
    %c0_8 = arith.constant 0 : index
    %c16 = arith.constant 16 : index
    %6 = vector.load %arg1[%c0_8, %c16] : memref<2x64xf32, #tpu.memory_space<vmem>>, vector<2x8xf32>
    %c16_9 = arith.constant 16 : index
    %c0_10 = arith.constant 0 : index
    %7 = vector.load %arg16[%c16_9, %c0_10] : memref<64x32xf32, #tpu.memory_space<vmem>>, vector<2x8xf32>
    tpu.vector_store %arg16[%c16_9, %c0_10], %6 {strides = array<i32>} : memref<64x32xf32, #tpu.memory_space<vmem>>, vector<2x8xf32>,
    %c0_11 = arith.constant 0 : index
    %c24 = arith.constant 24 : index
    %8 = vector.load %arg1[%c0_11, %c24] : memref<2x64xf32, #tpu.memory_space<vmem>>, vector<2x8xf32>
    %c24_12 = arith.constant 24 : index
    %c0_13 = arith.constant 0 : index
    %9 = vector.load %arg16[%c24_12, %c0_13] : memref<64x32xf32, #tpu.memory_space<vmem>>, vector<2x8xf32>
    tpu.vector_store %arg16[%c24_12, %c0_13], %8 {strides = array<i32>} : memref<64x32xf32, #tpu.memory_space<vmem>>, vector<2x8xf32>,
    %c0_14 = arith.constant 0 : index
    %c32 = arith.constant 32 : index
    %10 = vector.load %arg1[%c0_14, %c32] : memref<2x64xf32, #tpu.memory_space<vmem>>, vector<2x8xf32>
    %c32_15 = arith.constant 32 : index
    %c0_16 = arith.constant 0 : index
    %11 = vector.load %arg16[%c32_15, %c0_16] : memref<64x32xf32, #tpu.memory_space<vmem>>, vector<2x8xf32>
    tpu.vector_store %arg16[%c32_15, %c0_16], %10 {strides = array<i32>} : memref<64x32xf32, #tpu.memory_space<vmem>>, vector<2x8xf32>,
    %c0_17 = arith.constant 0 : index
    %c40 = arith.constant 40 : index
    %12 = vector.load %arg1[%c0_17, %c40] : memref<2x64xf32, #tpu.memory_space<vmem>>, vector<2x8xf32>
    %c40_18 = arith.constant 40 : index
    %c0_19 = arith.constant 0 : index
    %13 = vector.load %arg16[%c40_18, %c0_19] : memref<64x32xf32, #tpu.memory_space<vmem>>, vector<2x8xf32>
    tpu.vector_store %arg16[%c40_18, %c0_19], %12 {strides = array<i32>} : memref<64x32xf32, #tpu.memory_space<vmem>>, vector<2x8xf32>,
    %c0_20 = arith.constant 0 : index
    %c48 = arith.constant 48 : index
    %14 = vector.load %arg1[%c0_20, %c48] : memref<2x64xf32, #tpu.memory_space<vmem>>, vector<2x8xf32>
    %c48_21 = arith.constant 48 : index
    %c0_22 = arith.constant 0 : index
    %15 = vector.load %arg16[%c48_21, %c0_22] : memref<64x32xf32, #tpu.memory_space<vmem>>, vector<2x8xf32>
    tpu.vector_store %arg16[%c48_21, %c0_22], %14 {strides = array<i32>} : memref<64x32xf32, #tpu.memory_space<vmem>>, vector<2x8xf32>,
    %c0_23 = arith.constant 0 : index
    %c56 = arith.constant 56 : index
    %16 = vector.load %arg1[%c0_23, %c56] : memref<2x64xf32, #tpu.memory_space<vmem>>, vector<2x8xf32>
    %c56_24 = arith.constant 56 : index
    %c0_25 = arith.constant 0 : index
    %17 = vector.load %arg16[%c56_24, %c0_25] : memref<64x32xf32, #tpu.memory_space<vmem>>, vector<2x8xf32>
    tpu.vector_store %arg16[%c56_24, %c0_25], %16 {strides = array<i32>} : memref<64x32xf32, #tpu.memory_space<vmem>>, vector<2x8xf32>,
    %c0_26 = arith.constant 0 : index
    %c0_27 = arith.constant 0 : index
    %18 = vector.load %arg16[%c0_26, %c0_27] : memref<64x32xf32, #tpu.memory_space<vmem>>, vector<64x32xf32>
    %19 = arith.truncf %18 : vector<64x32xf32> to vector<64x32xbf16>
    %c0_28 = arith.constant 0 : index
    %c0_29 = arith.constant 0 : index
    %20 = vector.load %arg2[%c0_28, %c0_29] : memref<32x128xbf16, #tpu.memory_space<vmem>>, vector<32x128xbf16>
    %cst_30 = arith.constant dense<0.000000e+00> : vector<64x128xf32>
    %21 = tpu.matmul %19, %20, %cst_30 {dimension_numbers = #tpu.dot_dimension_numbers<[1], [0], [0], [1], [0, 0, 1, 1], [], []>} : vector<64x32xbf16>, vector<32x128xbf16>, vector<64x128xf32> -> vector<64x128xf32>
    %c0_31 = arith.constant 0 : index
    %c0_32 = arith.constant 0 : index
    %22 = vector.load %arg4[%c0_31, %c0_32] : memref<1x128xf32, #tpu.memory_space<vmem>>, vector<1x128xf32>
    %23 = vector.broadcast %22 : vector<1x128xf32> to vector<64x128xf32>
    %24 = arith.addf %21, %23 : vector<64x128xf32>
    %c0_33 = arith.constant 0 : index
    %c0_34 = arith.constant 0 : index
    %25 = vector.load %arg15[%c0_33, %c0_34] : memref<64x128xf32, #tpu.memory_space<vmem>>, vector<64x128xf32>
    tpu.vector_store %arg15[%c0_33, %c0_34], %24 {strides = array<i32>} : memref<64x128xf32, #tpu.memory_space<vmem>>, vector<64x128xf32>,
    %cst_35 = arith.constant 0.000000e+00 : f32
    %26 = vector.broadcast %cst_35 : f32 to vector<8x32xf32>
    %cst_36 = arith.constant 0.000000e+00 : f32
    %27 = vector.broadcast %cst_36 : f32 to vector<8x32xf32>
    %c0_37 = arith.constant 0 : index
    %c0_38 = arith.constant 0 : index
    %28 = vector.load %arg15[%c0_37, %c0_38] : memref<64x128xf32, #tpu.memory_space<vmem>>, vector<8x128xf32>
    %29 = arith.truncf %26 : vector<8x32xf32> to vector<8x32xbf16>
    %c0_39 = arith.constant 0 : index
    %c0_40 = arith.constant 0 : index
    %30 = vector.load %arg3[%c0_39, %c0_40] : memref<32x128xbf16, #tpu.memory_space<vmem>>, vector<32x128xbf16>
    %cst_41 = arith.constant dense<0.000000e+00> : vector<8x128xf32>
    %31 = tpu.matmul %29, %30, %cst_41 {dimension_numbers = #tpu.dot_dimension_numbers<[1], [0], [0], [1], [0, 0, 1, 1], [], []>} : vector<8x32xbf16>, vector<32x128xbf16>, vector<8x128xf32> -> vector<8x128xf32>
    %32 = arith.addf %28, %31 : vector<8x128xf32>
    %33 = vector.extract_strided_slice %32 {offsets = [0, 0], sizes = [8, 32], strides = [1, 1]} : vector<8x128xf32> to vector<8x32xf32>
    %cst_42 = arith.constant 5.000000e-01 : f32
    %34 = vector.broadcast %cst_42 : f32 to vector<8x32xf32>
    %35 = arith.mulf %34, %33 : vector<8x32xf32>
    %36 = math.tanh %35 : vector<8x32xf32>
    %cst_43 = arith.constant 5.000000e-01 : f32
    %37 = vector.broadcast %cst_43 : f32 to vector<8x32xf32>
    %38 = arith.mulf %37, %36 : vector<8x32xf32>
    %cst_44 = arith.constant 5.000000e-01 : f32
    %39 = vector.broadcast %cst_44 : f32 to vector<8x32xf32>
    %40 = arith.addf %38, %39 : vector<8x32xf32>
    %41 = vector.extract_strided_slice %32 {offsets = [0, 32], sizes = [8, 32], strides = [1, 1]} : vector<8x128xf32> to vector<8x32xf32>
    %cst_45 = arith.constant 5.000000e-01 : f32
    %42 = vector.broadcast %cst_45 : f32 to vector<8x32xf32>
    %43 = arith.mulf %42, %41 : vector<8x32xf32>
    %44 = math.tanh %43 : vector<8x32xf32>
    %cst_46 = arith.constant 5.000000e-01 : f32
    %45 = vector.broadcast %cst_46 : f32 to vector<8x32xf32>
    %46 = arith.mulf %45, %44 : vector<8x32xf32>
    %cst_47 = arith.constant 5.000000e-01 : f32
    %47 = vector.broadcast %cst_47 : f32 to vector<8x32xf32>
    %48 = arith.addf %46, %47 : vector<8x32xf32>
    %49 = vector.extract_strided_slice %32 {offsets = [0, 64], sizes = [8, 32], strides = [1, 1]} : vector<8x128xf32> to vector<8x32xf32>
    %50 = math.tanh %49 : vector<8x32xf32>
    %51 = vector.extract_strided_slice %32 {offsets = [0, 96], sizes = [8, 32], strides = [1, 1]} : vector<8x128xf32> to vector<8x32xf32>
    %cst_48 = arith.constant 5.000000e-01 : f32
    %52 = vector.broadcast %cst_48 : f32 to vector<8x32xf32>
    %53 = arith.mulf %52, %51 : vector<8x32xf32>
    %54 = math.tanh %53 : vector<8x32xf32>
    %cst_49 = arith.constant 5.000000e-01 : f32
    %55 = vector.broadcast %cst_49 : f32 to vector<8x32xf32>
    %56 = arith.mulf %55, %54 : vector<8x32xf32>
    %cst_50 = arith.constant 5.000000e-01 : f32
    %57 = vector.broadcast %cst_50 : f32 to vector<8x32xf32>
    %58 = arith.addf %56, %57 : vector<8x32xf32>
    %59 = arith.mulf %48, %27 : vector<8x32xf32>
    %60 = arith.mulf %40, %50 : vector<8x32xf32>
    %61 = arith.addf %59, %60 : vector<8x32xf32>
    %62 = math.tanh %61 : vector<8x32xf32>
    %63 = arith.mulf %58, %62 : vector<8x32xf32>
    %c0_51 = arith.constant 0 : index
    %c0_52 = arith.constant 0 : index
    %64 = vector.load %arg16[%c0_51, %c0_52] : memref<64x32xf32, #tpu.memory_space<vmem>>, vector<8x32xf32>
    tpu.vector_store %arg16[%c0_51, %c0_52], %63 {strides = array<i32>} : memref<64x32xf32, #tpu.memory_space<vmem>>, vector<8x32xf32>,
    %c8_53 = arith.constant 8 : index
    %c0_54 = arith.constant 0 : index
    %65 = vector.load %arg15[%c8_53, %c0_54] : memref<64x128xf32, #tpu.memory_space<vmem>>, vector<8x128xf32>
    %66 = arith.truncf %63 : vector<8x32xf32> to vector<8x32xbf16>
    %c0_55 = arith.constant 0 : index
    %c0_56 = arith.constant 0 : index
    %67 = vector.load %arg3[%c0_55, %c0_56] : memref<32x128xbf16, #tpu.memory_space<vmem>>, vector<32x128xbf16>
    %cst_57 = arith.constant dense<0.000000e+00> : vector<8x128xf32>
    %68 = tpu.matmul %66, %67, %cst_57 {dimension_numbers = #tpu.dot_dimension_numbers<[1], [0], [0], [1], [0, 0, 1, 1], [], []>} : vector<8x32xbf16>, vector<32x128xbf16>, vector<8x128xf32> -> vector<8x128xf32>
    %69 = arith.addf %65, %68 : vector<8x128xf32>
    %70 = vector.extract_strided_slice %69 {offsets = [0, 0], sizes = [8, 32], strides = [1, 1]} : vector<8x128xf32> to vector<8x32xf32>
    %cst_58 = arith.constant 5.000000e-01 : f32
    %71 = vector.broadcast %cst_58 : f32 to vector<8x32xf32>
    %72 = arith.mulf %71, %70 : vector<8x32xf32>
    %73 = math.tanh %72 : vector<8x32xf32>
    %cst_59 = arith.constant 5.000000e-01 : f32
    %74 = vector.broadcast %cst_59 : f32 to vector<8x32xf32>
    %75 = arith.mulf %74, %73 : vector<8x32xf32>
    %cst_60 = arith.constant 5.000000e-01 : f32
    %76 = vector.broadcast %cst_60 : f32 to vector<8x32xf32>
    %77 = arith.addf %75, %76 : vector<8x32xf32>
    %78 = vector.extract_strided_slice %69 {offsets = [0, 32], sizes = [8, 32], strides = [1, 1]} : vector<8x128xf32> to vector<8x32xf32>
    %cst_61 = arith.constant 5.000000e-01 : f32
    %79 = vector.broadcast %cst_61 : f32 to vector<8x32xf32>
    %80 = arith.mulf %79, %78 : vector<8x32xf32>
    %81 = math.tanh %80 : vector<8x32xf32>
    %cst_62 = arith.constant 5.000000e-01 : f32
    %82 = vector.broadcast %cst_62 : f32 to vector<8x32xf32>
    %83 = arith.mulf %82, %81 : vector<8x32xf32>
    %cst_63 = arith.constant 5.000000e-01 : f32
    %84 = vector.broadcast %cst_63 : f32 to vector<8x32xf32>
    %85 = arith.addf %83, %84 : vector<8x32xf32>
    %86 = vector.extract_strided_slice %69 {offsets = [0, 64], sizes = [8, 32], strides = [1, 1]} : vector<8x128xf32> to vector<8x32xf32>
    %87 = math.tanh %86 : vector<8x32xf32>
    %88 = vector.extract_strided_slice %69 {offsets = [0, 96], sizes = [8, 32], strides = [1, 1]} : vector<8x128xf32> to vector<8x32xf32>
    %cst_64 = arith.constant 5.000000e-01 : f32
    %89 = vector.broadcast %cst_64 : f32 to vector<8x32xf32>
    %90 = arith.mulf %89, %88 : vector<8x32xf32>
    %91 = math.tanh %90 : vector<8x32xf32>
    %cst_65 = arith.constant 5.000000e-01 : f32
    %92 = vector.broadcast %cst_65 : f32 to vector<8x32xf32>
    %93 = arith.mulf %92, %91 : vector<8x32xf32>
    %cst_66 = arith.constant 5.000000e-01 : f32
    %94 = vector.broadcast %cst_66 : f32 to vector<8x32xf32>
    %95 = arith.addf %93, %94 : vector<8x32xf32>
    %96 = arith.mulf %85, %61 : vector<8x32xf32>
    %97 = arith.mulf %77, %87 : vector<8x32xf32>
    %98 = arith.addf %96, %97 : vector<8x32xf32>
    %99 = math.tanh %98 : vector<8x32xf32>
    %100 = arith.mulf %95, %99 : vector<8x32xf32>
    %c8_67 = arith.constant 8 : index
    %c0_68 = arith.constant 0 : index
    %101 = vector.load %arg16[%c8_67, %c0_68] : memref<64x32xf32, #tpu.memory_space<vmem>>, vector<8x32xf32>
    tpu.vector_store %arg16[%c8_67, %c0_68], %100 {strides = array<i32>} : memref<64x32xf32, #tpu.memory_space<vmem>>, vector<8x32xf32>,
    %c16_69 = arith.constant 16 : index
    %c0_70 = arith.constant 0 : index
    %102 = vector.load %arg15[%c16_69, %c0_70] : memref<64x128xf32, #tpu.memory_space<vmem>>, vector<8x128xf32>
    %103 = arith.truncf %100 : vector<8x32xf32> to vector<8x32xbf16>
    %c0_71 = arith.constant 0 : index
    %c0_72 = arith.constant 0 : index
    %104 = vector.load %arg3[%c0_71, %c0_72] : memref<32x128xbf16, #tpu.memory_space<vmem>>, vector<32x128xbf16>
    %cst_73 = arith.constant dense<0.000000e+00> : vector<8x128xf32>
    %105 = tpu.matmul %103, %104, %cst_73 {dimension_numbers = #tpu.dot_dimension_numbers<[1], [0], [0], [1], [0, 0, 1, 1], [], []>} : vector<8x32xbf16>, vector<32x128xbf16>, vector<8x128xf32> -> vector<8x128xf32>
    %106 = arith.addf %102, %105 : vector<8x128xf32>
    %107 = vector.extract_strided_slice %106 {offsets = [0, 0], sizes = [8, 32], strides = [1, 1]} : vector<8x128xf32> to vector<8x32xf32>
    %cst_74 = arith.constant 5.000000e-01 : f32
    %108 = vector.broadcast %cst_74 : f32 to vector<8x32xf32>
    %109 = arith.mulf %108, %107 : vector<8x32xf32>
    %110 = math.tanh %109 : vector<8x32xf32>
    %cst_75 = arith.constant 5.000000e-01 : f32
    %111 = vector.broadcast %cst_75 : f32 to vector<8x32xf32>
    %112 = arith.mulf %111, %110 : vector<8x32xf32>
    %cst_76 = arith.constant 5.000000e-01 : f32
    %113 = vector.broadcast %cst_76 : f32 to vector<8x32xf32>
    %114 = arith.addf %112, %113 : vector<8x32xf32>
    %115 = vector.extract_strided_slice %106 {offsets = [0, 32], sizes = [8, 32], strides = [1, 1]} : vector<8x128xf32> to vector<8x32xf32>
    %cst_77 = arith.constant 5.000000e-01 : f32
    %116 = vector.broadcast %cst_77 : f32 to vector<8x32xf32>
    %117 = arith.mulf %116, %115 : vector<8x32xf32>
    %118 = math.tanh %117 : vector<8x32xf32>
    %cst_78 = arith.constant 5.000000e-01 : f32
    %119 = vector.broadcast %cst_78 : f32 to vector<8x32xf32>
    %120 = arith.mulf %119, %118 : vector<8x32xf32>
    %cst_79 = arith.constant 5.000000e-01 : f32
    %121 = vector.broadcast %cst_79 : f32 to vector<8x32xf32>
    %122 = arith.addf %120, %121 : vector<8x32xf32>
    %123 = vector.extract_strided_slice %106 {offsets = [0, 64], sizes = [8, 32], strides = [1, 1]} : vector<8x128xf32> to vector<8x32xf32>
    %124 = math.tanh %123 : vector<8x32xf32>
    %125 = vector.extract_strided_slice %106 {offsets = [0, 96], sizes = [8, 32], strides = [1, 1]} : vector<8x128xf32> to vector<8x32xf32>
    %cst_80 = arith.constant 5.000000e-01 : f32
    %126 = vector.broadcast %cst_80 : f32 to vector<8x32xf32>
    %127 = arith.mulf %126, %125 : vector<8x32xf32>
    %128 = math.tanh %127 : vector<8x32xf32>
    %cst_81 = arith.constant 5.000000e-01 : f32
    %129 = vector.broadcast %cst_81 : f32 to vector<8x32xf32>
    %130 = arith.mulf %129, %128 : vector<8x32xf32>
    %cst_82 = arith.constant 5.000000e-01 : f32
    %131 = vector.broadcast %cst_82 : f32 to vector<8x32xf32>
    %132 = arith.addf %130, %131 : vector<8x32xf32>
    %133 = arith.mulf %122, %98 : vector<8x32xf32>
    %134 = arith.mulf %114, %124 : vector<8x32xf32>
    %135 = arith.addf %133, %134 : vector<8x32xf32>
    %136 = math.tanh %135 : vector<8x32xf32>
    %137 = arith.mulf %132, %136 : vector<8x32xf32>
    %c16_83 = arith.constant 16 : index
    %c0_84 = arith.constant 0 : index
    %138 = vector.load %arg16[%c16_83, %c0_84] : memref<64x32xf32, #tpu.memory_space<vmem>>, vector<8x32xf32>
    tpu.vector_store %arg16[%c16_83, %c0_84], %137 {strides = array<i32>} : memref<64x32xf32, #tpu.memory_space<vmem>>, vector<8x32xf32>,
    %c24_85 = arith.constant 24 : index
    %c0_86 = arith.constant 0 : index
    %139 = vector.load %arg15[%c24_85, %c0_86] : memref<64x128xf32, #tpu.memory_space<vmem>>, vector<8x128xf32>
    %140 = arith.truncf %137 : vector<8x32xf32> to vector<8x32xbf16>
    %c0_87 = arith.constant 0 : index
    %c0_88 = arith.constant 0 : index
    %141 = vector.load %arg3[%c0_87, %c0_88] : memref<32x128xbf16, #tpu.memory_space<vmem>>, vector<32x128xbf16>
    %cst_89 = arith.constant dense<0.000000e+00> : vector<8x128xf32>
    %142 = tpu.matmul %140, %141, %cst_89 {dimension_numbers = #tpu.dot_dimension_numbers<[1], [0], [0], [1], [0, 0, 1, 1], [], []>} : vector<8x32xbf16>, vector<32x128xbf16>, vector<8x128xf32> -> vector<8x128xf32>
    %143 = arith.addf %139, %142 : vector<8x128xf32>
    %144 = vector.extract_strided_slice %143 {offsets = [0, 0], sizes = [8, 32], strides = [1, 1]} : vector<8x128xf32> to vector<8x32xf32>
    %cst_90 = arith.constant 5.000000e-01 : f32
    %145 = vector.broadcast %cst_90 : f32 to vector<8x32xf32>
    %146 = arith.mulf %145, %144 : vector<8x32xf32>
    %147 = math.tanh %146 : vector<8x32xf32>
    %cst_91 = arith.constant 5.000000e-01 : f32
    %148 = vector.broadcast %cst_91 : f32 to vector<8x32xf32>
    %149 = arith.mulf %148, %147 : vector<8x32xf32>
    %cst_92 = arith.constant 5.000000e-01 : f32
    %150 = vector.broadcast %cst_92 : f32 to vector<8x32xf32>
    %151 = arith.addf %149, %150 : vector<8x32xf32>
    %152 = vector.extract_strided_slice %143 {offsets = [0, 32], sizes = [8, 32], strides = [1, 1]} : vector<8x128xf32> to vector<8x32xf32>
    %cst_93 = arith.constant 5.000000e-01 : f32
    %153 = vector.broadcast %cst_93 : f32 to vector<8x32xf32>
    %154 = arith.mulf %153, %152 : vector<8x32xf32>
    %155 = math.tanh %154 : vector<8x32xf32>
    %cst_94 = arith.constant 5.000000e-01 : f32
    %156 = vector.broadcast %cst_94 : f32 to vector<8x32xf32>
    %157 = arith.mulf %156, %155 : vector<8x32xf32>
    %cst_95 = arith.constant 5.000000e-01 : f32
    %158 = vector.broadcast %cst_95 : f32 to vector<8x32xf32>
    %159 = arith.addf %157, %158 : vector<8x32xf32>
    %160 = vector.extract_strided_slice %143 {offsets = [0, 64], sizes = [8, 32], strides = [1, 1]} : vector<8x128xf32> to vector<8x32xf32>
    %161 = math.tanh %160 : vector<8x32xf32>
    %162 = vector.extract_strided_slice %143 {offsets = [0, 96], sizes = [8, 32], strides = [1, 1]} : vector<8x128xf32> to vector<8x32xf32>
    %cst_96 = arith.constant 5.000000e-01 : f32
    %163 = vector.broadcast %cst_96 : f32 to vector<8x32xf32>
    %164 = arith.mulf %163, %162 : vector<8x32xf32>
    %165 = math.tanh %164 : vector<8x32xf32>
    %cst_97 = arith.constant 5.000000e-01 : f32
    %166 = vector.broadcast %cst_97 : f32 to vector<8x32xf32>
    %167 = arith.mulf %166, %165 : vector<8x32xf32>
    %cst_98 = arith.constant 5.000000e-01 : f32
    %168 = vector.broadcast %cst_98 : f32 to vector<8x32xf32>
    %169 = arith.addf %167, %168 : vector<8x32xf32>
    %170 = arith.mulf %159, %135 : vector<8x32xf32>
    %171 = arith.mulf %151, %161 : vector<8x32xf32>
    %172 = arith.addf %170, %171 : vector<8x32xf32>
    %173 = math.tanh %172 : vector<8x32xf32>
    %174 = arith.mulf %169, %173 : vector<8x32xf32>
    %c24_99 = arith.constant 24 : index
    %c0_100 = arith.constant 0 : index
    %175 = vector.load %arg16[%c24_99, %c0_100] : memref<64x32xf32, #tpu.memory_space<vmem>>, vector<8x32xf32>
    tpu.vector_store %arg16[%c24_99, %c0_100], %174 {strides = array<i32>} : memref<64x32xf32, #tpu.memory_space<vmem>>, vector<8x32xf32>,
    %c32_101 = arith.constant 32 : index
    %c0_102 = arith.constant 0 : index
    %176 = vector.load %arg15[%c32_101, %c0_102] : memref<64x128xf32, #tpu.memory_space<vmem>>, vector<8x128xf32>
    %177 = arith.truncf %174 : vector<8x32xf32> to vector<8x32xbf16>
    %c0_103 = arith.constant 0 : index
    %c0_104 = arith.constant 0 : index
    %178 = vector.load %arg3[%c0_103, %c0_104] : memref<32x128xbf16, #tpu.memory_space<vmem>>, vector<32x128xbf16>
    %cst_105 = arith.constant dense<0.000000e+00> : vector<8x128xf32>
    %179 = tpu.matmul %177, %178, %cst_105 {dimension_numbers = #tpu.dot_dimension_numbers<[1], [0], [0], [1], [0, 0, 1, 1], [], []>} : vector<8x32xbf16>, vector<32x128xbf16>, vector<8x128xf32> -> vector<8x128xf32>
    %180 = arith.addf %176, %179 : vector<8x128xf32>
    %181 = vector.extract_strided_slice %180 {offsets = [0, 0], sizes = [8, 32], strides = [1, 1]} : vector<8x128xf32> to vector<8x32xf32>
    %cst_106 = arith.constant 5.000000e-01 : f32
    %182 = vector.broadcast %cst_106 : f32 to vector<8x32xf32>
    %183 = arith.mulf %182, %181 : vector<8x32xf32>
    %184 = math.tanh %183 : vector<8x32xf32>
    %cst_107 = arith.constant 5.000000e-01 : f32
    %185 = vector.broadcast %cst_107 : f32 to vector<8x32xf32>
    %186 = arith.mulf %185, %184 : vector<8x32xf32>
    %cst_108 = arith.constant 5.000000e-01 : f32
    %187 = vector.broadcast %cst_108 : f32 to vector<8x32xf32>
    %188 = arith.addf %186, %187 : vector<8x32xf32>
    %189 = vector.extract_strided_slice %180 {offsets = [0, 32], sizes = [8, 32], strides = [1, 1]} : vector<8x128xf32> to vector<8x32xf32>
    %cst_109 = arith.constant 5.000000e-01 : f32
    %190 = vector.broadcast %cst_109 : f32 to vector<8x32xf32>
    %191 = arith.mulf %190, %189 : vector<8x32xf32>
    %192 = math.tanh %191 : vector<8x32xf32>
    %cst_110 = arith.constant 5.000000e-01 : f32
    %193 = vector.broadcast %cst_110 : f32 to vector<8x32xf32>
    %194 = arith.mulf %193, %192 : vector<8x32xf32>
    %cst_111 = arith.constant 5.000000e-01 : f32
    %195 = vector.broadcast %cst_111 : f32 to vector<8x32xf32>
    %196 = arith.addf %194, %195 : vector<8x32xf32>
    %197 = vector.extract_strided_slice %180 {offsets = [0, 64], sizes = [8, 32], strides = [1, 1]} : vector<8x128xf32> to vector<8x32xf32>
    %198 = math.tanh %197 : vector<8x32xf32>
    %199 = vector.extract_strided_slice %180 {offsets = [0, 96], sizes = [8, 32], strides = [1, 1]} : vector<8x128xf32> to vector<8x32xf32>
    %cst_112 = arith.constant 5.000000e-01 : f32
    %200 = vector.broadcast %cst_112 : f32 to vector<8x32xf32>
    %201 = arith.mulf %200, %199 : vector<8x32xf32>
    %202 = math.tanh %201 : vector<8x32xf32>
    %cst_113 = arith.constant 5.000000e-01 : f32
    %203 = vector.broadcast %cst_113 : f32 to vector<8x32xf32>
    %204 = arith.mulf %203, %202 : vector<8x32xf32>
    %cst_114 = arith.constant 5.000000e-01 : f32
    %205 = vector.broadcast %cst_114 : f32 to vector<8x32xf32>
    %206 = arith.addf %204, %205 : vector<8x32xf32>
    %207 = arith.mulf %196, %172 : vector<8x32xf32>
    %208 = arith.mulf %188, %198 : vector<8x32xf32>
    %209 = arith.addf %207, %208 : vector<8x32xf32>
    %210 = math.tanh %209 : vector<8x32xf32>
    %211 = arith.mulf %206, %210 : vector<8x32xf32>
    %c32_115 = arith.constant 32 : index
    %c0_116 = arith.constant 0 : index
    %212 = vector.load %arg16[%c32_115, %c0_116] : memref<64x32xf32, #tpu.memory_space<vmem>>, vector<8x32xf32>
    tpu.vector_store %arg16[%c32_115, %c0_116], %211 {strides = array<i32>} : memref<64x32xf32, #tpu.memory_space<vmem>>, vector<8x32xf32>,
    %c40_117 = arith.constant 40 : index
    %c0_118 = arith.constant 0 : index
    %213 = vector.load %arg15[%c40_117, %c0_118] : memref<64x128xf32, #tpu.memory_space<vmem>>, vector<8x128xf32>
    %214 = arith.truncf %211 : vector<8x32xf32> to vector<8x32xbf16>
    %c0_119 = arith.constant 0 : index
    %c0_120 = arith.constant 0 : index
    %215 = vector.load %arg3[%c0_119, %c0_120] : memref<32x128xbf16, #tpu.memory_space<vmem>>, vector<32x128xbf16>
    %cst_121 = arith.constant dense<0.000000e+00> : vector<8x128xf32>
    %216 = tpu.matmul %214, %215, %cst_121 {dimension_numbers = #tpu.dot_dimension_numbers<[1], [0], [0], [1], [0, 0, 1, 1], [], []>} : vector<8x32xbf16>, vector<32x128xbf16>, vector<8x128xf32> -> vector<8x128xf32>
    %217 = arith.addf %213, %216 : vector<8x128xf32>
    %218 = vector.extract_strided_slice %217 {offsets = [0, 0], sizes = [8, 32], strides = [1, 1]} : vector<8x128xf32> to vector<8x32xf32>
    %cst_122 = arith.constant 5.000000e-01 : f32
    %219 = vector.broadcast %cst_122 : f32 to vector<8x32xf32>
    %220 = arith.mulf %219, %218 : vector<8x32xf32>
    %221 = math.tanh %220 : vector<8x32xf32>
    %cst_123 = arith.constant 5.000000e-01 : f32
    %222 = vector.broadcast %cst_123 : f32 to vector<8x32xf32>
    %223 = arith.mulf %222, %221 : vector<8x32xf32>
    %cst_124 = arith.constant 5.000000e-01 : f32
    %224 = vector.broadcast %cst_124 : f32 to vector<8x32xf32>
    %225 = arith.addf %223, %224 : vector<8x32xf32>
    %226 = vector.extract_strided_slice %217 {offsets = [0, 32], sizes = [8, 32], strides = [1, 1]} : vector<8x128xf32> to vector<8x32xf32>
    %cst_125 = arith.constant 5.000000e-01 : f32
    %227 = vector.broadcast %cst_125 : f32 to vector<8x32xf32>
    %228 = arith.mulf %227, %226 : vector<8x32xf32>
    %229 = math.tanh %228 : vector<8x32xf32>
    %cst_126 = arith.constant 5.000000e-01 : f32
    %230 = vector.broadcast %cst_126 : f32 to vector<8x32xf32>
    %231 = arith.mulf %230, %229 : vector<8x32xf32>
    %cst_127 = arith.constant 5.000000e-01 : f32
    %232 = vector.broadcast %cst_127 : f32 to vector<8x32xf32>
    %233 = arith.addf %231, %232 : vector<8x32xf32>
    %234 = vector.extract_strided_slice %217 {offsets = [0, 64], sizes = [8, 32], strides = [1, 1]} : vector<8x128xf32> to vector<8x32xf32>
    %235 = math.tanh %234 : vector<8x32xf32>
    %236 = vector.extract_strided_slice %217 {offsets = [0, 96], sizes = [8, 32], strides = [1, 1]} : vector<8x128xf32> to vector<8x32xf32>
    %cst_128 = arith.constant 5.000000e-01 : f32
    %237 = vector.broadcast %cst_128 : f32 to vector<8x32xf32>
    %238 = arith.mulf %237, %236 : vector<8x32xf32>
    %239 = math.tanh %238 : vector<8x32xf32>
    %cst_129 = arith.constant 5.000000e-01 : f32
    %240 = vector.broadcast %cst_129 : f32 to vector<8x32xf32>
    %241 = arith.mulf %240, %239 : vector<8x32xf32>
    %cst_130 = arith.constant 5.000000e-01 : f32
    %242 = vector.broadcast %cst_130 : f32 to vector<8x32xf32>
    %243 = arith.addf %241, %242 : vector<8x32xf32>
    %244 = arith.mulf %233, %209 : vector<8x32xf32>
    %245 = arith.mulf %225, %235 : vector<8x32xf32>
    %246 = arith.addf %244, %245 : vector<8x32xf32>
    %247 = math.tanh %246 : vector<8x32xf32>
    %248 = arith.mulf %243, %247 : vector<8x32xf32>
    %c40_131 = arith.constant 40 : index
    %c0_132 = arith.constant 0 : index
    %249 = vector.load %arg16[%c40_131, %c0_132] : memref<64x32xf32, #tpu.memory_space<vmem>>, vector<8x32xf32>
    tpu.vector_store %arg16[%c40_131, %c0_132], %248 {strides = array<i32>} : memref<64x32xf32, #tpu.memory_space<vmem>>, vector<8x32xf32>,
    %c48_133 = arith.constant 48 : index
    %c0_134 = arith.constant 0 : index
    %250 = vector.load %arg15[%c48_133, %c0_134] : memref<64x128xf32, #tpu.memory_space<vmem>>, vector<8x128xf32>
    %251 = arith.truncf %248 : vector<8x32xf32> to vector<8x32xbf16>
    %c0_135 = arith.constant 0 : index
    %c0_136 = arith.constant 0 : index
    %252 = vector.load %arg3[%c0_135, %c0_136] : memref<32x128xbf16, #tpu.memory_space<vmem>>, vector<32x128xbf16>
    %cst_137 = arith.constant dense<0.000000e+00> : vector<8x128xf32>
    %253 = tpu.matmul %251, %252, %cst_137 {dimension_numbers = #tpu.dot_dimension_numbers<[1], [0], [0], [1], [0, 0, 1, 1], [], []>} : vector<8x32xbf16>, vector<32x128xbf16>, vector<8x128xf32> -> vector<8x128xf32>
    %254 = arith.addf %250, %253 : vector<8x128xf32>
    %255 = vector.extract_strided_slice %254 {offsets = [0, 0], sizes = [8, 32], strides = [1, 1]} : vector<8x128xf32> to vector<8x32xf32>
    %cst_138 = arith.constant 5.000000e-01 : f32
    %256 = vector.broadcast %cst_138 : f32 to vector<8x32xf32>
    %257 = arith.mulf %256, %255 : vector<8x32xf32>
    %258 = math.tanh %257 : vector<8x32xf32>
    %cst_139 = arith.constant 5.000000e-01 : f32
    %259 = vector.broadcast %cst_139 : f32 to vector<8x32xf32>
    %260 = arith.mulf %259, %258 : vector<8x32xf32>
    %cst_140 = arith.constant 5.000000e-01 : f32
    %261 = vector.broadcast %cst_140 : f32 to vector<8x32xf32>
    %262 = arith.addf %260, %261 : vector<8x32xf32>
    %263 = vector.extract_strided_slice %254 {offsets = [0, 32], sizes = [8, 32], strides = [1, 1]} : vector<8x128xf32> to vector<8x32xf32>
    %cst_141 = arith.constant 5.000000e-01 : f32
    %264 = vector.broadcast %cst_141 : f32 to vector<8x32xf32>
    %265 = arith.mulf %264, %263 : vector<8x32xf32>
    %266 = math.tanh %265 : vector<8x32xf32>
    %cst_142 = arith.constant 5.000000e-01 : f32
    %267 = vector.broadcast %cst_142 : f32 to vector<8x32xf32>
    %268 = arith.mulf %267, %266 : vector<8x32xf32>
    %cst_143 = arith.constant 5.000000e-01 : f32
    %269 = vector.broadcast %cst_143 : f32 to vector<8x32xf32>
    %270 = arith.addf %268, %269 : vector<8x32xf32>
    %271 = vector.extract_strided_slice %254 {offsets = [0, 64], sizes = [8, 32], strides = [1, 1]} : vector<8x128xf32> to vector<8x32xf32>
    %272 = math.tanh %271 : vector<8x32xf32>
    %273 = vector.extract_strided_slice %254 {offsets = [0, 96], sizes = [8, 32], strides = [1, 1]} : vector<8x128xf32> to vector<8x32xf32>
    %cst_144 = arith.constant 5.000000e-01 : f32
    %274 = vector.broadcast %cst_144 : f32 to vector<8x32xf32>
    %275 = arith.mulf %274, %273 : vector<8x32xf32>
    %276 = math.tanh %275 : vector<8x32xf32>
    %cst_145 = arith.constant 5.000000e-01 : f32
    %277 = vector.broadcast %cst_145 : f32 to vector<8x32xf32>
    %278 = arith.mulf %277, %276 : vector<8x32xf32>
    %cst_146 = arith.constant 5.000000e-01 : f32
    %279 = vector.broadcast %cst_146 : f32 to vector<8x32xf32>
    %280 = arith.addf %278, %279 : vector<8x32xf32>
    %281 = arith.mulf %270, %246 : vector<8x32xf32>
    %282 = arith.mulf %262, %272 : vector<8x32xf32>
    %283 = arith.addf %281, %282 : vector<8x32xf32>
    %284 = math.tanh %283 : vector<8x32xf32>
    %285 = arith.mulf %280, %284 : vector<8x32xf32>
    %c48_147 = arith.constant 48 : index
    %c0_148 = arith.constant 0 : index
    %286 = vector.load %arg16[%c48_147, %c0_148] : memref<64x32xf32, #tpu.memory_space<vmem>>, vector<8x32xf32>
    tpu.vector_store %arg16[%c48_147, %c0_148], %285 {strides = array<i32>} : memref<64x32xf32, #tpu.memory_space<vmem>>, vector<8x32xf32>,
    %c56_149 = arith.constant 56 : index
    %c0_150 = arith.constant 0 : index
    %287 = vector.load %arg15[%c56_149, %c0_150] : memref<64x128xf32, #tpu.memory_space<vmem>>, vector<8x128xf32>
    %288 = arith.truncf %285 : vector<8x32xf32> to vector<8x32xbf16>
    %c0_151 = arith.constant 0 : index
    %c0_152 = arith.constant 0 : index
    %289 = vector.load %arg3[%c0_151, %c0_152] : memref<32x128xbf16, #tpu.memory_space<vmem>>, vector<32x128xbf16>
    %cst_153 = arith.constant dense<0.000000e+00> : vector<8x128xf32>
    %290 = tpu.matmul %288, %289, %cst_153 {dimension_numbers = #tpu.dot_dimension_numbers<[1], [0], [0], [1], [0, 0, 1, 1], [], []>} : vector<8x32xbf16>, vector<32x128xbf16>, vector<8x128xf32> -> vector<8x128xf32>
    %291 = arith.addf %287, %290 : vector<8x128xf32>
    %292 = vector.extract_strided_slice %291 {offsets = [0, 0], sizes = [8, 32], strides = [1, 1]} : vector<8x128xf32> to vector<8x32xf32>
    %cst_154 = arith.constant 5.000000e-01 : f32
    %293 = vector.broadcast %cst_154 : f32 to vector<8x32xf32>
    %294 = arith.mulf %293, %292 : vector<8x32xf32>
    %295 = math.tanh %294 : vector<8x32xf32>
    %cst_155 = arith.constant 5.000000e-01 : f32
    %296 = vector.broadcast %cst_155 : f32 to vector<8x32xf32>
    %297 = arith.mulf %296, %295 : vector<8x32xf32>
    %cst_156 = arith.constant 5.000000e-01 : f32
    %298 = vector.broadcast %cst_156 : f32 to vector<8x32xf32>
    %299 = arith.addf %297, %298 : vector<8x32xf32>
    %300 = vector.extract_strided_slice %291 {offsets = [0, 32], sizes = [8, 32], strides = [1, 1]} : vector<8x128xf32> to vector<8x32xf32>
    %cst_157 = arith.constant 5.000000e-01 : f32
    %301 = vector.broadcast %cst_157 : f32 to vector<8x32xf32>
    %302 = arith.mulf %301, %300 : vector<8x32xf32>
    %303 = math.tanh %302 : vector<8x32xf32>
    %cst_158 = arith.constant 5.000000e-01 : f32
    %304 = vector.broadcast %cst_158 : f32 to vector<8x32xf32>
    %305 = arith.mulf %304, %303 : vector<8x32xf32>
    %cst_159 = arith.constant 5.000000e-01 : f32
    %306 = vector.broadcast %cst_159 : f32 to vector<8x32xf32>
    %307 = arith.addf %305, %306 : vector<8x32xf32>
    %308 = vector.extract_strided_slice %291 {offsets = [0, 64], sizes = [8, 32], strides = [1, 1]} : vector<8x128xf32> to vector<8x32xf32>
    %309 = math.tanh %308 : vector<8x32xf32>
    %310 = vector.extract_strided_slice %291 {offsets = [0, 96], sizes = [8, 32], strides = [1, 1]} : vector<8x128xf32> to vector<8x32xf32>
    %cst_160 = arith.constant 5.000000e-01 : f32
    %311 = vector.broadcast %cst_160 : f32 to vector<8x32xf32>
    %312 = arith.mulf %311, %310 : vector<8x32xf32>
    %313 = math.tanh %312 : vector<8x32xf32>
    %cst_161 = arith.constant 5.000000e-01 : f32
    %314 = vector.broadcast %cst_161 : f32 to vector<8x32xf32>
    %315 = arith.mulf %314, %313 : vector<8x32xf32>
    %cst_162 = arith.constant 5.000000e-01 : f32
    %316 = vector.broadcast %cst_162 : f32 to vector<8x32xf32>
    %317 = arith.addf %315, %316 : vector<8x32xf32>
    %318 = arith.mulf %307, %283 : vector<8x32xf32>
    %319 = arith.mulf %299, %309 : vector<8x32xf32>
    %320 = arith.addf %318, %319 : vector<8x32xf32>
    %321 = math.tanh %320 : vector<8x32xf32>
    %322 = arith.mulf %317, %321 : vector<8x32xf32>
    %c56_163 = arith.constant 56 : index
    %c0_164 = arith.constant 0 : index
    %323 = vector.load %arg16[%c56_163, %c0_164] : memref<64x32xf32, #tpu.memory_space<vmem>>, vector<8x32xf32>
    tpu.vector_store %arg16[%c56_163, %c0_164], %322 {strides = array<i32>} : memref<64x32xf32, #tpu.memory_space<vmem>>, vector<8x32xf32>,
    %c0_165 = arith.constant 0 : index
    %c0_166 = arith.constant 0 : index
    %324 = vector.load %arg16[%c0_165, %c0_166] : memref<64x32xf32, #tpu.memory_space<vmem>>, vector<64x32xf32>
    %325 = arith.truncf %324 : vector<64x32xf32> to vector<64x32xbf16>
    %c0_167 = arith.constant 0 : index
    %c0_168 = arith.constant 0 : index
    %326 = vector.load %arg5[%c0_167, %c0_168] : memref<32x128xbf16, #tpu.memory_space<vmem>>, vector<32x128xbf16>
    %cst_169 = arith.constant dense<0.000000e+00> : vector<64x128xf32>
    %327 = tpu.matmul %325, %326, %cst_169 {dimension_numbers = #tpu.dot_dimension_numbers<[1], [0], [0], [1], [0, 0, 1, 1], [], []>} : vector<64x32xbf16>, vector<32x128xbf16>, vector<64x128xf32> -> vector<64x128xf32>
    %c0_170 = arith.constant 0 : index
    %c0_171 = arith.constant 0 : index
    %328 = vector.load %arg7[%c0_170, %c0_171] : memref<1x128xf32, #tpu.memory_space<vmem>>, vector<1x128xf32>
    %329 = vector.broadcast %328 : vector<1x128xf32> to vector<64x128xf32>
    %330 = arith.addf %327, %329 : vector<64x128xf32>
    %c0_172 = arith.constant 0 : index
    %c0_173 = arith.constant 0 : index
    %331 = vector.load %arg15[%c0_172, %c0_173] : memref<64x128xf32, #tpu.memory_space<vmem>>, vector<64x128xf32>
    tpu.vector_store %arg15[%c0_172, %c0_173], %330 {strides = array<i32>} : memref<64x128xf32, #tpu.memory_space<vmem>>, vector<64x128xf32>,
    %cst_174 = arith.constant 0.000000e+00 : f32
    %332 = vector.broadcast %cst_174 : f32 to vector<8x32xf32>
    %cst_175 = arith.constant 0.000000e+00 : f32
    %333 = vector.broadcast %cst_175 : f32 to vector<8x32xf32>
    %c0_176 = arith.constant 0 : index
    %c0_177 = arith.constant 0 : index
    %334 = vector.load %arg15[%c0_176, %c0_177] : memref<64x128xf32, #tpu.memory_space<vmem>>, vector<8x128xf32>
    %335 = arith.truncf %332 : vector<8x32xf32> to vector<8x32xbf16>
    %c0_178 = arith.constant 0 : index
    %c0_179 = arith.constant 0 : index
    %336 = vector.load %arg6[%c0_178, %c0_179] : memref<32x128xbf16, #tpu.memory_space<vmem>>, vector<32x128xbf16>
    %cst_180 = arith.constant dense<0.000000e+00> : vector<8x128xf32>
    %337 = tpu.matmul %335, %336, %cst_180 {dimension_numbers = #tpu.dot_dimension_numbers<[1], [0], [0], [1], [0, 0, 1, 1], [], []>} : vector<8x32xbf16>, vector<32x128xbf16>, vector<8x128xf32> -> vector<8x128xf32>
    %338 = arith.addf %334, %337 : vector<8x128xf32>
    %339 = vector.extract_strided_slice %338 {offsets = [0, 0], sizes = [8, 32], strides = [1, 1]} : vector<8x128xf32> to vector<8x32xf32>
    %cst_181 = arith.constant 5.000000e-01 : f32
    %340 = vector.broadcast %cst_181 : f32 to vector<8x32xf32>
    %341 = arith.mulf %340, %339 : vector<8x32xf32>
    %342 = math.tanh %341 : vector<8x32xf32>
    %cst_182 = arith.constant 5.000000e-01 : f32
    %343 = vector.broadcast %cst_182 : f32 to vector<8x32xf32>
    %344 = arith.mulf %343, %342 : vector<8x32xf32>
    %cst_183 = arith.constant 5.000000e-01 : f32
    %345 = vector.broadcast %cst_183 : f32 to vector<8x32xf32>
    %346 = arith.addf %344, %345 : vector<8x32xf32>
    %347 = vector.extract_strided_slice %338 {offsets = [0, 32], sizes = [8, 32], strides = [1, 1]} : vector<8x128xf32> to vector<8x32xf32>
    %cst_184 = arith.constant 5.000000e-01 : f32
    %348 = vector.broadcast %cst_184 : f32 to vector<8x32xf32>
    %349 = arith.mulf %348, %347 : vector<8x32xf32>
    %350 = math.tanh %349 : vector<8x32xf32>
    %cst_185 = arith.constant 5.000000e-01 : f32
    %351 = vector.broadcast %cst_185 : f32 to vector<8x32xf32>
    %352 = arith.mulf %351, %350 : vector<8x32xf32>
    %cst_186 = arith.constant 5.000000e-01 : f32
    %353 = vector.broadcast %cst_186 : f32 to vector<8x32xf32>
    %354 = arith.addf %352, %353 : vector<8x32xf32>
    %355 = vector.extract_strided_slice %338 {offsets = [0, 64], sizes = [8, 32], strides = [1, 1]} : vector<8x128xf32> to vector<8x32xf32>
    %356 = math.tanh %355 : vector<8x32xf32>
    %357 = vector.extract_strided_slice %338 {offsets = [0, 96], sizes = [8, 32], strides = [1, 1]} : vector<8x128xf32> to vector<8x32xf32>
    %cst_187 = arith.constant 5.000000e-01 : f32
    %358 = vector.broadcast %cst_187 : f32 to vector<8x32xf32>
    %359 = arith.mulf %358, %357 : vector<8x32xf32>
    %360 = math.tanh %359 : vector<8x32xf32>
    %cst_188 = arith.constant 5.000000e-01 : f32
    %361 = vector.broadcast %cst_188 : f32 to vector<8x32xf32>
    %362 = arith.mulf %361, %360 : vector<8x32xf32>
    %cst_189 = arith.constant 5.000000e-01 : f32
    %363 = vector.broadcast %cst_189 : f32 to vector<8x32xf32>
    %364 = arith.addf %362, %363 : vector<8x32xf32>
    %365 = arith.mulf %354, %333 : vector<8x32xf32>
    %366 = arith.mulf %346, %356 : vector<8x32xf32>
    %367 = arith.addf %365, %366 : vector<8x32xf32>
    %368 = math.tanh %367 : vector<8x32xf32>
    %369 = arith.mulf %364, %368 : vector<8x32xf32>
    %c8_190 = arith.constant 8 : index
    %c0_191 = arith.constant 0 : index
    %370 = vector.load %arg15[%c8_190, %c0_191] : memref<64x128xf32, #tpu.memory_space<vmem>>, vector<8x128xf32>
    %371 = arith.truncf %369 : vector<8x32xf32> to vector<8x32xbf16>
    %c0_192 = arith.constant 0 : index
    %c0_193 = arith.constant 0 : index
    %372 = vector.load %arg6[%c0_192, %c0_193] : memref<32x128xbf16, #tpu.memory_space<vmem>>, vector<32x128xbf16>
    %cst_194 = arith.constant dense<0.000000e+00> : vector<8x128xf32>
    %373 = tpu.matmul %371, %372, %cst_194 {dimension_numbers = #tpu.dot_dimension_numbers<[1], [0], [0], [1], [0, 0, 1, 1], [], []>} : vector<8x32xbf16>, vector<32x128xbf16>, vector<8x128xf32> -> vector<8x128xf32>
    %374 = arith.addf %370, %373 : vector<8x128xf32>
    %375 = vector.extract_strided_slice %374 {offsets = [0, 0], sizes = [8, 32], strides = [1, 1]} : vector<8x128xf32> to vector<8x32xf32>
    %cst_195 = arith.constant 5.000000e-01 : f32
    %376 = vector.broadcast %cst_195 : f32 to vector<8x32xf32>
    %377 = arith.mulf %376, %375 : vector<8x32xf32>
    %378 = math.tanh %377 : vector<8x32xf32>
    %cst_196 = arith.constant 5.000000e-01 : f32
    %379 = vector.broadcast %cst_196 : f32 to vector<8x32xf32>
    %380 = arith.mulf %379, %378 : vector<8x32xf32>
    %cst_197 = arith.constant 5.000000e-01 : f32
    %381 = vector.broadcast %cst_197 : f32 to vector<8x32xf32>
    %382 = arith.addf %380, %381 : vector<8x32xf32>
    %383 = vector.extract_strided_slice %374 {offsets = [0, 32], sizes = [8, 32], strides = [1, 1]} : vector<8x128xf32> to vector<8x32xf32>
    %cst_198 = arith.constant 5.000000e-01 : f32
    %384 = vector.broadcast %cst_198 : f32 to vector<8x32xf32>
    %385 = arith.mulf %384, %383 : vector<8x32xf32>
    %386 = math.tanh %385 : vector<8x32xf32>
    %cst_199 = arith.constant 5.000000e-01 : f32
    %387 = vector.broadcast %cst_199 : f32 to vector<8x32xf32>
    %388 = arith.mulf %387, %386 : vector<8x32xf32>
    %cst_200 = arith.constant 5.000000e-01 : f32
    %389 = vector.broadcast %cst_200 : f32 to vector<8x32xf32>
    %390 = arith.addf %388, %389 : vector<8x32xf32>
    %391 = vector.extract_strided_slice %374 {offsets = [0, 64], sizes = [8, 32], strides = [1, 1]} : vector<8x128xf32> to vector<8x32xf32>
    %392 = math.tanh %391 : vector<8x32xf32>
    %393 = vector.extract_strided_slice %374 {offsets = [0, 96], sizes = [8, 32], strides = [1, 1]} : vector<8x128xf32> to vector<8x32xf32>
    %cst_201 = arith.constant 5.000000e-01 : f32
    %394 = vector.broadcast %cst_201 : f32 to vector<8x32xf32>
    %395 = arith.mulf %394, %393 : vector<8x32xf32>
    %396 = math.tanh %395 : vector<8x32xf32>
    %cst_202 = arith.constant 5.000000e-01 : f32
    %397 = vector.broadcast %cst_202 : f32 to vector<8x32xf32>
    %398 = arith.mulf %397, %396 : vector<8x32xf32>
    %cst_203 = arith.constant 5.000000e-01 : f32
    %399 = vector.broadcast %cst_203 : f32 to vector<8x32xf32>
    %400 = arith.addf %398, %399 : vector<8x32xf32>
    %401 = arith.mulf %390, %367 : vector<8x32xf32>
    %402 = arith.mulf %382, %392 : vector<8x32xf32>
    %403 = arith.addf %401, %402 : vector<8x32xf32>
    %404 = math.tanh %403 : vector<8x32xf32>
    %405 = arith.mulf %400, %404 : vector<8x32xf32>
    %c16_204 = arith.constant 16 : index
    %c0_205 = arith.constant 0 : index
    %406 = vector.load %arg15[%c16_204, %c0_205] : memref<64x128xf32, #tpu.memory_space<vmem>>, vector<8x128xf32>
    %407 = arith.truncf %405 : vector<8x32xf32> to vector<8x32xbf16>
    %c0_206 = arith.constant 0 : index
    %c0_207 = arith.constant 0 : index
    %408 = vector.load %arg6[%c0_206, %c0_207] : memref<32x128xbf16, #tpu.memory_space<vmem>>, vector<32x128xbf16>
    %cst_208 = arith.constant dense<0.000000e+00> : vector<8x128xf32>
    %409 = tpu.matmul %407, %408, %cst_208 {dimension_numbers = #tpu.dot_dimension_numbers<[1], [0], [0], [1], [0, 0, 1, 1], [], []>} : vector<8x32xbf16>, vector<32x128xbf16>, vector<8x128xf32> -> vector<8x128xf32>
    %410 = arith.addf %406, %409 : vector<8x128xf32>
    %411 = vector.extract_strided_slice %410 {offsets = [0, 0], sizes = [8, 32], strides = [1, 1]} : vector<8x128xf32> to vector<8x32xf32>
    %cst_209 = arith.constant 5.000000e-01 : f32
    %412 = vector.broadcast %cst_209 : f32 to vector<8x32xf32>
    %413 = arith.mulf %412, %411 : vector<8x32xf32>
    %414 = math.tanh %413 : vector<8x32xf32>
    %cst_210 = arith.constant 5.000000e-01 : f32
    %415 = vector.broadcast %cst_210 : f32 to vector<8x32xf32>
    %416 = arith.mulf %415, %414 : vector<8x32xf32>
    %cst_211 = arith.constant 5.000000e-01 : f32
    %417 = vector.broadcast %cst_211 : f32 to vector<8x32xf32>
    %418 = arith.addf %416, %417 : vector<8x32xf32>
    %419 = vector.extract_strided_slice %410 {offsets = [0, 32], sizes = [8, 32], strides = [1, 1]} : vector<8x128xf32> to vector<8x32xf32>
    %cst_212 = arith.constant 5.000000e-01 : f32
    %420 = vector.broadcast %cst_212 : f32 to vector<8x32xf32>
    %421 = arith.mulf %420, %419 : vector<8x32xf32>
    %422 = math.tanh %421 : vector<8x32xf32>
    %cst_213 = arith.constant 5.000000e-01 : f32
    %423 = vector.broadcast %cst_213 : f32 to vector<8x32xf32>
    %424 = arith.mulf %423, %422 : vector<8x32xf32>
    %cst_214 = arith.constant 5.000000e-01 : f32
    %425 = vector.broadcast %cst_214 : f32 to vector<8x32xf32>
    %426 = arith.addf %424, %425 : vector<8x32xf32>
    %427 = vector.extract_strided_slice %410 {offsets = [0, 64], sizes = [8, 32], strides = [1, 1]} : vector<8x128xf32> to vector<8x32xf32>
    %428 = math.tanh %427 : vector<8x32xf32>
    %429 = vector.extract_strided_slice %410 {offsets = [0, 96], sizes = [8, 32], strides = [1, 1]} : vector<8x128xf32> to vector<8x32xf32>
    %cst_215 = arith.constant 5.000000e-01 : f32
    %430 = vector.broadcast %cst_215 : f32 to vector<8x32xf32>
    %431 = arith.mulf %430, %429 : vector<8x32xf32>
    %432 = math.tanh %431 : vector<8x32xf32>
    %cst_216 = arith.constant 5.000000e-01 : f32
    %433 = vector.broadcast %cst_216 : f32 to vector<8x32xf32>
    %434 = arith.mulf %433, %432 : vector<8x32xf32>
    %cst_217 = arith.constant 5.000000e-01 : f32
    %435 = vector.broadcast %cst_217 : f32 to vector<8x32xf32>
    %436 = arith.addf %434, %435 : vector<8x32xf32>
    %437 = arith.mulf %426, %403 : vector<8x32xf32>
    %438 = arith.mulf %418, %428 : vector<8x32xf32>
    %439 = arith.addf %437, %438 : vector<8x32xf32>
    %440 = math.tanh %439 : vector<8x32xf32>
    %441 = arith.mulf %436, %440 : vector<8x32xf32>
    %c24_218 = arith.constant 24 : index
    %c0_219 = arith.constant 0 : index
    %442 = vector.load %arg15[%c24_218, %c0_219] : memref<64x128xf32, #tpu.memory_space<vmem>>, vector<8x128xf32>
    %443 = arith.truncf %441 : vector<8x32xf32> to vector<8x32xbf16>
    %c0_220 = arith.constant 0 : index
    %c0_221 = arith.constant 0 : index
    %444 = vector.load %arg6[%c0_220, %c0_221] : memref<32x128xbf16, #tpu.memory_space<vmem>>, vector<32x128xbf16>
    %cst_222 = arith.constant dense<0.000000e+00> : vector<8x128xf32>
    %445 = tpu.matmul %443, %444, %cst_222 {dimension_numbers = #tpu.dot_dimension_numbers<[1], [0], [0], [1], [0, 0, 1, 1], [], []>} : vector<8x32xbf16>, vector<32x128xbf16>, vector<8x128xf32> -> vector<8x128xf32>
    %446 = arith.addf %442, %445 : vector<8x128xf32>
    %447 = vector.extract_strided_slice %446 {offsets = [0, 0], sizes = [8, 32], strides = [1, 1]} : vector<8x128xf32> to vector<8x32xf32>
    %cst_223 = arith.constant 5.000000e-01 : f32
    %448 = vector.broadcast %cst_223 : f32 to vector<8x32xf32>
    %449 = arith.mulf %448, %447 : vector<8x32xf32>
    %450 = math.tanh %449 : vector<8x32xf32>
    %cst_224 = arith.constant 5.000000e-01 : f32
    %451 = vector.broadcast %cst_224 : f32 to vector<8x32xf32>
    %452 = arith.mulf %451, %450 : vector<8x32xf32>
    %cst_225 = arith.constant 5.000000e-01 : f32
    %453 = vector.broadcast %cst_225 : f32 to vector<8x32xf32>
    %454 = arith.addf %452, %453 : vector<8x32xf32>
    %455 = vector.extract_strided_slice %446 {offsets = [0, 32], sizes = [8, 32], strides = [1, 1]} : vector<8x128xf32> to vector<8x32xf32>
    %cst_226 = arith.constant 5.000000e-01 : f32
    %456 = vector.broadcast %cst_226 : f32 to vector<8x32xf32>
    %457 = arith.mulf %456, %455 : vector<8x32xf32>
    %458 = math.tanh %457 : vector<8x32xf32>
    %cst_227 = arith.constant 5.000000e-01 : f32
    %459 = vector.broadcast %cst_227 : f32 to vector<8x32xf32>
    %460 = arith.mulf %459, %458 : vector<8x32xf32>
    %cst_228 = arith.constant 5.000000e-01 : f32
    %461 = vector.broadcast %cst_228 : f32 to vector<8x32xf32>
    %462 = arith.addf %460, %461 : vector<8x32xf32>
    %463 = vector.extract_strided_slice %446 {offsets = [0, 64], sizes = [8, 32], strides = [1, 1]} : vector<8x128xf32> to vector<8x32xf32>
    %464 = math.tanh %463 : vector<8x32xf32>
    %465 = vector.extract_strided_slice %446 {offsets = [0, 96], sizes = [8, 32], strides = [1, 1]} : vector<8x128xf32> to vector<8x32xf32>
    %cst_229 = arith.constant 5.000000e-01 : f32
    %466 = vector.broadcast %cst_229 : f32 to vector<8x32xf32>
    %467 = arith.mulf %466, %465 : vector<8x32xf32>
    %468 = math.tanh %467 : vector<8x32xf32>
    %cst_230 = arith.constant 5.000000e-01 : f32
    %469 = vector.broadcast %cst_230 : f32 to vector<8x32xf32>
    %470 = arith.mulf %469, %468 : vector<8x32xf32>
    %cst_231 = arith.constant 5.000000e-01 : f32
    %471 = vector.broadcast %cst_231 : f32 to vector<8x32xf32>
    %472 = arith.addf %470, %471 : vector<8x32xf32>
    %473 = arith.mulf %462, %439 : vector<8x32xf32>
    %474 = arith.mulf %454, %464 : vector<8x32xf32>
    %475 = arith.addf %473, %474 : vector<8x32xf32>
    %476 = math.tanh %475 : vector<8x32xf32>
    %477 = arith.mulf %472, %476 : vector<8x32xf32>
    %c32_232 = arith.constant 32 : index
    %c0_233 = arith.constant 0 : index
    %478 = vector.load %arg15[%c32_232, %c0_233] : memref<64x128xf32, #tpu.memory_space<vmem>>, vector<8x128xf32>
    %479 = arith.truncf %477 : vector<8x32xf32> to vector<8x32xbf16>
    %c0_234 = arith.constant 0 : index
    %c0_235 = arith.constant 0 : index
    %480 = vector.load %arg6[%c0_234, %c0_235] : memref<32x128xbf16, #tpu.memory_space<vmem>>, vector<32x128xbf16>
    %cst_236 = arith.constant dense<0.000000e+00> : vector<8x128xf32>
    %481 = tpu.matmul %479, %480, %cst_236 {dimension_numbers = #tpu.dot_dimension_numbers<[1], [0], [0], [1], [0, 0, 1, 1], [], []>} : vector<8x32xbf16>, vector<32x128xbf16>, vector<8x128xf32> -> vector<8x128xf32>
    %482 = arith.addf %478, %481 : vector<8x128xf32>
    %483 = vector.extract_strided_slice %482 {offsets = [0, 0], sizes = [8, 32], strides = [1, 1]} : vector<8x128xf32> to vector<8x32xf32>
    %cst_237 = arith.constant 5.000000e-01 : f32
    %484 = vector.broadcast %cst_237 : f32 to vector<8x32xf32>
    %485 = arith.mulf %484, %483 : vector<8x32xf32>
    %486 = math.tanh %485 : vector<8x32xf32>
    %cst_238 = arith.constant 5.000000e-01 : f32
    %487 = vector.broadcast %cst_238 : f32 to vector<8x32xf32>
    %488 = arith.mulf %487, %486 : vector<8x32xf32>
    %cst_239 = arith.constant 5.000000e-01 : f32
    %489 = vector.broadcast %cst_239 : f32 to vector<8x32xf32>
    %490 = arith.addf %488, %489 : vector<8x32xf32>
    %491 = vector.extract_strided_slice %482 {offsets = [0, 32], sizes = [8, 32], strides = [1, 1]} : vector<8x128xf32> to vector<8x32xf32>
    %cst_240 = arith.constant 5.000000e-01 : f32
    %492 = vector.broadcast %cst_240 : f32 to vector<8x32xf32>
    %493 = arith.mulf %492, %491 : vector<8x32xf32>
    %494 = math.tanh %493 : vector<8x32xf32>
    %cst_241 = arith.constant 5.000000e-01 : f32
    %495 = vector.broadcast %cst_241 : f32 to vector<8x32xf32>
    %496 = arith.mulf %495, %494 : vector<8x32xf32>
    %cst_242 = arith.constant 5.000000e-01 : f32
    %497 = vector.broadcast %cst_242 : f32 to vector<8x32xf32>
    %498 = arith.addf %496, %497 : vector<8x32xf32>
    %499 = vector.extract_strided_slice %482 {offsets = [0, 64], sizes = [8, 32], strides = [1, 1]} : vector<8x128xf32> to vector<8x32xf32>
    %500 = math.tanh %499 : vector<8x32xf32>
    %501 = vector.extract_strided_slice %482 {offsets = [0, 96], sizes = [8, 32], strides = [1, 1]} : vector<8x128xf32> to vector<8x32xf32>
    %cst_243 = arith.constant 5.000000e-01 : f32
    %502 = vector.broadcast %cst_243 : f32 to vector<8x32xf32>
    %503 = arith.mulf %502, %501 : vector<8x32xf32>
    %504 = math.tanh %503 : vector<8x32xf32>
    %cst_244 = arith.constant 5.000000e-01 : f32
    %505 = vector.broadcast %cst_244 : f32 to vector<8x32xf32>
    %506 = arith.mulf %505, %504 : vector<8x32xf32>
    %cst_245 = arith.constant 5.000000e-01 : f32
    %507 = vector.broadcast %cst_245 : f32 to vector<8x32xf32>
    %508 = arith.addf %506, %507 : vector<8x32xf32>
    %509 = arith.mulf %498, %475 : vector<8x32xf32>
    %510 = arith.mulf %490, %500 : vector<8x32xf32>
    %511 = arith.addf %509, %510 : vector<8x32xf32>
    %512 = math.tanh %511 : vector<8x32xf32>
    %513 = arith.mulf %508, %512 : vector<8x32xf32>
    %c40_246 = arith.constant 40 : index
    %c0_247 = arith.constant 0 : index
    %514 = vector.load %arg15[%c40_246, %c0_247] : memref<64x128xf32, #tpu.memory_space<vmem>>, vector<8x128xf32>
    %515 = arith.truncf %513 : vector<8x32xf32> to vector<8x32xbf16>
    %c0_248 = arith.constant 0 : index
    %c0_249 = arith.constant 0 : index
    %516 = vector.load %arg6[%c0_248, %c0_249] : memref<32x128xbf16, #tpu.memory_space<vmem>>, vector<32x128xbf16>
    %cst_250 = arith.constant dense<0.000000e+00> : vector<8x128xf32>
    %517 = tpu.matmul %515, %516, %cst_250 {dimension_numbers = #tpu.dot_dimension_numbers<[1], [0], [0], [1], [0, 0, 1, 1], [], []>} : vector<8x32xbf16>, vector<32x128xbf16>, vector<8x128xf32> -> vector<8x128xf32>
    %518 = arith.addf %514, %517 : vector<8x128xf32>
    %519 = vector.extract_strided_slice %518 {offsets = [0, 0], sizes = [8, 32], strides = [1, 1]} : vector<8x128xf32> to vector<8x32xf32>
    %cst_251 = arith.constant 5.000000e-01 : f32
    %520 = vector.broadcast %cst_251 : f32 to vector<8x32xf32>
    %521 = arith.mulf %520, %519 : vector<8x32xf32>
    %522 = math.tanh %521 : vector<8x32xf32>
    %cst_252 = arith.constant 5.000000e-01 : f32
    %523 = vector.broadcast %cst_252 : f32 to vector<8x32xf32>
    %524 = arith.mulf %523, %522 : vector<8x32xf32>
    %cst_253 = arith.constant 5.000000e-01 : f32
    %525 = vector.broadcast %cst_253 : f32 to vector<8x32xf32>
    %526 = arith.addf %524, %525 : vector<8x32xf32>
    %527 = vector.extract_strided_slice %518 {offsets = [0, 32], sizes = [8, 32], strides = [1, 1]} : vector<8x128xf32> to vector<8x32xf32>
    %cst_254 = arith.constant 5.000000e-01 : f32
    %528 = vector.broadcast %cst_254 : f32 to vector<8x32xf32>
    %529 = arith.mulf %528, %527 : vector<8x32xf32>
    %530 = math.tanh %529 : vector<8x32xf32>
    %cst_255 = arith.constant 5.000000e-01 : f32
    %531 = vector.broadcast %cst_255 : f32 to vector<8x32xf32>
    %532 = arith.mulf %531, %530 : vector<8x32xf32>
    %cst_256 = arith.constant 5.000000e-01 : f32
    %533 = vector.broadcast %cst_256 : f32 to vector<8x32xf32>
    %534 = arith.addf %532, %533 : vector<8x32xf32>
    %535 = vector.extract_strided_slice %518 {offsets = [0, 64], sizes = [8, 32], strides = [1, 1]} : vector<8x128xf32> to vector<8x32xf32>
    %536 = math.tanh %535 : vector<8x32xf32>
    %537 = vector.extract_strided_slice %518 {offsets = [0, 96], sizes = [8, 32], strides = [1, 1]} : vector<8x128xf32> to vector<8x32xf32>
    %cst_257 = arith.constant 5.000000e-01 : f32
    %538 = vector.broadcast %cst_257 : f32 to vector<8x32xf32>
    %539 = arith.mulf %538, %537 : vector<8x32xf32>
    %540 = math.tanh %539 : vector<8x32xf32>
    %cst_258 = arith.constant 5.000000e-01 : f32
    %541 = vector.broadcast %cst_258 : f32 to vector<8x32xf32>
    %542 = arith.mulf %541, %540 : vector<8x32xf32>
    %cst_259 = arith.constant 5.000000e-01 : f32
    %543 = vector.broadcast %cst_259 : f32 to vector<8x32xf32>
    %544 = arith.addf %542, %543 : vector<8x32xf32>
    %545 = arith.mulf %534, %511 : vector<8x32xf32>
    %546 = arith.mulf %526, %536 : vector<8x32xf32>
    %547 = arith.addf %545, %546 : vector<8x32xf32>
    %548 = math.tanh %547 : vector<8x32xf32>
    %549 = arith.mulf %544, %548 : vector<8x32xf32>
    %c48_260 = arith.constant 48 : index
    %c0_261 = arith.constant 0 : index
    %550 = vector.load %arg15[%c48_260, %c0_261] : memref<64x128xf32, #tpu.memory_space<vmem>>, vector<8x128xf32>
    %551 = arith.truncf %549 : vector<8x32xf32> to vector<8x32xbf16>
    %c0_262 = arith.constant 0 : index
    %c0_263 = arith.constant 0 : index
    %552 = vector.load %arg6[%c0_262, %c0_263] : memref<32x128xbf16, #tpu.memory_space<vmem>>, vector<32x128xbf16>
    %cst_264 = arith.constant dense<0.000000e+00> : vector<8x128xf32>
    %553 = tpu.matmul %551, %552, %cst_264 {dimension_numbers = #tpu.dot_dimension_numbers<[1], [0], [0], [1], [0, 0, 1, 1], [], []>} : vector<8x32xbf16>, vector<32x128xbf16>, vector<8x128xf32> -> vector<8x128xf32>
    %554 = arith.addf %550, %553 : vector<8x128xf32>
    %555 = vector.extract_strided_slice %554 {offsets = [0, 0], sizes = [8, 32], strides = [1, 1]} : vector<8x128xf32> to vector<8x32xf32>
    %cst_265 = arith.constant 5.000000e-01 : f32
    %556 = vector.broadcast %cst_265 : f32 to vector<8x32xf32>
    %557 = arith.mulf %556, %555 : vector<8x32xf32>
    %558 = math.tanh %557 : vector<8x32xf32>
    %cst_266 = arith.constant 5.000000e-01 : f32
    %559 = vector.broadcast %cst_266 : f32 to vector<8x32xf32>
    %560 = arith.mulf %559, %558 : vector<8x32xf32>
    %cst_267 = arith.constant 5.000000e-01 : f32
    %561 = vector.broadcast %cst_267 : f32 to vector<8x32xf32>
    %562 = arith.addf %560, %561 : vector<8x32xf32>
    %563 = vector.extract_strided_slice %554 {offsets = [0, 32], sizes = [8, 32], strides = [1, 1]} : vector<8x128xf32> to vector<8x32xf32>
    %cst_268 = arith.constant 5.000000e-01 : f32
    %564 = vector.broadcast %cst_268 : f32 to vector<8x32xf32>
    %565 = arith.mulf %564, %563 : vector<8x32xf32>
    %566 = math.tanh %565 : vector<8x32xf32>
    %cst_269 = arith.constant 5.000000e-01 : f32
    %567 = vector.broadcast %cst_269 : f32 to vector<8x32xf32>
    %568 = arith.mulf %567, %566 : vector<8x32xf32>
    %cst_270 = arith.constant 5.000000e-01 : f32
    %569 = vector.broadcast %cst_270 : f32 to vector<8x32xf32>
    %570 = arith.addf %568, %569 : vector<8x32xf32>
    %571 = vector.extract_strided_slice %554 {offsets = [0, 64], sizes = [8, 32], strides = [1, 1]} : vector<8x128xf32> to vector<8x32xf32>
    %572 = math.tanh %571 : vector<8x32xf32>
    %573 = vector.extract_strided_slice %554 {offsets = [0, 96], sizes = [8, 32], strides = [1, 1]} : vector<8x128xf32> to vector<8x32xf32>
    %cst_271 = arith.constant 5.000000e-01 : f32
    %574 = vector.broadcast %cst_271 : f32 to vector<8x32xf32>
    %575 = arith.mulf %574, %573 : vector<8x32xf32>
    %576 = math.tanh %575 : vector<8x32xf32>
    %cst_272 = arith.constant 5.000000e-01 : f32
    %577 = vector.broadcast %cst_272 : f32 to vector<8x32xf32>
    %578 = arith.mulf %577, %576 : vector<8x32xf32>
    %cst_273 = arith.constant 5.000000e-01 : f32
    %579 = vector.broadcast %cst_273 : f32 to vector<8x32xf32>
    %580 = arith.addf %578, %579 : vector<8x32xf32>
    %581 = arith.mulf %570, %547 : vector<8x32xf32>
    %582 = arith.mulf %562, %572 : vector<8x32xf32>
    %583 = arith.addf %581, %582 : vector<8x32xf32>
    %584 = math.tanh %583 : vector<8x32xf32>
    %585 = arith.mulf %580, %584 : vector<8x32xf32>
    %c56_274 = arith.constant 56 : index
    %c0_275 = arith.constant 0 : index
    %586 = vector.load %arg15[%c56_274, %c0_275] : memref<64x128xf32, #tpu.memory_space<vmem>>, vector<8x128xf32>
    %587 = arith.truncf %585 : vector<8x32xf32> to vector<8x32xbf16>
    %c0_276 = arith.constant 0 : index
    %c0_277 = arith.constant 0 : index
    %588 = vector.load %arg6[%c0_276, %c0_277] : memref<32x128xbf16, #tpu.memory_space<vmem>>, vector<32x128xbf16>
    %cst_278 = arith.constant dense<0.000000e+00> : vector<8x128xf32>
    %589 = tpu.matmul %587, %588, %cst_278 {dimension_numbers = #tpu.dot_dimension_numbers<[1], [0], [0], [1], [0, 0, 1, 1], [], []>} : vector<8x32xbf16>, vector<32x128xbf16>, vector<8x128xf32> -> vector<8x128xf32>
    %590 = arith.addf %586, %589 : vector<8x128xf32>
    %591 = vector.extract_strided_slice %590 {offsets = [0, 0], sizes = [8, 32], strides = [1, 1]} : vector<8x128xf32> to vector<8x32xf32>
    %cst_279 = arith.constant 5.000000e-01 : f32
    %592 = vector.broadcast %cst_279 : f32 to vector<8x32xf32>
    %593 = arith.mulf %592, %591 : vector<8x32xf32>
    %594 = math.tanh %593 : vector<8x32xf32>
    %cst_280 = arith.constant 5.000000e-01 : f32
    %595 = vector.broadcast %cst_280 : f32 to vector<8x32xf32>
    %596 = arith.mulf %595, %594 : vector<8x32xf32>
    %cst_281 = arith.constant 5.000000e-01 : f32
    %597 = vector.broadcast %cst_281 : f32 to vector<8x32xf32>
    %598 = arith.addf %596, %597 : vector<8x32xf32>
    %599 = vector.extract_strided_slice %590 {offsets = [0, 32], sizes = [8, 32], strides = [1, 1]} : vector<8x128xf32> to vector<8x32xf32>
    %cst_282 = arith.constant 5.000000e-01 : f32
    %600 = vector.broadcast %cst_282 : f32 to vector<8x32xf32>
    %601 = arith.mulf %600, %599 : vector<8x32xf32>
    %602 = math.tanh %601 : vector<8x32xf32>
    %cst_283 = arith.constant 5.000000e-01 : f32
    %603 = vector.broadcast %cst_283 : f32 to vector<8x32xf32>
    %604 = arith.mulf %603, %602 : vector<8x32xf32>
    %cst_284 = arith.constant 5.000000e-01 : f32
    %605 = vector.broadcast %cst_284 : f32 to vector<8x32xf32>
    %606 = arith.addf %604, %605 : vector<8x32xf32>
    %607 = vector.extract_strided_slice %590 {offsets = [0, 64], sizes = [8, 32], strides = [1, 1]} : vector<8x128xf32> to vector<8x32xf32>
    %608 = math.tanh %607 : vector<8x32xf32>
    %609 = vector.extract_strided_slice %590 {offsets = [0, 96], sizes = [8, 32], strides = [1, 1]} : vector<8x128xf32> to vector<8x32xf32>
    %cst_285 = arith.constant 5.000000e-01 : f32
    %610 = vector.broadcast %cst_285 : f32 to vector<8x32xf32>
    %611 = arith.mulf %610, %609 : vector<8x32xf32>
    %612 = math.tanh %611 : vector<8x32xf32>
    %cst_286 = arith.constant 5.000000e-01 : f32
    %613 = vector.broadcast %cst_286 : f32 to vector<8x32xf32>
    %614 = arith.mulf %613, %612 : vector<8x32xf32>
    %cst_287 = arith.constant 5.000000e-01 : f32
    %615 = vector.broadcast %cst_287 : f32 to vector<8x32xf32>
    %616 = arith.addf %614, %615 : vector<8x32xf32>
    %617 = arith.mulf %606, %583 : vector<8x32xf32>
    %618 = arith.mulf %598, %608 : vector<8x32xf32>
    %619 = arith.addf %617, %618 : vector<8x32xf32>
    %620 = math.tanh %619 : vector<8x32xf32>
    %621 = arith.mulf %616, %620 : vector<8x32xf32>
    %622 = arith.truncf %621 : vector<8x32xf32> to vector<8x32xbf16>
    %c0_288 = arith.constant 0 : index
    %c0_289 = arith.constant 0 : index
    %623 = vector.load %arg8[%c0_288, %c0_289] : memref<32x128xbf16, #tpu.memory_space<vmem>>, vector<32x128xbf16>
    %cst_290 = arith.constant dense<0.000000e+00> : vector<8x128xf32>
    %624 = tpu.matmul %622, %623, %cst_290 {dimension_numbers = #tpu.dot_dimension_numbers<[1], [0], [0], [1], [0, 0, 1, 1], [], []>} : vector<8x32xbf16>, vector<32x128xbf16>, vector<8x128xf32> -> vector<8x128xf32>
    %c0_291 = arith.constant 0 : index
    %c0_292 = arith.constant 0 : index
    %625 = vector.load %arg10[%c0_291, %c0_292] : memref<1x128xf32, #tpu.memory_space<vmem>>, vector<1x128xf32>
    %626 = vector.broadcast %625 : vector<1x128xf32> to vector<8x128xf32>
    %627 = arith.addf %624, %626 : vector<8x128xf32>
    %cst_293 = arith.constant 0.000000e+00 : f32
    %628 = vector.broadcast %cst_293 : f32 to vector<8x32xf32>
    %cst_294 = arith.constant 0.000000e+00 : f32
    %629 = vector.broadcast %cst_294 : f32 to vector<8x32xf32>
    %630 = arith.truncf %628 : vector<8x32xf32> to vector<8x32xbf16>
    %c0_295 = arith.constant 0 : index
    %c0_296 = arith.constant 0 : index
    %631 = vector.load %arg9[%c0_295, %c0_296] : memref<32x128xbf16, #tpu.memory_space<vmem>>, vector<32x128xbf16>
    %cst_297 = arith.constant dense<0.000000e+00> : vector<8x128xf32>
    %632 = tpu.matmul %630, %631, %cst_297 {dimension_numbers = #tpu.dot_dimension_numbers<[1], [0], [0], [1], [0, 0, 1, 1], [], []>} : vector<8x32xbf16>, vector<32x128xbf16>, vector<8x128xf32> -> vector<8x128xf32>
    %633 = arith.addf %627, %632 : vector<8x128xf32>
    %634 = vector.extract_strided_slice %633 {offsets = [0, 0], sizes = [8, 32], strides = [1, 1]} : vector<8x128xf32> to vector<8x32xf32>
    %cst_298 = arith.constant 5.000000e-01 : f32
    %635 = vector.broadcast %cst_298 : f32 to vector<8x32xf32>
    %636 = arith.mulf %635, %634 : vector<8x32xf32>
    %637 = math.tanh %636 : vector<8x32xf32>
    %cst_299 = arith.constant 5.000000e-01 : f32
    %638 = vector.broadcast %cst_299 : f32 to vector<8x32xf32>
    %639 = arith.mulf %638, %637 : vector<8x32xf32>
    %cst_300 = arith.constant 5.000000e-01 : f32
    %640 = vector.broadcast %cst_300 : f32 to vector<8x32xf32>
    %641 = arith.addf %639, %640 : vector<8x32xf32>
    %642 = vector.extract_strided_slice %633 {offsets = [0, 32], sizes = [8, 32], strides = [1, 1]} : vector<8x128xf32> to vector<8x32xf32>
    %cst_301 = arith.constant 5.000000e-01 : f32
    %643 = vector.broadcast %cst_301 : f32 to vector<8x32xf32>
    %644 = arith.mulf %643, %642 : vector<8x32xf32>
    %645 = math.tanh %644 : vector<8x32xf32>
    %cst_302 = arith.constant 5.000000e-01 : f32
    %646 = vector.broadcast %cst_302 : f32 to vector<8x32xf32>
    %647 = arith.mulf %646, %645 : vector<8x32xf32>
    %cst_303 = arith.constant 5.000000e-01 : f32
    %648 = vector.broadcast %cst_303 : f32 to vector<8x32xf32>
    %649 = arith.addf %647, %648 : vector<8x32xf32>
    %650 = vector.extract_strided_slice %633 {offsets = [0, 64], sizes = [8, 32], strides = [1, 1]} : vector<8x128xf32> to vector<8x32xf32>
    %651 = math.tanh %650 : vector<8x32xf32>
    %652 = vector.extract_strided_slice %633 {offsets = [0, 96], sizes = [8, 32], strides = [1, 1]} : vector<8x128xf32> to vector<8x32xf32>
    %cst_304 = arith.constant 5.000000e-01 : f32
    %653 = vector.broadcast %cst_304 : f32 to vector<8x32xf32>
    %654 = arith.mulf %653, %652 : vector<8x32xf32>
    %655 = math.tanh %654 : vector<8x32xf32>
    %cst_305 = arith.constant 5.000000e-01 : f32
    %656 = vector.broadcast %cst_305 : f32 to vector<8x32xf32>
    %657 = arith.mulf %656, %655 : vector<8x32xf32>
    %cst_306 = arith.constant 5.000000e-01 : f32
    %658 = vector.broadcast %cst_306 : f32 to vector<8x32xf32>
    %659 = arith.addf %657, %658 : vector<8x32xf32>
    %660 = arith.mulf %649, %629 : vector<8x32xf32>
    %661 = arith.mulf %641, %651 : vector<8x32xf32>
    %662 = arith.addf %660, %661 : vector<8x32xf32>
    %663 = math.tanh %662 : vector<8x32xf32>
    %664 = arith.mulf %659, %663 : vector<8x32xf32>
    %c0_307 = arith.constant 0 : index
    %c0_308 = arith.constant 0 : index
    %665 = vector.load %arg16[%c0_307, %c0_308] : memref<64x32xf32, #tpu.memory_space<vmem>>, vector<8x32xf32>
    tpu.vector_store %arg16[%c0_307, %c0_308], %664 {strides = array<i32>} : memref<64x32xf32, #tpu.memory_space<vmem>>, vector<8x32xf32>,
    %666 = arith.truncf %664 : vector<8x32xf32> to vector<8x32xbf16>
    %c0_309 = arith.constant 0 : index
    %c0_310 = arith.constant 0 : index
    %667 = vector.load %arg9[%c0_309, %c0_310] : memref<32x128xbf16, #tpu.memory_space<vmem>>, vector<32x128xbf16>
    %cst_311 = arith.constant dense<0.000000e+00> : vector<8x128xf32>
    %668 = tpu.matmul %666, %667, %cst_311 {dimension_numbers = #tpu.dot_dimension_numbers<[1], [0], [0], [1], [0, 0, 1, 1], [], []>} : vector<8x32xbf16>, vector<32x128xbf16>, vector<8x128xf32> -> vector<8x128xf32>
    %669 = arith.addf %627, %668 : vector<8x128xf32>
    %670 = vector.extract_strided_slice %669 {offsets = [0, 0], sizes = [8, 32], strides = [1, 1]} : vector<8x128xf32> to vector<8x32xf32>
    %cst_312 = arith.constant 5.000000e-01 : f32
    %671 = vector.broadcast %cst_312 : f32 to vector<8x32xf32>
    %672 = arith.mulf %671, %670 : vector<8x32xf32>
    %673 = math.tanh %672 : vector<8x32xf32>
    %cst_313 = arith.constant 5.000000e-01 : f32
    %674 = vector.broadcast %cst_313 : f32 to vector<8x32xf32>
    %675 = arith.mulf %674, %673 : vector<8x32xf32>
    %cst_314 = arith.constant 5.000000e-01 : f32
    %676 = vector.broadcast %cst_314 : f32 to vector<8x32xf32>
    %677 = arith.addf %675, %676 : vector<8x32xf32>
    %678 = vector.extract_strided_slice %669 {offsets = [0, 32], sizes = [8, 32], strides = [1, 1]} : vector<8x128xf32> to vector<8x32xf32>
    %cst_315 = arith.constant 5.000000e-01 : f32
    %679 = vector.broadcast %cst_315 : f32 to vector<8x32xf32>
    %680 = arith.mulf %679, %678 : vector<8x32xf32>
    %681 = math.tanh %680 : vector<8x32xf32>
    %cst_316 = arith.constant 5.000000e-01 : f32
    %682 = vector.broadcast %cst_316 : f32 to vector<8x32xf32>
    %683 = arith.mulf %682, %681 : vector<8x32xf32>
    %cst_317 = arith.constant 5.000000e-01 : f32
    %684 = vector.broadcast %cst_317 : f32 to vector<8x32xf32>
    %685 = arith.addf %683, %684 : vector<8x32xf32>
    %686 = vector.extract_strided_slice %669 {offsets = [0, 64], sizes = [8, 32], strides = [1, 1]} : vector<8x128xf32> to vector<8x32xf32>
    %687 = math.tanh %686 : vector<8x32xf32>
    %688 = vector.extract_strided_slice %669 {offsets = [0, 96], sizes = [8, 32], strides = [1, 1]} : vector<8x128xf32> to vector<8x32xf32>
    %cst_318 = arith.constant 5.000000e-01 : f32
    %689 = vector.broadcast %cst_318 : f32 to vector<8x32xf32>
    %690 = arith.mulf %689, %688 : vector<8x32xf32>
    %691 = math.tanh %690 : vector<8x32xf32>
    %cst_319 = arith.constant 5.000000e-01 : f32
    %692 = vector.broadcast %cst_319 : f32 to vector<8x32xf32>
    %693 = arith.mulf %692, %691 : vector<8x32xf32>
    %cst_320 = arith.constant 5.000000e-01 : f32
    %694 = vector.broadcast %cst_320 : f32 to vector<8x32xf32>
    %695 = arith.addf %693, %694 : vector<8x32xf32>
    %696 = arith.mulf %685, %662 : vector<8x32xf32>
    %697 = arith.mulf %677, %687 : vector<8x32xf32>
    %698 = arith.addf %696, %697 : vector<8x32xf32>
    %699 = math.tanh %698 : vector<8x32xf32>
    %700 = arith.mulf %695, %699 : vector<8x32xf32>
    %c8_321 = arith.constant 8 : index
    %c0_322 = arith.constant 0 : index
    %701 = vector.load %arg16[%c8_321, %c0_322] : memref<64x32xf32, #tpu.memory_space<vmem>>, vector<8x32xf32>
    tpu.vector_store %arg16[%c8_321, %c0_322], %700 {strides = array<i32>} : memref<64x32xf32, #tpu.memory_space<vmem>>, vector<8x32xf32>,
    %702 = arith.truncf %700 : vector<8x32xf32> to vector<8x32xbf16>
    %c0_323 = arith.constant 0 : index
    %c0_324 = arith.constant 0 : index
    %703 = vector.load %arg9[%c0_323, %c0_324] : memref<32x128xbf16, #tpu.memory_space<vmem>>, vector<32x128xbf16>
    %cst_325 = arith.constant dense<0.000000e+00> : vector<8x128xf32>
    %704 = tpu.matmul %702, %703, %cst_325 {dimension_numbers = #tpu.dot_dimension_numbers<[1], [0], [0], [1], [0, 0, 1, 1], [], []>} : vector<8x32xbf16>, vector<32x128xbf16>, vector<8x128xf32> -> vector<8x128xf32>
    %705 = arith.addf %627, %704 : vector<8x128xf32>
    %706 = vector.extract_strided_slice %705 {offsets = [0, 0], sizes = [8, 32], strides = [1, 1]} : vector<8x128xf32> to vector<8x32xf32>
    %cst_326 = arith.constant 5.000000e-01 : f32
    %707 = vector.broadcast %cst_326 : f32 to vector<8x32xf32>
    %708 = arith.mulf %707, %706 : vector<8x32xf32>
    %709 = math.tanh %708 : vector<8x32xf32>
    %cst_327 = arith.constant 5.000000e-01 : f32
    %710 = vector.broadcast %cst_327 : f32 to vector<8x32xf32>
    %711 = arith.mulf %710, %709 : vector<8x32xf32>
    %cst_328 = arith.constant 5.000000e-01 : f32
    %712 = vector.broadcast %cst_328 : f32 to vector<8x32xf32>
    %713 = arith.addf %711, %712 : vector<8x32xf32>
    %714 = vector.extract_strided_slice %705 {offsets = [0, 32], sizes = [8, 32], strides = [1, 1]} : vector<8x128xf32> to vector<8x32xf32>
    %cst_329 = arith.constant 5.000000e-01 : f32
    %715 = vector.broadcast %cst_329 : f32 to vector<8x32xf32>
    %716 = arith.mulf %715, %714 : vector<8x32xf32>
    %717 = math.tanh %716 : vector<8x32xf32>
    %cst_330 = arith.constant 5.000000e-01 : f32
    %718 = vector.broadcast %cst_330 : f32 to vector<8x32xf32>
    %719 = arith.mulf %718, %717 : vector<8x32xf32>
    %cst_331 = arith.constant 5.000000e-01 : f32
    %720 = vector.broadcast %cst_331 : f32 to vector<8x32xf32>
    %721 = arith.addf %719, %720 : vector<8x32xf32>
    %722 = vector.extract_strided_slice %705 {offsets = [0, 64], sizes = [8, 32], strides = [1, 1]} : vector<8x128xf32> to vector<8x32xf32>
    %723 = math.tanh %722 : vector<8x32xf32>
    %724 = vector.extract_strided_slice %705 {offsets = [0, 96], sizes = [8, 32], strides = [1, 1]} : vector<8x128xf32> to vector<8x32xf32>
    %cst_332 = arith.constant 5.000000e-01 : f32
    %725 = vector.broadcast %cst_332 : f32 to vector<8x32xf32>
    %726 = arith.mulf %725, %724 : vector<8x32xf32>
    %727 = math.tanh %726 : vector<8x32xf32>
    %cst_333 = arith.constant 5.000000e-01 : f32
    %728 = vector.broadcast %cst_333 : f32 to vector<8x32xf32>
    %729 = arith.mulf %728, %727 : vector<8x32xf32>
    %cst_334 = arith.constant 5.000000e-01 : f32
    %730 = vector.broadcast %cst_334 : f32 to vector<8x32xf32>
    %731 = arith.addf %729, %730 : vector<8x32xf32>
    %732 = arith.mulf %721, %698 : vector<8x32xf32>
    %733 = arith.mulf %713, %723 : vector<8x32xf32>
    %734 = arith.addf %732, %733 : vector<8x32xf32>
    %735 = math.tanh %734 : vector<8x32xf32>
    %736 = arith.mulf %731, %735 : vector<8x32xf32>
    %c16_335 = arith.constant 16 : index
    %c0_336 = arith.constant 0 : index
    %737 = vector.load %arg16[%c16_335, %c0_336] : memref<64x32xf32, #tpu.memory_space<vmem>>, vector<8x32xf32>
    tpu.vector_store %arg16[%c16_335, %c0_336], %736 {strides = array<i32>} : memref<64x32xf32, #tpu.memory_space<vmem>>, vector<8x32xf32>,
    %738 = arith.truncf %736 : vector<8x32xf32> to vector<8x32xbf16>
    %c0_337 = arith.constant 0 : index
    %c0_338 = arith.constant 0 : index
    %739 = vector.load %arg9[%c0_337, %c0_338] : memref<32x128xbf16, #tpu.memory_space<vmem>>, vector<32x128xbf16>
    %cst_339 = arith.constant dense<0.000000e+00> : vector<8x128xf32>
    %740 = tpu.matmul %738, %739, %cst_339 {dimension_numbers = #tpu.dot_dimension_numbers<[1], [0], [0], [1], [0, 0, 1, 1], [], []>} : vector<8x32xbf16>, vector<32x128xbf16>, vector<8x128xf32> -> vector<8x128xf32>
    %741 = arith.addf %627, %740 : vector<8x128xf32>
    %742 = vector.extract_strided_slice %741 {offsets = [0, 0], sizes = [8, 32], strides = [1, 1]} : vector<8x128xf32> to vector<8x32xf32>
    %cst_340 = arith.constant 5.000000e-01 : f32
    %743 = vector.broadcast %cst_340 : f32 to vector<8x32xf32>
    %744 = arith.mulf %743, %742 : vector<8x32xf32>
    %745 = math.tanh %744 : vector<8x32xf32>
    %cst_341 = arith.constant 5.000000e-01 : f32
    %746 = vector.broadcast %cst_341 : f32 to vector<8x32xf32>
    %747 = arith.mulf %746, %745 : vector<8x32xf32>
    %cst_342 = arith.constant 5.000000e-01 : f32
    %748 = vector.broadcast %cst_342 : f32 to vector<8x32xf32>
    %749 = arith.addf %747, %748 : vector<8x32xf32>
    %750 = vector.extract_strided_slice %741 {offsets = [0, 32], sizes = [8, 32], strides = [1, 1]} : vector<8x128xf32> to vector<8x32xf32>
    %cst_343 = arith.constant 5.000000e-01 : f32
    %751 = vector.broadcast %cst_343 : f32 to vector<8x32xf32>
    %752 = arith.mulf %751, %750 : vector<8x32xf32>
    %753 = math.tanh %752 : vector<8x32xf32>
    %cst_344 = arith.constant 5.000000e-01 : f32
    %754 = vector.broadcast %cst_344 : f32 to vector<8x32xf32>
    %755 = arith.mulf %754, %753 : vector<8x32xf32>
    %cst_345 = arith.constant 5.000000e-01 : f32
    %756 = vector.broadcast %cst_345 : f32 to vector<8x32xf32>
    %757 = arith.addf %755, %756 : vector<8x32xf32>
    %758 = vector.extract_strided_slice %741 {offsets = [0, 64], sizes = [8, 32], strides = [1, 1]} : vector<8x128xf32> to vector<8x32xf32>
    %759 = math.tanh %758 : vector<8x32xf32>
    %760 = vector.extract_strided_slice %741 {offsets = [0, 96], sizes = [8, 32], strides = [1, 1]} : vector<8x128xf32> to vector<8x32xf32>
    %cst_346 = arith.constant 5.000000e-01 : f32
    %761 = vector.broadcast %cst_346 : f32 to vector<8x32xf32>
    %762 = arith.mulf %761, %760 : vector<8x32xf32>
    %763 = math.tanh %762 : vector<8x32xf32>
    %cst_347 = arith.constant 5.000000e-01 : f32
    %764 = vector.broadcast %cst_347 : f32 to vector<8x32xf32>
    %765 = arith.mulf %764, %763 : vector<8x32xf32>
    %cst_348 = arith.constant 5.000000e-01 : f32
    %766 = vector.broadcast %cst_348 : f32 to vector<8x32xf32>
    %767 = arith.addf %765, %766 : vector<8x32xf32>
    %768 = arith.mulf %757, %734 : vector<8x32xf32>
    %769 = arith.mulf %749, %759 : vector<8x32xf32>
    %770 = arith.addf %768, %769 : vector<8x32xf32>
    %771 = math.tanh %770 : vector<8x32xf32>
    %772 = arith.mulf %767, %771 : vector<8x32xf32>
    %c24_349 = arith.constant 24 : index
    %c0_350 = arith.constant 0 : index
    %773 = vector.load %arg16[%c24_349, %c0_350] : memref<64x32xf32, #tpu.memory_space<vmem>>, vector<8x32xf32>
    tpu.vector_store %arg16[%c24_349, %c0_350], %772 {strides = array<i32>} : memref<64x32xf32, #tpu.memory_space<vmem>>, vector<8x32xf32>,
    %774 = arith.truncf %772 : vector<8x32xf32> to vector<8x32xbf16>
    %c0_351 = arith.constant 0 : index
    %c0_352 = arith.constant 0 : index
    %775 = vector.load %arg9[%c0_351, %c0_352] : memref<32x128xbf16, #tpu.memory_space<vmem>>, vector<32x128xbf16>
    %cst_353 = arith.constant dense<0.000000e+00> : vector<8x128xf32>
    %776 = tpu.matmul %774, %775, %cst_353 {dimension_numbers = #tpu.dot_dimension_numbers<[1], [0], [0], [1], [0, 0, 1, 1], [], []>} : vector<8x32xbf16>, vector<32x128xbf16>, vector<8x128xf32> -> vector<8x128xf32>
    %777 = arith.addf %627, %776 : vector<8x128xf32>
    %778 = vector.extract_strided_slice %777 {offsets = [0, 0], sizes = [8, 32], strides = [1, 1]} : vector<8x128xf32> to vector<8x32xf32>
    %cst_354 = arith.constant 5.000000e-01 : f32
    %779 = vector.broadcast %cst_354 : f32 to vector<8x32xf32>
    %780 = arith.mulf %779, %778 : vector<8x32xf32>
    %781 = math.tanh %780 : vector<8x32xf32>
    %cst_355 = arith.constant 5.000000e-01 : f32
    %782 = vector.broadcast %cst_355 : f32 to vector<8x32xf32>
    %783 = arith.mulf %782, %781 : vector<8x32xf32>
    %cst_356 = arith.constant 5.000000e-01 : f32
    %784 = vector.broadcast %cst_356 : f32 to vector<8x32xf32>
    %785 = arith.addf %783, %784 : vector<8x32xf32>
    %786 = vector.extract_strided_slice %777 {offsets = [0, 32], sizes = [8, 32], strides = [1, 1]} : vector<8x128xf32> to vector<8x32xf32>
    %cst_357 = arith.constant 5.000000e-01 : f32
    %787 = vector.broadcast %cst_357 : f32 to vector<8x32xf32>
    %788 = arith.mulf %787, %786 : vector<8x32xf32>
    %789 = math.tanh %788 : vector<8x32xf32>
    %cst_358 = arith.constant 5.000000e-01 : f32
    %790 = vector.broadcast %cst_358 : f32 to vector<8x32xf32>
    %791 = arith.mulf %790, %789 : vector<8x32xf32>
    %cst_359 = arith.constant 5.000000e-01 : f32
    %792 = vector.broadcast %cst_359 : f32 to vector<8x32xf32>
    %793 = arith.addf %791, %792 : vector<8x32xf32>
    %794 = vector.extract_strided_slice %777 {offsets = [0, 64], sizes = [8, 32], strides = [1, 1]} : vector<8x128xf32> to vector<8x32xf32>
    %795 = math.tanh %794 : vector<8x32xf32>
    %796 = vector.extract_strided_slice %777 {offsets = [0, 96], sizes = [8, 32], strides = [1, 1]} : vector<8x128xf32> to vector<8x32xf32>
    %cst_360 = arith.constant 5.000000e-01 : f32
    %797 = vector.broadcast %cst_360 : f32 to vector<8x32xf32>
    %798 = arith.mulf %797, %796 : vector<8x32xf32>
    %799 = math.tanh %798 : vector<8x32xf32>
    %cst_361 = arith.constant 5.000000e-01 : f32
    %800 = vector.broadcast %cst_361 : f32 to vector<8x32xf32>
    %801 = arith.mulf %800, %799 : vector<8x32xf32>
    %cst_362 = arith.constant 5.000000e-01 : f32
    %802 = vector.broadcast %cst_362 : f32 to vector<8x32xf32>
    %803 = arith.addf %801, %802 : vector<8x32xf32>
    %804 = arith.mulf %793, %770 : vector<8x32xf32>
    %805 = arith.mulf %785, %795 : vector<8x32xf32>
    %806 = arith.addf %804, %805 : vector<8x32xf32>
    %807 = math.tanh %806 : vector<8x32xf32>
    %808 = arith.mulf %803, %807 : vector<8x32xf32>
    %c32_363 = arith.constant 32 : index
    %c0_364 = arith.constant 0 : index
    %809 = vector.load %arg16[%c32_363, %c0_364] : memref<64x32xf32, #tpu.memory_space<vmem>>, vector<8x32xf32>
    tpu.vector_store %arg16[%c32_363, %c0_364], %808 {strides = array<i32>} : memref<64x32xf32, #tpu.memory_space<vmem>>, vector<8x32xf32>,
    %810 = arith.truncf %808 : vector<8x32xf32> to vector<8x32xbf16>
    %c0_365 = arith.constant 0 : index
    %c0_366 = arith.constant 0 : index
    %811 = vector.load %arg9[%c0_365, %c0_366] : memref<32x128xbf16, #tpu.memory_space<vmem>>, vector<32x128xbf16>
    %cst_367 = arith.constant dense<0.000000e+00> : vector<8x128xf32>
    %812 = tpu.matmul %810, %811, %cst_367 {dimension_numbers = #tpu.dot_dimension_numbers<[1], [0], [0], [1], [0, 0, 1, 1], [], []>} : vector<8x32xbf16>, vector<32x128xbf16>, vector<8x128xf32> -> vector<8x128xf32>
    %813 = arith.addf %627, %812 : vector<8x128xf32>
    %814 = vector.extract_strided_slice %813 {offsets = [0, 0], sizes = [8, 32], strides = [1, 1]} : vector<8x128xf32> to vector<8x32xf32>
    %cst_368 = arith.constant 5.000000e-01 : f32
    %815 = vector.broadcast %cst_368 : f32 to vector<8x32xf32>
    %816 = arith.mulf %815, %814 : vector<8x32xf32>
    %817 = math.tanh %816 : vector<8x32xf32>
    %cst_369 = arith.constant 5.000000e-01 : f32
    %818 = vector.broadcast %cst_369 : f32 to vector<8x32xf32>
    %819 = arith.mulf %818, %817 : vector<8x32xf32>
    %cst_370 = arith.constant 5.000000e-01 : f32
    %820 = vector.broadcast %cst_370 : f32 to vector<8x32xf32>
    %821 = arith.addf %819, %820 : vector<8x32xf32>
    %822 = vector.extract_strided_slice %813 {offsets = [0, 32], sizes = [8, 32], strides = [1, 1]} : vector<8x128xf32> to vector<8x32xf32>
    %cst_371 = arith.constant 5.000000e-01 : f32
    %823 = vector.broadcast %cst_371 : f32 to vector<8x32xf32>
    %824 = arith.mulf %823, %822 : vector<8x32xf32>
    %825 = math.tanh %824 : vector<8x32xf32>
    %cst_372 = arith.constant 5.000000e-01 : f32
    %826 = vector.broadcast %cst_372 : f32 to vector<8x32xf32>
    %827 = arith.mulf %826, %825 : vector<8x32xf32>
    %cst_373 = arith.constant 5.000000e-01 : f32
    %828 = vector.broadcast %cst_373 : f32 to vector<8x32xf32>
    %829 = arith.addf %827, %828 : vector<8x32xf32>
    %830 = vector.extract_strided_slice %813 {offsets = [0, 64], sizes = [8, 32], strides = [1, 1]} : vector<8x128xf32> to vector<8x32xf32>
    %831 = math.tanh %830 : vector<8x32xf32>
    %832 = vector.extract_strided_slice %813 {offsets = [0, 96], sizes = [8, 32], strides = [1, 1]} : vector<8x128xf32> to vector<8x32xf32>
    %cst_374 = arith.constant 5.000000e-01 : f32
    %833 = vector.broadcast %cst_374 : f32 to vector<8x32xf32>
    %834 = arith.mulf %833, %832 : vector<8x32xf32>
    %835 = math.tanh %834 : vector<8x32xf32>
    %cst_375 = arith.constant 5.000000e-01 : f32
    %836 = vector.broadcast %cst_375 : f32 to vector<8x32xf32>
    %837 = arith.mulf %836, %835 : vector<8x32xf32>
    %cst_376 = arith.constant 5.000000e-01 : f32
    %838 = vector.broadcast %cst_376 : f32 to vector<8x32xf32>
    %839 = arith.addf %837, %838 : vector<8x32xf32>
    %840 = arith.mulf %829, %806 : vector<8x32xf32>
    %841 = arith.mulf %821, %831 : vector<8x32xf32>
    %842 = arith.addf %840, %841 : vector<8x32xf32>
    %843 = math.tanh %842 : vector<8x32xf32>
    %844 = arith.mulf %839, %843 : vector<8x32xf32>
    %c40_377 = arith.constant 40 : index
    %c0_378 = arith.constant 0 : index
    %845 = vector.load %arg16[%c40_377, %c0_378] : memref<64x32xf32, #tpu.memory_space<vmem>>, vector<8x32xf32>
    tpu.vector_store %arg16[%c40_377, %c0_378], %844 {strides = array<i32>} : memref<64x32xf32, #tpu.memory_space<vmem>>, vector<8x32xf32>,
    %846 = arith.truncf %844 : vector<8x32xf32> to vector<8x32xbf16>
    %c0_379 = arith.constant 0 : index
    %c0_380 = arith.constant 0 : index
    %847 = vector.load %arg9[%c0_379, %c0_380] : memref<32x128xbf16, #tpu.memory_space<vmem>>, vector<32x128xbf16>
    %cst_381 = arith.constant dense<0.000000e+00> : vector<8x128xf32>
    %848 = tpu.matmul %846, %847, %cst_381 {dimension_numbers = #tpu.dot_dimension_numbers<[1], [0], [0], [1], [0, 0, 1, 1], [], []>} : vector<8x32xbf16>, vector<32x128xbf16>, vector<8x128xf32> -> vector<8x128xf32>
    %849 = arith.addf %627, %848 : vector<8x128xf32>
    %850 = vector.extract_strided_slice %849 {offsets = [0, 0], sizes = [8, 32], strides = [1, 1]} : vector<8x128xf32> to vector<8x32xf32>
    %cst_382 = arith.constant 5.000000e-01 : f32
    %851 = vector.broadcast %cst_382 : f32 to vector<8x32xf32>
    %852 = arith.mulf %851, %850 : vector<8x32xf32>
    %853 = math.tanh %852 : vector<8x32xf32>
    %cst_383 = arith.constant 5.000000e-01 : f32
    %854 = vector.broadcast %cst_383 : f32 to vector<8x32xf32>
    %855 = arith.mulf %854, %853 : vector<8x32xf32>
    %cst_384 = arith.constant 5.000000e-01 : f32
    %856 = vector.broadcast %cst_384 : f32 to vector<8x32xf32>
    %857 = arith.addf %855, %856 : vector<8x32xf32>
    %858 = vector.extract_strided_slice %849 {offsets = [0, 32], sizes = [8, 32], strides = [1, 1]} : vector<8x128xf32> to vector<8x32xf32>
    %cst_385 = arith.constant 5.000000e-01 : f32
    %859 = vector.broadcast %cst_385 : f32 to vector<8x32xf32>
    %860 = arith.mulf %859, %858 : vector<8x32xf32>
    %861 = math.tanh %860 : vector<8x32xf32>
    %cst_386 = arith.constant 5.000000e-01 : f32
    %862 = vector.broadcast %cst_386 : f32 to vector<8x32xf32>
    %863 = arith.mulf %862, %861 : vector<8x32xf32>
    %cst_387 = arith.constant 5.000000e-01 : f32
    %864 = vector.broadcast %cst_387 : f32 to vector<8x32xf32>
    %865 = arith.addf %863, %864 : vector<8x32xf32>
    %866 = vector.extract_strided_slice %849 {offsets = [0, 64], sizes = [8, 32], strides = [1, 1]} : vector<8x128xf32> to vector<8x32xf32>
    %867 = math.tanh %866 : vector<8x32xf32>
    %868 = vector.extract_strided_slice %849 {offsets = [0, 96], sizes = [8, 32], strides = [1, 1]} : vector<8x128xf32> to vector<8x32xf32>
    %cst_388 = arith.constant 5.000000e-01 : f32
    %869 = vector.broadcast %cst_388 : f32 to vector<8x32xf32>
    %870 = arith.mulf %869, %868 : vector<8x32xf32>
    %871 = math.tanh %870 : vector<8x32xf32>
    %cst_389 = arith.constant 5.000000e-01 : f32
    %872 = vector.broadcast %cst_389 : f32 to vector<8x32xf32>
    %873 = arith.mulf %872, %871 : vector<8x32xf32>
    %cst_390 = arith.constant 5.000000e-01 : f32
    %874 = vector.broadcast %cst_390 : f32 to vector<8x32xf32>
    %875 = arith.addf %873, %874 : vector<8x32xf32>
    %876 = arith.mulf %865, %842 : vector<8x32xf32>
    %877 = arith.mulf %857, %867 : vector<8x32xf32>
    %878 = arith.addf %876, %877 : vector<8x32xf32>
    %879 = math.tanh %878 : vector<8x32xf32>
    %880 = arith.mulf %875, %879 : vector<8x32xf32>
    %c48_391 = arith.constant 48 : index
    %c0_392 = arith.constant 0 : index
    %881 = vector.load %arg16[%c48_391, %c0_392] : memref<64x32xf32, #tpu.memory_space<vmem>>, vector<8x32xf32>
    tpu.vector_store %arg16[%c48_391, %c0_392], %880 {strides = array<i32>} : memref<64x32xf32, #tpu.memory_space<vmem>>, vector<8x32xf32>,
    %882 = arith.truncf %880 : vector<8x32xf32> to vector<8x32xbf16>
    %c0_393 = arith.constant 0 : index
    %c0_394 = arith.constant 0 : index
    %883 = vector.load %arg9[%c0_393, %c0_394] : memref<32x128xbf16, #tpu.memory_space<vmem>>, vector<32x128xbf16>
    %cst_395 = arith.constant dense<0.000000e+00> : vector<8x128xf32>
    %884 = tpu.matmul %882, %883, %cst_395 {dimension_numbers = #tpu.dot_dimension_numbers<[1], [0], [0], [1], [0, 0, 1, 1], [], []>} : vector<8x32xbf16>, vector<32x128xbf16>, vector<8x128xf32> -> vector<8x128xf32>
    %885 = arith.addf %627, %884 : vector<8x128xf32>
    %886 = vector.extract_strided_slice %885 {offsets = [0, 0], sizes = [8, 32], strides = [1, 1]} : vector<8x128xf32> to vector<8x32xf32>
    %cst_396 = arith.constant 5.000000e-01 : f32
    %887 = vector.broadcast %cst_396 : f32 to vector<8x32xf32>
    %888 = arith.mulf %887, %886 : vector<8x32xf32>
    %889 = math.tanh %888 : vector<8x32xf32>
    %cst_397 = arith.constant 5.000000e-01 : f32
    %890 = vector.broadcast %cst_397 : f32 to vector<8x32xf32>
    %891 = arith.mulf %890, %889 : vector<8x32xf32>
    %cst_398 = arith.constant 5.000000e-01 : f32
    %892 = vector.broadcast %cst_398 : f32 to vector<8x32xf32>
    %893 = arith.addf %891, %892 : vector<8x32xf32>
    %894 = vector.extract_strided_slice %885 {offsets = [0, 32], sizes = [8, 32], strides = [1, 1]} : vector<8x128xf32> to vector<8x32xf32>
    %cst_399 = arith.constant 5.000000e-01 : f32
    %895 = vector.broadcast %cst_399 : f32 to vector<8x32xf32>
    %896 = arith.mulf %895, %894 : vector<8x32xf32>
    %897 = math.tanh %896 : vector<8x32xf32>
    %cst_400 = arith.constant 5.000000e-01 : f32
    %898 = vector.broadcast %cst_400 : f32 to vector<8x32xf32>
    %899 = arith.mulf %898, %897 : vector<8x32xf32>
    %cst_401 = arith.constant 5.000000e-01 : f32
    %900 = vector.broadcast %cst_401 : f32 to vector<8x32xf32>
    %901 = arith.addf %899, %900 : vector<8x32xf32>
    %902 = vector.extract_strided_slice %885 {offsets = [0, 64], sizes = [8, 32], strides = [1, 1]} : vector<8x128xf32> to vector<8x32xf32>
    %903 = math.tanh %902 : vector<8x32xf32>
    %904 = vector.extract_strided_slice %885 {offsets = [0, 96], sizes = [8, 32], strides = [1, 1]} : vector<8x128xf32> to vector<8x32xf32>
    %cst_402 = arith.constant 5.000000e-01 : f32
    %905 = vector.broadcast %cst_402 : f32 to vector<8x32xf32>
    %906 = arith.mulf %905, %904 : vector<8x32xf32>
    %907 = math.tanh %906 : vector<8x32xf32>
    %cst_403 = arith.constant 5.000000e-01 : f32
    %908 = vector.broadcast %cst_403 : f32 to vector<8x32xf32>
    %909 = arith.mulf %908, %907 : vector<8x32xf32>
    %cst_404 = arith.constant 5.000000e-01 : f32
    %910 = vector.broadcast %cst_404 : f32 to vector<8x32xf32>
    %911 = arith.addf %909, %910 : vector<8x32xf32>
    %912 = arith.mulf %901, %878 : vector<8x32xf32>
    %913 = arith.mulf %893, %903 : vector<8x32xf32>
    %914 = arith.addf %912, %913 : vector<8x32xf32>
    %915 = math.tanh %914 : vector<8x32xf32>
    %916 = arith.mulf %911, %915 : vector<8x32xf32>
    %c56_405 = arith.constant 56 : index
    %c0_406 = arith.constant 0 : index
    %917 = vector.load %arg16[%c56_405, %c0_406] : memref<64x32xf32, #tpu.memory_space<vmem>>, vector<8x32xf32>
    tpu.vector_store %arg16[%c56_405, %c0_406], %916 {strides = array<i32>} : memref<64x32xf32, #tpu.memory_space<vmem>>, vector<8x32xf32>,
    %c0_407 = arith.constant 0 : index
    %c0_408 = arith.constant 0 : index
    %918 = vector.load %arg16[%c0_407, %c0_408] : memref<64x32xf32, #tpu.memory_space<vmem>>, vector<64x32xf32>
    %919 = arith.truncf %918 : vector<64x32xf32> to vector<64x32xbf16>
    %c0_409 = arith.constant 0 : index
    %c0_410 = arith.constant 0 : index
    %920 = vector.load %arg11[%c0_409, %c0_410] : memref<32x128xbf16, #tpu.memory_space<vmem>>, vector<32x128xbf16>
    %cst_411 = arith.constant dense<0.000000e+00> : vector<64x128xf32>
    %921 = tpu.matmul %919, %920, %cst_411 {dimension_numbers = #tpu.dot_dimension_numbers<[1], [0], [0], [1], [0, 0, 1, 1], [], []>} : vector<64x32xbf16>, vector<32x128xbf16>, vector<64x128xf32> -> vector<64x128xf32>
    %c0_412 = arith.constant 0 : index
    %c0_413 = arith.constant 0 : index
    %922 = vector.load %arg13[%c0_412, %c0_413] : memref<1x128xf32, #tpu.memory_space<vmem>>, vector<1x128xf32>
    %923 = vector.broadcast %922 : vector<1x128xf32> to vector<64x128xf32>
    %924 = arith.addf %921, %923 : vector<64x128xf32>
    %c0_414 = arith.constant 0 : index
    %c0_415 = arith.constant 0 : index
    %925 = vector.load %arg15[%c0_414, %c0_415] : memref<64x128xf32, #tpu.memory_space<vmem>>, vector<64x128xf32>
    tpu.vector_store %arg15[%c0_414, %c0_415], %924 {strides = array<i32>} : memref<64x128xf32, #tpu.memory_space<vmem>>, vector<64x128xf32>,
    %cst_416 = arith.constant 0.000000e+00 : f32
    %926 = vector.broadcast %cst_416 : f32 to vector<8x32xf32>
    %cst_417 = arith.constant 0.000000e+00 : f32
    %927 = vector.broadcast %cst_417 : f32 to vector<8x32xf32>
    %c0_418 = arith.constant 0 : index
    %c0_419 = arith.constant 0 : index
    %928 = vector.load %arg15[%c0_418, %c0_419] : memref<64x128xf32, #tpu.memory_space<vmem>>, vector<8x128xf32>
    %929 = arith.truncf %926 : vector<8x32xf32> to vector<8x32xbf16>
    %c0_420 = arith.constant 0 : index
    %c0_421 = arith.constant 0 : index
    %930 = vector.load %arg12[%c0_420, %c0_421] : memref<32x128xbf16, #tpu.memory_space<vmem>>, vector<32x128xbf16>
    %cst_422 = arith.constant dense<0.000000e+00> : vector<8x128xf32>
    %931 = tpu.matmul %929, %930, %cst_422 {dimension_numbers = #tpu.dot_dimension_numbers<[1], [0], [0], [1], [0, 0, 1, 1], [], []>} : vector<8x32xbf16>, vector<32x128xbf16>, vector<8x128xf32> -> vector<8x128xf32>
    %932 = arith.addf %928, %931 : vector<8x128xf32>
    %933 = vector.extract_strided_slice %932 {offsets = [0, 0], sizes = [8, 32], strides = [1, 1]} : vector<8x128xf32> to vector<8x32xf32>
    %cst_423 = arith.constant 5.000000e-01 : f32
    %934 = vector.broadcast %cst_423 : f32 to vector<8x32xf32>
    %935 = arith.mulf %934, %933 : vector<8x32xf32>
    %936 = math.tanh %935 : vector<8x32xf32>
    %cst_424 = arith.constant 5.000000e-01 : f32
    %937 = vector.broadcast %cst_424 : f32 to vector<8x32xf32>
    %938 = arith.mulf %937, %936 : vector<8x32xf32>
    %cst_425 = arith.constant 5.000000e-01 : f32
    %939 = vector.broadcast %cst_425 : f32 to vector<8x32xf32>
    %940 = arith.addf %938, %939 : vector<8x32xf32>
    %941 = vector.extract_strided_slice %932 {offsets = [0, 32], sizes = [8, 32], strides = [1, 1]} : vector<8x128xf32> to vector<8x32xf32>
    %cst_426 = arith.constant 5.000000e-01 : f32
    %942 = vector.broadcast %cst_426 : f32 to vector<8x32xf32>
    %943 = arith.mulf %942, %941 : vector<8x32xf32>
    %944 = math.tanh %943 : vector<8x32xf32>
    %cst_427 = arith.constant 5.000000e-01 : f32
    %945 = vector.broadcast %cst_427 : f32 to vector<8x32xf32>
    %946 = arith.mulf %945, %944 : vector<8x32xf32>
    %cst_428 = arith.constant 5.000000e-01 : f32
    %947 = vector.broadcast %cst_428 : f32 to vector<8x32xf32>
    %948 = arith.addf %946, %947 : vector<8x32xf32>
    %949 = vector.extract_strided_slice %932 {offsets = [0, 64], sizes = [8, 32], strides = [1, 1]} : vector<8x128xf32> to vector<8x32xf32>
    %950 = math.tanh %949 : vector<8x32xf32>
    %951 = vector.extract_strided_slice %932 {offsets = [0, 96], sizes = [8, 32], strides = [1, 1]} : vector<8x128xf32> to vector<8x32xf32>
    %cst_429 = arith.constant 5.000000e-01 : f32
    %952 = vector.broadcast %cst_429 : f32 to vector<8x32xf32>
    %953 = arith.mulf %952, %951 : vector<8x32xf32>
    %954 = math.tanh %953 : vector<8x32xf32>
    %cst_430 = arith.constant 5.000000e-01 : f32
    %955 = vector.broadcast %cst_430 : f32 to vector<8x32xf32>
    %956 = arith.mulf %955, %954 : vector<8x32xf32>
    %cst_431 = arith.constant 5.000000e-01 : f32
    %957 = vector.broadcast %cst_431 : f32 to vector<8x32xf32>
    %958 = arith.addf %956, %957 : vector<8x32xf32>
    %959 = arith.mulf %948, %927 : vector<8x32xf32>
    %960 = arith.mulf %940, %950 : vector<8x32xf32>
    %961 = arith.addf %959, %960 : vector<8x32xf32>
    %962 = math.tanh %961 : vector<8x32xf32>
    %963 = arith.mulf %958, %962 : vector<8x32xf32>
    %964 = vector.extract_strided_slice %963 {offsets = [0, 0], sizes = [2, 8], strides = [1, 1]} : vector<8x32xf32> to vector<2x8xf32>
    %c0_432 = arith.constant 0 : index
    %c0_433 = arith.constant 0 : index
    %965 = vector.load %arg14[%c0_432, %c0_433] : memref<2x64xf32, #tpu.memory_space<vmem>>, vector<2x8xf32>
    tpu.vector_store %arg14[%c0_432, %c0_433], %964 {strides = array<i32>} : memref<2x64xf32, #tpu.memory_space<vmem>>, vector<2x8xf32>,
    %c8_434 = arith.constant 8 : index
    %c0_435 = arith.constant 0 : index
    %966 = vector.load %arg15[%c8_434, %c0_435] : memref<64x128xf32, #tpu.memory_space<vmem>>, vector<8x128xf32>
    %967 = arith.truncf %963 : vector<8x32xf32> to vector<8x32xbf16>
    %c0_436 = arith.constant 0 : index
    %c0_437 = arith.constant 0 : index
    %968 = vector.load %arg12[%c0_436, %c0_437] : memref<32x128xbf16, #tpu.memory_space<vmem>>, vector<32x128xbf16>
    %cst_438 = arith.constant dense<0.000000e+00> : vector<8x128xf32>
    %969 = tpu.matmul %967, %968, %cst_438 {dimension_numbers = #tpu.dot_dimension_numbers<[1], [0], [0], [1], [0, 0, 1, 1], [], []>} : vector<8x32xbf16>, vector<32x128xbf16>, vector<8x128xf32> -> vector<8x128xf32>
    %970 = arith.addf %966, %969 : vector<8x128xf32>
    %971 = vector.extract_strided_slice %970 {offsets = [0, 0], sizes = [8, 32], strides = [1, 1]} : vector<8x128xf32> to vector<8x32xf32>
    %cst_439 = arith.constant 5.000000e-01 : f32
    %972 = vector.broadcast %cst_439 : f32 to vector<8x32xf32>
    %973 = arith.mulf %972, %971 : vector<8x32xf32>
    %974 = math.tanh %973 : vector<8x32xf32>
    %cst_440 = arith.constant 5.000000e-01 : f32
    %975 = vector.broadcast %cst_440 : f32 to vector<8x32xf32>
    %976 = arith.mulf %975, %974 : vector<8x32xf32>
    %cst_441 = arith.constant 5.000000e-01 : f32
    %977 = vector.broadcast %cst_441 : f32 to vector<8x32xf32>
    %978 = arith.addf %976, %977 : vector<8x32xf32>
    %979 = vector.extract_strided_slice %970 {offsets = [0, 32], sizes = [8, 32], strides = [1, 1]} : vector<8x128xf32> to vector<8x32xf32>
    %cst_442 = arith.constant 5.000000e-01 : f32
    %980 = vector.broadcast %cst_442 : f32 to vector<8x32xf32>
    %981 = arith.mulf %980, %979 : vector<8x32xf32>
    %982 = math.tanh %981 : vector<8x32xf32>
    %cst_443 = arith.constant 5.000000e-01 : f32
    %983 = vector.broadcast %cst_443 : f32 to vector<8x32xf32>
    %984 = arith.mulf %983, %982 : vector<8x32xf32>
    %cst_444 = arith.constant 5.000000e-01 : f32
    %985 = vector.broadcast %cst_444 : f32 to vector<8x32xf32>
    %986 = arith.addf %984, %985 : vector<8x32xf32>
    %987 = vector.extract_strided_slice %970 {offsets = [0, 64], sizes = [8, 32], strides = [1, 1]} : vector<8x128xf32> to vector<8x32xf32>
    %988 = math.tanh %987 : vector<8x32xf32>
    %989 = vector.extract_strided_slice %970 {offsets = [0, 96], sizes = [8, 32], strides = [1, 1]} : vector<8x128xf32> to vector<8x32xf32>
    %cst_445 = arith.constant 5.000000e-01 : f32
    %990 = vector.broadcast %cst_445 : f32 to vector<8x32xf32>
    %991 = arith.mulf %990, %989 : vector<8x32xf32>
    %992 = math.tanh %991 : vector<8x32xf32>
    %cst_446 = arith.constant 5.000000e-01 : f32
    %993 = vector.broadcast %cst_446 : f32 to vector<8x32xf32>
    %994 = arith.mulf %993, %992 : vector<8x32xf32>
    %cst_447 = arith.constant 5.000000e-01 : f32
    %995 = vector.broadcast %cst_447 : f32 to vector<8x32xf32>
    %996 = arith.addf %994, %995 : vector<8x32xf32>
    %997 = arith.mulf %986, %961 : vector<8x32xf32>
    %998 = arith.mulf %978, %988 : vector<8x32xf32>
    %999 = arith.addf %997, %998 : vector<8x32xf32>
    %1000 = math.tanh %999 : vector<8x32xf32>
    %1001 = arith.mulf %996, %1000 : vector<8x32xf32>
    %1002 = vector.extract_strided_slice %1001 {offsets = [0, 0], sizes = [2, 8], strides = [1, 1]} : vector<8x32xf32> to vector<2x8xf32>
    %c0_448 = arith.constant 0 : index
    %c8_449 = arith.constant 8 : index
    %1003 = vector.load %arg14[%c0_448, %c8_449] : memref<2x64xf32, #tpu.memory_space<vmem>>, vector<2x8xf32>
    tpu.vector_store %arg14[%c0_448, %c8_449], %1002 {strides = array<i32>} : memref<2x64xf32, #tpu.memory_space<vmem>>, vector<2x8xf32>,
    %c16_450 = arith.constant 16 : index
    %c0_451 = arith.constant 0 : index
    %1004 = vector.load %arg15[%c16_450, %c0_451] : memref<64x128xf32, #tpu.memory_space<vmem>>, vector<8x128xf32>
    %1005 = arith.truncf %1001 : vector<8x32xf32> to vector<8x32xbf16>
    %c0_452 = arith.constant 0 : index
    %c0_453 = arith.constant 0 : index
    %1006 = vector.load %arg12[%c0_452, %c0_453] : memref<32x128xbf16, #tpu.memory_space<vmem>>, vector<32x128xbf16>
    %cst_454 = arith.constant dense<0.000000e+00> : vector<8x128xf32>
    %1007 = tpu.matmul %1005, %1006, %cst_454 {dimension_numbers = #tpu.dot_dimension_numbers<[1], [0], [0], [1], [0, 0, 1, 1], [], []>} : vector<8x32xbf16>, vector<32x128xbf16>, vector<8x128xf32> -> vector<8x128xf32>
    %1008 = arith.addf %1004, %1007 : vector<8x128xf32>
    %1009 = vector.extract_strided_slice %1008 {offsets = [0, 0], sizes = [8, 32], strides = [1, 1]} : vector<8x128xf32> to vector<8x32xf32>
    %cst_455 = arith.constant 5.000000e-01 : f32
    %1010 = vector.broadcast %cst_455 : f32 to vector<8x32xf32>
    %1011 = arith.mulf %1010, %1009 : vector<8x32xf32>
    %1012 = math.tanh %1011 : vector<8x32xf32>
    %cst_456 = arith.constant 5.000000e-01 : f32
    %1013 = vector.broadcast %cst_456 : f32 to vector<8x32xf32>
    %1014 = arith.mulf %1013, %1012 : vector<8x32xf32>
    %cst_457 = arith.constant 5.000000e-01 : f32
    %1015 = vector.broadcast %cst_457 : f32 to vector<8x32xf32>
    %1016 = arith.addf %1014, %1015 : vector<8x32xf32>
    %1017 = vector.extract_strided_slice %1008 {offsets = [0, 32], sizes = [8, 32], strides = [1, 1]} : vector<8x128xf32> to vector<8x32xf32>
    %cst_458 = arith.constant 5.000000e-01 : f32
    %1018 = vector.broadcast %cst_458 : f32 to vector<8x32xf32>
    %1019 = arith.mulf %1018, %1017 : vector<8x32xf32>
    %1020 = math.tanh %1019 : vector<8x32xf32>
    %cst_459 = arith.constant 5.000000e-01 : f32
    %1021 = vector.broadcast %cst_459 : f32 to vector<8x32xf32>
    %1022 = arith.mulf %1021, %1020 : vector<8x32xf32>
    %cst_460 = arith.constant 5.000000e-01 : f32
    %1023 = vector.broadcast %cst_460 : f32 to vector<8x32xf32>
    %1024 = arith.addf %1022, %1023 : vector<8x32xf32>
    %1025 = vector.extract_strided_slice %1008 {offsets = [0, 64], sizes = [8, 32], strides = [1, 1]} : vector<8x128xf32> to vector<8x32xf32>
    %1026 = math.tanh %1025 : vector<8x32xf32>
    %1027 = vector.extract_strided_slice %1008 {offsets = [0, 96], sizes = [8, 32], strides = [1, 1]} : vector<8x128xf32> to vector<8x32xf32>
    %cst_461 = arith.constant 5.000000e-01 : f32
    %1028 = vector.broadcast %cst_461 : f32 to vector<8x32xf32>
    %1029 = arith.mulf %1028, %1027 : vector<8x32xf32>
    %1030 = math.tanh %1029 : vector<8x32xf32>
    %cst_462 = arith.constant 5.000000e-01 : f32
    %1031 = vector.broadcast %cst_462 : f32 to vector<8x32xf32>
    %1032 = arith.mulf %1031, %1030 : vector<8x32xf32>
    %cst_463 = arith.constant 5.000000e-01 : f32
    %1033 = vector.broadcast %cst_463 : f32 to vector<8x32xf32>
    %1034 = arith.addf %1032, %1033 : vector<8x32xf32>
    %1035 = arith.mulf %1024, %999 : vector<8x32xf32>
    %1036 = arith.mulf %1016, %1026 : vector<8x32xf32>
    %1037 = arith.addf %1035, %1036 : vector<8x32xf32>
    %1038 = math.tanh %1037 : vector<8x32xf32>
    %1039 = arith.mulf %1034, %1038 : vector<8x32xf32>
    %1040 = vector.extract_strided_slice %1039 {offsets = [0, 0], sizes = [2, 8], strides = [1, 1]} : vector<8x32xf32> to vector<2x8xf32>
    %c0_464 = arith.constant 0 : index
    %c16_465 = arith.constant 16 : index
    %1041 = vector.load %arg14[%c0_464, %c16_465] : memref<2x64xf32, #tpu.memory_space<vmem>>, vector<2x8xf32>
    tpu.vector_store %arg14[%c0_464, %c16_465], %1040 {strides = array<i32>} : memref<2x64xf32, #tpu.memory_space<vmem>>, vector<2x8xf32>,
    %c24_466 = arith.constant 24 : index
    %c0_467 = arith.constant 0 : index
    %1042 = vector.load %arg15[%c24_466, %c0_467] : memref<64x128xf32, #tpu.memory_space<vmem>>, vector<8x128xf32>
    %1043 = arith.truncf %1039 : vector<8x32xf32> to vector<8x32xbf16>
    %c0_468 = arith.constant 0 : index
    %c0_469 = arith.constant 0 : index
    %1044 = vector.load %arg12[%c0_468, %c0_469] : memref<32x128xbf16, #tpu.memory_space<vmem>>, vector<32x128xbf16>
    %cst_470 = arith.constant dense<0.000000e+00> : vector<8x128xf32>
    %1045 = tpu.matmul %1043, %1044, %cst_470 {dimension_numbers = #tpu.dot_dimension_numbers<[1], [0], [0], [1], [0, 0, 1, 1], [], []>} : vector<8x32xbf16>, vector<32x128xbf16>, vector<8x128xf32> -> vector<8x128xf32>
    %1046 = arith.addf %1042, %1045 : vector<8x128xf32>
    %1047 = vector.extract_strided_slice %1046 {offsets = [0, 0], sizes = [8, 32], strides = [1, 1]} : vector<8x128xf32> to vector<8x32xf32>
    %cst_471 = arith.constant 5.000000e-01 : f32
    %1048 = vector.broadcast %cst_471 : f32 to vector<8x32xf32>
    %1049 = arith.mulf %1048, %1047 : vector<8x32xf32>
    %1050 = math.tanh %1049 : vector<8x32xf32>
    %cst_472 = arith.constant 5.000000e-01 : f32
    %1051 = vector.broadcast %cst_472 : f32 to vector<8x32xf32>
    %1052 = arith.mulf %1051, %1050 : vector<8x32xf32>
    %cst_473 = arith.constant 5.000000e-01 : f32
    %1053 = vector.broadcast %cst_473 : f32 to vector<8x32xf32>
    %1054 = arith.addf %1052, %1053 : vector<8x32xf32>
    %1055 = vector.extract_strided_slice %1046 {offsets = [0, 32], sizes = [8, 32], strides = [1, 1]} : vector<8x128xf32> to vector<8x32xf32>
    %cst_474 = arith.constant 5.000000e-01 : f32
    %1056 = vector.broadcast %cst_474 : f32 to vector<8x32xf32>
    %1057 = arith.mulf %1056, %1055 : vector<8x32xf32>
    %1058 = math.tanh %1057 : vector<8x32xf32>
    %cst_475 = arith.constant 5.000000e-01 : f32
    %1059 = vector.broadcast %cst_475 : f32 to vector<8x32xf32>
    %1060 = arith.mulf %1059, %1058 : vector<8x32xf32>
    %cst_476 = arith.constant 5.000000e-01 : f32
    %1061 = vector.broadcast %cst_476 : f32 to vector<8x32xf32>
    %1062 = arith.addf %1060, %1061 : vector<8x32xf32>
    %1063 = vector.extract_strided_slice %1046 {offsets = [0, 64], sizes = [8, 32], strides = [1, 1]} : vector<8x128xf32> to vector<8x32xf32>
    %1064 = math.tanh %1063 : vector<8x32xf32>
    %1065 = vector.extract_strided_slice %1046 {offsets = [0, 96], sizes = [8, 32], strides = [1, 1]} : vector<8x128xf32> to vector<8x32xf32>
    %cst_477 = arith.constant 5.000000e-01 : f32
    %1066 = vector.broadcast %cst_477 : f32 to vector<8x32xf32>
    %1067 = arith.mulf %1066, %1065 : vector<8x32xf32>
    %1068 = math.tanh %1067 : vector<8x32xf32>
    %cst_478 = arith.constant 5.000000e-01 : f32
    %1069 = vector.broadcast %cst_478 : f32 to vector<8x32xf32>
    %1070 = arith.mulf %1069, %1068 : vector<8x32xf32>
    %cst_479 = arith.constant 5.000000e-01 : f32
    %1071 = vector.broadcast %cst_479 : f32 to vector<8x32xf32>
    %1072 = arith.addf %1070, %1071 : vector<8x32xf32>
    %1073 = arith.mulf %1062, %1037 : vector<8x32xf32>
    %1074 = arith.mulf %1054, %1064 : vector<8x32xf32>
    %1075 = arith.addf %1073, %1074 : vector<8x32xf32>
    %1076 = math.tanh %1075 : vector<8x32xf32>
    %1077 = arith.mulf %1072, %1076 : vector<8x32xf32>
    %1078 = vector.extract_strided_slice %1077 {offsets = [0, 0], sizes = [2, 8], strides = [1, 1]} : vector<8x32xf32> to vector<2x8xf32>
    %c0_480 = arith.constant 0 : index
    %c24_481 = arith.constant 24 : index
    %1079 = vector.load %arg14[%c0_480, %c24_481] : memref<2x64xf32, #tpu.memory_space<vmem>>, vector<2x8xf32>
    tpu.vector_store %arg14[%c0_480, %c24_481], %1078 {strides = array<i32>} : memref<2x64xf32, #tpu.memory_space<vmem>>, vector<2x8xf32>,
    %c32_482 = arith.constant 32 : index
    %c0_483 = arith.constant 0 : index
    %1080 = vector.load %arg15[%c32_482, %c0_483] : memref<64x128xf32, #tpu.memory_space<vmem>>, vector<8x128xf32>
    %1081 = arith.truncf %1077 : vector<8x32xf32> to vector<8x32xbf16>
    %c0_484 = arith.constant 0 : index
    %c0_485 = arith.constant 0 : index
    %1082 = vector.load %arg12[%c0_484, %c0_485] : memref<32x128xbf16, #tpu.memory_space<vmem>>, vector<32x128xbf16>
    %cst_486 = arith.constant dense<0.000000e+00> : vector<8x128xf32>
    %1083 = tpu.matmul %1081, %1082, %cst_486 {dimension_numbers = #tpu.dot_dimension_numbers<[1], [0], [0], [1], [0, 0, 1, 1], [], []>} : vector<8x32xbf16>, vector<32x128xbf16>, vector<8x128xf32> -> vector<8x128xf32>
    %1084 = arith.addf %1080, %1083 : vector<8x128xf32>
    %1085 = vector.extract_strided_slice %1084 {offsets = [0, 0], sizes = [8, 32], strides = [1, 1]} : vector<8x128xf32> to vector<8x32xf32>
    %cst_487 = arith.constant 5.000000e-01 : f32
    %1086 = vector.broadcast %cst_487 : f32 to vector<8x32xf32>
    %1087 = arith.mulf %1086, %1085 : vector<8x32xf32>
    %1088 = math.tanh %1087 : vector<8x32xf32>
    %cst_488 = arith.constant 5.000000e-01 : f32
    %1089 = vector.broadcast %cst_488 : f32 to vector<8x32xf32>
    %1090 = arith.mulf %1089, %1088 : vector<8x32xf32>
    %cst_489 = arith.constant 5.000000e-01 : f32
    %1091 = vector.broadcast %cst_489 : f32 to vector<8x32xf32>
    %1092 = arith.addf %1090, %1091 : vector<8x32xf32>
    %1093 = vector.extract_strided_slice %1084 {offsets = [0, 32], sizes = [8, 32], strides = [1, 1]} : vector<8x128xf32> to vector<8x32xf32>
    %cst_490 = arith.constant 5.000000e-01 : f32
    %1094 = vector.broadcast %cst_490 : f32 to vector<8x32xf32>
    %1095 = arith.mulf %1094, %1093 : vector<8x32xf32>
    %1096 = math.tanh %1095 : vector<8x32xf32>
    %cst_491 = arith.constant 5.000000e-01 : f32
    %1097 = vector.broadcast %cst_491 : f32 to vector<8x32xf32>
    %1098 = arith.mulf %1097, %1096 : vector<8x32xf32>
    %cst_492 = arith.constant 5.000000e-01 : f32
    %1099 = vector.broadcast %cst_492 : f32 to vector<8x32xf32>
    %1100 = arith.addf %1098, %1099 : vector<8x32xf32>
    %1101 = vector.extract_strided_slice %1084 {offsets = [0, 64], sizes = [8, 32], strides = [1, 1]} : vector<8x128xf32> to vector<8x32xf32>
    %1102 = math.tanh %1101 : vector<8x32xf32>
    %1103 = vector.extract_strided_slice %1084 {offsets = [0, 96], sizes = [8, 32], strides = [1, 1]} : vector<8x128xf32> to vector<8x32xf32>
    %cst_493 = arith.constant 5.000000e-01 : f32
    %1104 = vector.broadcast %cst_493 : f32 to vector<8x32xf32>
    %1105 = arith.mulf %1104, %1103 : vector<8x32xf32>
    %1106 = math.tanh %1105 : vector<8x32xf32>
    %cst_494 = arith.constant 5.000000e-01 : f32
    %1107 = vector.broadcast %cst_494 : f32 to vector<8x32xf32>
    %1108 = arith.mulf %1107, %1106 : vector<8x32xf32>
    %cst_495 = arith.constant 5.000000e-01 : f32
    %1109 = vector.broadcast %cst_495 : f32 to vector<8x32xf32>
    %1110 = arith.addf %1108, %1109 : vector<8x32xf32>
    %1111 = arith.mulf %1100, %1075 : vector<8x32xf32>
    %1112 = arith.mulf %1092, %1102 : vector<8x32xf32>
    %1113 = arith.addf %1111, %1112 : vector<8x32xf32>
    %1114 = math.tanh %1113 : vector<8x32xf32>
    %1115 = arith.mulf %1110, %1114 : vector<8x32xf32>
    %1116 = vector.extract_strided_slice %1115 {offsets = [0, 0], sizes = [2, 8], strides = [1, 1]} : vector<8x32xf32> to vector<2x8xf32>
    %c0_496 = arith.constant 0 : index
    %c32_497 = arith.constant 32 : index
    %1117 = vector.load %arg14[%c0_496, %c32_497] : memref<2x64xf32, #tpu.memory_space<vmem>>, vector<2x8xf32>
    tpu.vector_store %arg14[%c0_496, %c32_497], %1116 {strides = array<i32>} : memref<2x64xf32, #tpu.memory_space<vmem>>, vector<2x8xf32>,
    %c40_498 = arith.constant 40 : index
    %c0_499 = arith.constant 0 : index
    %1118 = vector.load %arg15[%c40_498, %c0_499] : memref<64x128xf32, #tpu.memory_space<vmem>>, vector<8x128xf32>
    %1119 = arith.truncf %1115 : vector<8x32xf32> to vector<8x32xbf16>
    %c0_500 = arith.constant 0 : index
    %c0_501 = arith.constant 0 : index
    %1120 = vector.load %arg12[%c0_500, %c0_501] : memref<32x128xbf16, #tpu.memory_space<vmem>>, vector<32x128xbf16>
    %cst_502 = arith.constant dense<0.000000e+00> : vector<8x128xf32>
    %1121 = tpu.matmul %1119, %1120, %cst_502 {dimension_numbers = #tpu.dot_dimension_numbers<[1], [0], [0], [1], [0, 0, 1, 1], [], []>} : vector<8x32xbf16>, vector<32x128xbf16>, vector<8x128xf32> -> vector<8x128xf32>
    %1122 = arith.addf %1118, %1121 : vector<8x128xf32>
    %1123 = vector.extract_strided_slice %1122 {offsets = [0, 0], sizes = [8, 32], strides = [1, 1]} : vector<8x128xf32> to vector<8x32xf32>
    %cst_503 = arith.constant 5.000000e-01 : f32
    %1124 = vector.broadcast %cst_503 : f32 to vector<8x32xf32>
    %1125 = arith.mulf %1124, %1123 : vector<8x32xf32>
    %1126 = math.tanh %1125 : vector<8x32xf32>
    %cst_504 = arith.constant 5.000000e-01 : f32
    %1127 = vector.broadcast %cst_504 : f32 to vector<8x32xf32>
    %1128 = arith.mulf %1127, %1126 : vector<8x32xf32>
    %cst_505 = arith.constant 5.000000e-01 : f32
    %1129 = vector.broadcast %cst_505 : f32 to vector<8x32xf32>
    %1130 = arith.addf %1128, %1129 : vector<8x32xf32>
    %1131 = vector.extract_strided_slice %1122 {offsets = [0, 32], sizes = [8, 32], strides = [1, 1]} : vector<8x128xf32> to vector<8x32xf32>
    %cst_506 = arith.constant 5.000000e-01 : f32
    %1132 = vector.broadcast %cst_506 : f32 to vector<8x32xf32>
    %1133 = arith.mulf %1132, %1131 : vector<8x32xf32>
    %1134 = math.tanh %1133 : vector<8x32xf32>
    %cst_507 = arith.constant 5.000000e-01 : f32
    %1135 = vector.broadcast %cst_507 : f32 to vector<8x32xf32>
    %1136 = arith.mulf %1135, %1134 : vector<8x32xf32>
    %cst_508 = arith.constant 5.000000e-01 : f32
    %1137 = vector.broadcast %cst_508 : f32 to vector<8x32xf32>
    %1138 = arith.addf %1136, %1137 : vector<8x32xf32>
    %1139 = vector.extract_strided_slice %1122 {offsets = [0, 64], sizes = [8, 32], strides = [1, 1]} : vector<8x128xf32> to vector<8x32xf32>
    %1140 = math.tanh %1139 : vector<8x32xf32>
    %1141 = vector.extract_strided_slice %1122 {offsets = [0, 96], sizes = [8, 32], strides = [1, 1]} : vector<8x128xf32> to vector<8x32xf32>
    %cst_509 = arith.constant 5.000000e-01 : f32
    %1142 = vector.broadcast %cst_509 : f32 to vector<8x32xf32>
    %1143 = arith.mulf %1142, %1141 : vector<8x32xf32>
    %1144 = math.tanh %1143 : vector<8x32xf32>
    %cst_510 = arith.constant 5.000000e-01 : f32
    %1145 = vector.broadcast %cst_510 : f32 to vector<8x32xf32>
    %1146 = arith.mulf %1145, %1144 : vector<8x32xf32>
    %cst_511 = arith.constant 5.000000e-01 : f32
    %1147 = vector.broadcast %cst_511 : f32 to vector<8x32xf32>
    %1148 = arith.addf %1146, %1147 : vector<8x32xf32>
    %1149 = arith.mulf %1138, %1113 : vector<8x32xf32>
    %1150 = arith.mulf %1130, %1140 : vector<8x32xf32>
    %1151 = arith.addf %1149, %1150 : vector<8x32xf32>
    %1152 = math.tanh %1151 : vector<8x32xf32>
    %1153 = arith.mulf %1148, %1152 : vector<8x32xf32>
    %1154 = vector.extract_strided_slice %1153 {offsets = [0, 0], sizes = [2, 8], strides = [1, 1]} : vector<8x32xf32> to vector<2x8xf32>
    %c0_512 = arith.constant 0 : index
    %c40_513 = arith.constant 40 : index
    %1155 = vector.load %arg14[%c0_512, %c40_513] : memref<2x64xf32, #tpu.memory_space<vmem>>, vector<2x8xf32>
    tpu.vector_store %arg14[%c0_512, %c40_513], %1154 {strides = array<i32>} : memref<2x64xf32, #tpu.memory_space<vmem>>, vector<2x8xf32>,
    %c48_514 = arith.constant 48 : index
    %c0_515 = arith.constant 0 : index
    %1156 = vector.load %arg15[%c48_514, %c0_515] : memref<64x128xf32, #tpu.memory_space<vmem>>, vector<8x128xf32>
    %1157 = arith.truncf %1153 : vector<8x32xf32> to vector<8x32xbf16>
    %c0_516 = arith.constant 0 : index
    %c0_517 = arith.constant 0 : index
    %1158 = vector.load %arg12[%c0_516, %c0_517] : memref<32x128xbf16, #tpu.memory_space<vmem>>, vector<32x128xbf16>
    %cst_518 = arith.constant dense<0.000000e+00> : vector<8x128xf32>
    %1159 = tpu.matmul %1157, %1158, %cst_518 {dimension_numbers = #tpu.dot_dimension_numbers<[1], [0], [0], [1], [0, 0, 1, 1], [], []>} : vector<8x32xbf16>, vector<32x128xbf16>, vector<8x128xf32> -> vector<8x128xf32>
    %1160 = arith.addf %1156, %1159 : vector<8x128xf32>
    %1161 = vector.extract_strided_slice %1160 {offsets = [0, 0], sizes = [8, 32], strides = [1, 1]} : vector<8x128xf32> to vector<8x32xf32>
    %cst_519 = arith.constant 5.000000e-01 : f32
    %1162 = vector.broadcast %cst_519 : f32 to vector<8x32xf32>
    %1163 = arith.mulf %1162, %1161 : vector<8x32xf32>
    %1164 = math.tanh %1163 : vector<8x32xf32>
    %cst_520 = arith.constant 5.000000e-01 : f32
    %1165 = vector.broadcast %cst_520 : f32 to vector<8x32xf32>
    %1166 = arith.mulf %1165, %1164 : vector<8x32xf32>
    %cst_521 = arith.constant 5.000000e-01 : f32
    %1167 = vector.broadcast %cst_521 : f32 to vector<8x32xf32>
    %1168 = arith.addf %1166, %1167 : vector<8x32xf32>
    %1169 = vector.extract_strided_slice %1160 {offsets = [0, 32], sizes = [8, 32], strides = [1, 1]} : vector<8x128xf32> to vector<8x32xf32>
    %cst_522 = arith.constant 5.000000e-01 : f32
    %1170 = vector.broadcast %cst_522 : f32 to vector<8x32xf32>
    %1171 = arith.mulf %1170, %1169 : vector<8x32xf32>
    %1172 = math.tanh %1171 : vector<8x32xf32>
    %cst_523 = arith.constant 5.000000e-01 : f32
    %1173 = vector.broadcast %cst_523 : f32 to vector<8x32xf32>
    %1174 = arith.mulf %1173, %1172 : vector<8x32xf32>
    %cst_524 = arith.constant 5.000000e-01 : f32
    %1175 = vector.broadcast %cst_524 : f32 to vector<8x32xf32>
    %1176 = arith.addf %1174, %1175 : vector<8x32xf32>
    %1177 = vector.extract_strided_slice %1160 {offsets = [0, 64], sizes = [8, 32], strides = [1, 1]} : vector<8x128xf32> to vector<8x32xf32>
    %1178 = math.tanh %1177 : vector<8x32xf32>
    %1179 = vector.extract_strided_slice %1160 {offsets = [0, 96], sizes = [8, 32], strides = [1, 1]} : vector<8x128xf32> to vector<8x32xf32>
    %cst_525 = arith.constant 5.000000e-01 : f32
    %1180 = vector.broadcast %cst_525 : f32 to vector<8x32xf32>
    %1181 = arith.mulf %1180, %1179 : vector<8x32xf32>
    %1182 = math.tanh %1181 : vector<8x32xf32>
    %cst_526 = arith.constant 5.000000e-01 : f32
    %1183 = vector.broadcast %cst_526 : f32 to vector<8x32xf32>
    %1184 = arith.mulf %1183, %1182 : vector<8x32xf32>
    %cst_527 = arith.constant 5.000000e-01 : f32
    %1185 = vector.broadcast %cst_527 : f32 to vector<8x32xf32>
    %1186 = arith.addf %1184, %1185 : vector<8x32xf32>
    %1187 = arith.mulf %1176, %1151 : vector<8x32xf32>
    %1188 = arith.mulf %1168, %1178 : vector<8x32xf32>
    %1189 = arith.addf %1187, %1188 : vector<8x32xf32>
    %1190 = math.tanh %1189 : vector<8x32xf32>
    %1191 = arith.mulf %1186, %1190 : vector<8x32xf32>
    %1192 = vector.extract_strided_slice %1191 {offsets = [0, 0], sizes = [2, 8], strides = [1, 1]} : vector<8x32xf32> to vector<2x8xf32>
    %c0_528 = arith.constant 0 : index
    %c48_529 = arith.constant 48 : index
    %1193 = vector.load %arg14[%c0_528, %c48_529] : memref<2x64xf32, #tpu.memory_space<vmem>>, vector<2x8xf32>
    tpu.vector_store %arg14[%c0_528, %c48_529], %1192 {strides = array<i32>} : memref<2x64xf32, #tpu.memory_space<vmem>>, vector<2x8xf32>,
    %c56_530 = arith.constant 56 : index
    %c0_531 = arith.constant 0 : index
    %1194 = vector.load %arg15[%c56_530, %c0_531] : memref<64x128xf32, #tpu.memory_space<vmem>>, vector<8x128xf32>
    %1195 = arith.truncf %1191 : vector<8x32xf32> to vector<8x32xbf16>
    %c0_532 = arith.constant 0 : index
    %c0_533 = arith.constant 0 : index
    %1196 = vector.load %arg12[%c0_532, %c0_533] : memref<32x128xbf16, #tpu.memory_space<vmem>>, vector<32x128xbf16>
    %cst_534 = arith.constant dense<0.000000e+00> : vector<8x128xf32>
    %1197 = tpu.matmul %1195, %1196, %cst_534 {dimension_numbers = #tpu.dot_dimension_numbers<[1], [0], [0], [1], [0, 0, 1, 1], [], []>} : vector<8x32xbf16>, vector<32x128xbf16>, vector<8x128xf32> -> vector<8x128xf32>
    %1198 = arith.addf %1194, %1197 : vector<8x128xf32>
    %1199 = vector.extract_strided_slice %1198 {offsets = [0, 0], sizes = [8, 32], strides = [1, 1]} : vector<8x128xf32> to vector<8x32xf32>
    %cst_535 = arith.constant 5.000000e-01 : f32
    %1200 = vector.broadcast %cst_535 : f32 to vector<8x32xf32>
    %1201 = arith.mulf %1200, %1199 : vector<8x32xf32>
    %1202 = math.tanh %1201 : vector<8x32xf32>
    %cst_536 = arith.constant 5.000000e-01 : f32
    %1203 = vector.broadcast %cst_536 : f32 to vector<8x32xf32>
    %1204 = arith.mulf %1203, %1202 : vector<8x32xf32>
    %cst_537 = arith.constant 5.000000e-01 : f32
    %1205 = vector.broadcast %cst_537 : f32 to vector<8x32xf32>
    %1206 = arith.addf %1204, %1205 : vector<8x32xf32>
    %1207 = vector.extract_strided_slice %1198 {offsets = [0, 32], sizes = [8, 32], strides = [1, 1]} : vector<8x128xf32> to vector<8x32xf32>
    %cst_538 = arith.constant 5.000000e-01 : f32
    %1208 = vector.broadcast %cst_538 : f32 to vector<8x32xf32>
    %1209 = arith.mulf %1208, %1207 : vector<8x32xf32>
    %1210 = math.tanh %1209 : vector<8x32xf32>
    %cst_539 = arith.constant 5.000000e-01 : f32
    %1211 = vector.broadcast %cst_539 : f32 to vector<8x32xf32>
    %1212 = arith.mulf %1211, %1210 : vector<8x32xf32>
    %cst_540 = arith.constant 5.000000e-01 : f32
    %1213 = vector.broadcast %cst_540 : f32 to vector<8x32xf32>
    %1214 = arith.addf %1212, %1213 : vector<8x32xf32>
    %1215 = vector.extract_strided_slice %1198 {offsets = [0, 64], sizes = [8, 32], strides = [1, 1]} : vector<8x128xf32> to vector<8x32xf32>
    %1216 = math.tanh %1215 : vector<8x32xf32>
    %1217 = vector.extract_strided_slice %1198 {offsets = [0, 96], sizes = [8, 32], strides = [1, 1]} : vector<8x128xf32> to vector<8x32xf32>
    %cst_541 = arith.constant 5.000000e-01 : f32
    %1218 = vector.broadcast %cst_541 : f32 to vector<8x32xf32>
    %1219 = arith.mulf %1218, %1217 : vector<8x32xf32>
    %1220 = math.tanh %1219 : vector<8x32xf32>
    %cst_542 = arith.constant 5.000000e-01 : f32
    %1221 = vector.broadcast %cst_542 : f32 to vector<8x32xf32>
    %1222 = arith.mulf %1221, %1220 : vector<8x32xf32>
    %cst_543 = arith.constant 5.000000e-01 : f32
    %1223 = vector.broadcast %cst_543 : f32 to vector<8x32xf32>
    %1224 = arith.addf %1222, %1223 : vector<8x32xf32>
    %1225 = arith.mulf %1214, %1189 : vector<8x32xf32>
    %1226 = arith.mulf %1206, %1216 : vector<8x32xf32>
    %1227 = arith.addf %1225, %1226 : vector<8x32xf32>
    %1228 = math.tanh %1227 : vector<8x32xf32>
    %1229 = arith.mulf %1224, %1228 : vector<8x32xf32>
    %1230 = vector.extract_strided_slice %1229 {offsets = [0, 0], sizes = [2, 8], strides = [1, 1]} : vector<8x32xf32> to vector<2x8xf32>
    %c0_544 = arith.constant 0 : index
    %c56_545 = arith.constant 56 : index
    %1231 = vector.load %arg14[%c0_544, %c56_545] : memref<2x64xf32, #tpu.memory_space<vmem>>, vector<2x8xf32>
    tpu.vector_store %arg14[%c0_544, %c56_545], %1230 {strides = array<i32>} : memref<2x64xf32, #tpu.memory_space<vmem>>, vector<2x8xf32>,
    return
  }
  func.func @transform_0(%arg0: i32) -> (i32, i32) {
    %c0_i32 = arith.constant 0 : i32
    %c0_i32_0 = arith.constant 0 : i32
    %c0_i32_1 = arith.constant 0 : i32
    return %c0_i32, %c0_i32_0 : i32, i32
  }
  func.func @transform_1(%arg0: i32) -> (i32, i32) {
    %c0_i32 = arith.constant 0 : i32
    %c0_i32_0 = arith.constant 0 : i32
    %c0_i32_1 = arith.constant 0 : i32
    return %c0_i32, %c0_i32_0 : i32, i32
  }
  func.func @transform_2(%arg0: i32) -> (i32, i32) {
    %c0_i32 = arith.constant 0 : i32
    %c0_i32_0 = arith.constant 0 : i32
    %c0_i32_1 = arith.constant 0 : i32
    return %c0_i32, %c0_i32_0 : i32, i32
  }
  func.func @transform_3(%arg0: i32) -> (i32, i32) {
    %c0_i32 = arith.constant 0 : i32
    %c0_i32_0 = arith.constant 0 : i32
    %c0_i32_1 = arith.constant 0 : i32
    return %c0_i32, %c0_i32_0 : i32, i32
  }
  func.func @transform_4(%arg0: i32) -> (i32, i32) {
    %c0_i32 = arith.constant 0 : i32
    %c0_i32_0 = arith.constant 0 : i32
    %c0_i32_1 = arith.constant 0 : i32
    return %c0_i32, %c0_i32_0 : i32, i32
  }
  func.func @transform_5(%arg0: i32) -> (i32, i32) {
    %c0_i32 = arith.constant 0 : i32
    %c0_i32_0 = arith.constant 0 : i32
    %c0_i32_1 = arith.constant 0 : i32
    return %c0_i32, %c0_i32_0 : i32, i32
  }
  func.func @transform_6(%arg0: i32) -> (i32, i32) {
    %c0_i32 = arith.constant 0 : i32
    %c0_i32_0 = arith.constant 0 : i32
    %c0_i32_1 = arith.constant 0 : i32
    return %c0_i32, %c0_i32_0 : i32, i32
  }
  func.func @transform_7(%arg0: i32) -> (i32, i32) {
    %c0_i32 = arith.constant 0 : i32
    %c0_i32_0 = arith.constant 0 : i32
    %c0_i32_1 = arith.constant 0 : i32
    return %c0_i32, %c0_i32_0 : i32, i32
  }
  func.func @transform_8(%arg0: i32) -> (i32, i32) {
    %c0_i32 = arith.constant 0 : i32
    %c0_i32_0 = arith.constant 0 : i32
    %c0_i32_1 = arith.constant 0 : i32
    return %c0_i32, %c0_i32_0 : i32, i32
  }
  func.func @transform_9(%arg0: i32) -> (i32, i32) {
    %c0_i32 = arith.constant 0 : i32
    %c0_i32_0 = arith.constant 0 : i32
    %c0_i32_1 = arith.constant 0 : i32
    return %c0_i32, %c0_i32_0 : i32, i32
  }
  func.func @transform_10(%arg0: i32) -> (i32, i32) {
    %c0_i32 = arith.constant 0 : i32
    %c0_i32_0 = arith.constant 0 : i32
    %c0_i32_1 = arith.constant 0 : i32
    return %c0_i32, %c0_i32_0 : i32, i32
  }
  func.func @transform_11(%arg0: i32) -> (i32, i32) {
    %c0_i32 = arith.constant 0 : i32
    %c0_i32_0 = arith.constant 0 : i32
    %c0_i32_1 = arith.constant 0 : i32
    return %c0_i32, %c0_i32_0 : i32, i32
  }
  func.func @transform_12(%arg0: i32) -> (i32, i32) {
    %c0_i32 = arith.constant 0 : i32
    %c0_i32_0 = arith.constant 0 : i32
    %c0_i32_1 = arith.constant 0 : i32
    return %c0_i32, %c0_i32_0 : i32, i32
  }
  func.func @transform_13(%arg0: i32) -> (i32, i32) {
    %c0_i32 = arith.constant 0 : i32
    %c0_i32_0 = arith.constant 0 : i32
    %c0_i32_1 = arith.constant 0 : i32
    return %c0_i32, %c0_i32_0 : i32, i32
  }
}

</mosaic_0001>

<llo_original>
// kernel: autoencoder_lstm_forward.1
$region0: #{autoencoder_lstm_forward.1}
  #allocation0 [shape = 'u32[]', space=smem, size = 0x4, offset = 0x4, fixed_abs, tag = 'smem constant byte address 0x4 - core index']
  #allocation1 [shape = 'u32[144,128]{1,0:T(1,128)}', space=vmem, size = 0x12000, scoped, tag = 'internal scratch']
  #allocation2 [shape = 'f32[64,128]{1,0:T(8,128)}', space=vmem, size = 0x8000, scoped, tag = 'scratch operand']
  #allocation3 [shape = 'f32[64,32]{1,0:T(8,128)}', space=vmem, size = 0x8000, scoped, tag = 'scratch operand']
  %s0 = inlined_call_operand.vmem [shape: f32[2,64], index: 0, kind: input, shape index: {}]
  %s1 = inlined_call_operand.vmem [shape: bf16[32,128], index: 1, kind: input, shape index: {}]
  %s2 = inlined_call_operand.hbm [shape: bf16[32,128], index: 2, kind: input, shape index: {}]
  %s3 = inlined_call_operand.hbm [shape: f32[1,128], index: 3, kind: input, shape index: {}]
  %s4 = inlined_call_operand.vmem [shape: bf16[32,128], index: 4, kind: input, shape index: {}]
  %s5 = inlined_call_operand.hbm [shape: bf16[32,128], index: 5, kind: input, shape index: {}]
  %s6 = inlined_call_operand.hbm [shape: f32[1,128], index: 6, kind: input, shape index: {}]
  %s7 = inlined_call_operand.hbm [shape: bf16[32,128], index: 7, kind: input, shape index: {}]
  %s8 = inlined_call_operand.vmem [shape: bf16[32,128], index: 8, kind: input, shape index: {}]
  %s9 = inlined_call_operand.vmem [shape: f32[1,128], index: 9, kind: input, shape index: {}]
  %s10 = inlined_call_operand.hbm [shape: bf16[32,128], index: 10, kind: input, shape index: {}]
  %s11 = inlined_call_operand.hbm [shape: bf16[32,128], index: 11, kind: input, shape index: {}]
  %s12 = inlined_call_operand.vmem [shape: f32[1,128], index: 12, kind: input, shape index: {}]
  %s13 = inlined_call_operand.vmem [shape: f32[2,64], index: 13, kind: output, shape index: {}]
  %s14 = sld [smem:[#allocation0]]
  $region90: #{autoencoder_lstm_forward.1} parent=0
    _
  %s16 = ssub.s32 1, %s14
  %s17 = scalar_select 0, %s16, %s14
  $region1: #{autoencoder_lstm_forward.1} parent=0
    #allocation4 [shape = 'u8[8192]{0}', space=vmem, size = 0x2000, scoped, tag = 'input window, operand 2, single buffered']
    #allocation5 [shape = 's32[1]{0}', space=sflag, size = 0x4, scoped, tag = 'scoped memory for autoencoder_lstm_forward.1']
    #allocation6 [shape = 'u8[512]{0}', space=vmem, size = 0x400, scoped, tag = 'input window, operand 3, single buffered']
    #allocation7 [shape = 's32[1]{0}', space=sflag, size = 0x4, scoped, tag = 'scoped memory for autoencoder_lstm_forward.1']
    #allocation8 [shape = 'u8[8192]{0}', space=vmem, size = 0x2000, scoped, tag = 'input window, operand 5, single buffered']
    #allocation9 [shape = 'u8[512]{0}', space=vmem, size = 0x400, scoped, tag = 'input window, operand 6, single buffered']
    #allocation10 [shape = 's32[1]{0}', space=sflag, size = 0x4, scoped, tag = 'scoped memory for autoencoder_lstm_forward.1']
    #allocation11 [shape = 'u8[8192]{0}', space=vmem, size = 0x2000, scoped, tag = 'input window, operand 7, single buffered']
    #allocation12 [shape = 'u8[8192]{0}', space=vmem, size = 0x2000, scoped, tag = 'input window, operand 10, single buffered']
    #allocation13 [shape = 's32[1]{0}', space=sflag, size = 0x4, scoped, tag = 'scoped memory for autoencoder_lstm_forward.1']
    #allocation14 [shape = 'u8[8192]{0}', space=vmem, size = 0x2000, scoped, tag = 'input window, operand 11, single buffered']
    %18 = vsyncpa [#allocation5], 0
    %19 = vsyncpa [#allocation7], 0
    %20 = vsyncpa [#allocation10], 0
    %21 = vsyncpa [#allocation13], 0
    // Predicated region
    $region2: #{autoencoder_lstm_forward.1} parent=1 // pred_check
      _
    $region3: #{autoencoder_lstm_forward.1} parent=1 // pred_check_branch
      %23 = sbr.rel (0) target = $region5
    $region4: #{autoencoder_lstm_forward.1} parent=1 // pred_region
      _
    $region5: #{autoencoder_lstm_forward.1} parent=1 // pred_fallthru
      _
    // Predicated region
    $region6: #{autoencoder_lstm_forward.1} parent=1 // pred_check
      _
    $region7: #{autoencoder_lstm_forward.1} parent=1 // pred_check_branch
      %25 = sbr.rel (0) target = $region9
    $region8: #{autoencoder_lstm_forward.1} parent=1 // pred_region
      _
    $region9: #{autoencoder_lstm_forward.1} parent=1 // pred_fallthru
      _
    // Predicated region
    $region10: #{autoencoder_lstm_forward.1} parent=1 // pred_check
      _
    $region11: #{autoencoder_lstm_forward.1} parent=1 // pred_check_branch
      %27 = sbr.rel (0) target = $region13
    $region12: #{autoencoder_lstm_forward.1} parent=1 // pred_region
      %s29 = ssub.s32 256, 256
      %30 = vsyncadd [#allocation5], %s29
      %s31 = sshll.u32 [#allocation4], 4
      %s32 = int_to_ptr.vmem [resolvable:$true] %s31
      %37 = dma.hbm_to_vmem [thread:$0]  %s2, 256, %s32, [#allocation5], 64, 64, 4
    $region13: #{autoencoder_lstm_forward.1} parent=1 // pred_fallthru
      _
    // Predicated region
    $region14: #{autoencoder_lstm_forward.1} parent=1 // pred_check
      _
    $region15: #{autoencoder_lstm_forward.1} parent=1 // pred_check_branch
      %39 = sbr.rel (0) target = $region17
    $region16: #{autoencoder_lstm_forward.1} parent=1 // pred_region
      %s41 = ssub.s32 16, 16
      %42 = vsyncadd [#allocation7], %s41
      %s44 = sshll.u32 [#allocation6], 4
      %s45 = int_to_ptr.vmem [resolvable:$true] %s44
      %47 = dma.hbm_to_vmem [thread:$0]  %s3, 16, %s45, [#allocation7]
    $region17: #{autoencoder_lstm_forward.1} parent=1 // pred_fallthru
      _
    // Predicated region
    $region18: #{autoencoder_lstm_forward.1} parent=1 // pred_check
      _
    $region19: #{autoencoder_lstm_forward.1} parent=1 // pred_check_branch
      %49 = sbr.rel (0) target = $region21
    $region20: #{autoencoder_lstm_forward.1} parent=1 // pred_region
      _
    $region21: #{autoencoder_lstm_forward.1} parent=1 // pred_fallthru
      _
    // Predicated region
    $region22: #{autoencoder_lstm_forward.1} parent=1 // pred_check
      _
    $region23: #{autoencoder_lstm_forward.1} parent=1 // pred_check_branch
      %51 = sbr.rel (0) target = $region25
    $region24: #{autoencoder_lstm_forward.1} parent=1 // pred_region
      %s53 = ssub.s32 256, 256
      %54 = vsyncadd [#allocation7], %s53
      %s55 = sshll.u32 [#allocation8], 4
      %s56 = int_to_ptr.vmem [resolvable:$true] %s55
      %61 = dma.hbm_to_vmem [thread:$0]  %s5, 256, %s56, [#allocation7], 64, 64, 4
    $region25: #{autoencoder_lstm_forward.1} parent=1 // pred_fallthru
      _
    // Predicated region
    $region26: #{autoencoder_lstm_forward.1} parent=1 // pred_check
      _
    $region27: #{autoencoder_lstm_forward.1} parent=1 // pred_check_branch
      %63 = sbr.rel (0) target = $region29
    $region28: #{autoencoder_lstm_forward.1} parent=1 // pred_region
      %s65 = ssub.s32 16, 16
      %66 = vsyncadd [#allocation10], %s65
      %s68 = sshll.u32 [#allocation9], 4
      %s69 = int_to_ptr.vmem [resolvable:$true] %s68
      %71 = dma.hbm_to_vmem [thread:$0]  %s6, 16, %s69, [#allocation10]
    $region29: #{autoencoder_lstm_forward.1} parent=1 // pred_fallthru
      _
    // Predicated region
    $region30: #{autoencoder_lstm_forward.1} parent=1 // pred_check
      _
    $region31: #{autoencoder_lstm_forward.1} parent=1 // pred_check_branch
      %73 = sbr.rel (0) target = $region33
    $region32: #{autoencoder_lstm_forward.1} parent=1 // pred_region
      %s75 = ssub.s32 256, 256
      %76 = vsyncadd [#allocation10], %s75
      %s77 = sshll.u32 [#allocation11], 4
      %s78 = int_to_ptr.vmem [resolvable:$true] %s77
      %83 = dma.hbm_to_vmem [thread:$0]  %s7, 256, %s78, [#allocation10], 64, 64, 4
    $region33: #{autoencoder_lstm_forward.1} parent=1 // pred_fallthru
      _
    // Predicated region
    $region34: #{autoencoder_lstm_forward.1} parent=1 // pred_check
      _
    $region35: #{autoencoder_lstm_forward.1} parent=1 // pred_check_branch
      %85 = sbr.rel (0) target = $region37
    $region36: #{autoencoder_lstm_forward.1} parent=1 // pred_region
      _
    $region37: #{autoencoder_lstm_forward.1} parent=1 // pred_fallthru
      _
    // Predicated region
    $region38: #{autoencoder_lstm_forward.1} parent=1 // pred_check
      _
    $region39: #{autoencoder_lstm_forward.1} parent=1 // pred_check_branch
      %87 = sbr.rel (0) target = $region41
    $region40: #{autoencoder_lstm_forward.1} parent=1 // pred_region
      _
    $region41: #{autoencoder_lstm_forward.1} parent=1 // pred_fallthru
      _
    // Predicated region
    $region42: #{autoencoder_lstm_forward.1} parent=1 // pred_check
      _
    $region43: #{autoencoder_lstm_forward.1} parent=1 // pred_check_branch
      %89 = sbr.rel (0) target = $region45
    $region44: #{autoencoder_lstm_forward.1} parent=1 // pred_region
      %s91 = ssub.s32 256, 256
      %92 = vsyncadd [#allocation13], %s91
      %s93 = sshll.u32 [#allocation12], 4
      %s94 = int_to_ptr.vmem [resolvable:$true] %s93
      %99 = dma.hbm_to_vmem [thread:$0]  %s10, 256, %s94, [#allocation13], 64, 64, 4
    $region45: #{autoencoder_lstm_forward.1} parent=1 // pred_fallthru
      _
    // Predicated region
    $region46: #{autoencoder_lstm_forward.1} parent=1 // pred_check
      _
    $region47: #{autoencoder_lstm_forward.1} parent=1 // pred_check_branch
      %101 = sbr.rel (0) target = $region49
    $region48: #{autoencoder_lstm_forward.1} parent=1 // pred_region
      %s103 = ssub.s32 256, 256
      %104 = vsyncadd [#allocation13], %s103
      %s105 = sshll.u32 [#allocation14], 4
      %s106 = int_to_ptr.vmem [resolvable:$true] %s105
      %111 = dma.hbm_to_vmem [thread:$0]  %s11, 256, %s106, [#allocation13], 64, 64, 4
    $region49: #{autoencoder_lstm_forward.1} parent=1 // pred_fallthru
      _
    // Predicated region
    $region50: #{autoencoder_lstm_forward.1} parent=1 // pred_check
      _
    $region51: #{autoencoder_lstm_forward.1} parent=1 // pred_check_branch
      %113 = sbr.rel (0) target = $region53
    $region52: #{autoencoder_lstm_forward.1} parent=1 // pred_region
      _
    $region53: #{autoencoder_lstm_forward.1} parent=1 // pred_fallthru
      _
    // Predicated region
    $region54: #{autoencoder_lstm_forward.1} parent=1 // pred_check
      _
    $region55: #{autoencoder_lstm_forward.1} parent=1 // pred_check_branch
      %115 = sbr.rel (0) target = $region57
    $region56: #{autoencoder_lstm_forward.1} parent=1 // pred_region
      %116 = dma.done [#allocation5], 256
    $region57: #{autoencoder_lstm_forward.1} parent=1 // pred_fallthru
      _
    // Predicated region
    $region58: #{autoencoder_lstm_forward.1} parent=1 // pred_check
      _
    $region59: #{autoencoder_lstm_forward.1} parent=1 // pred_check_branch
      %118 = sbr.rel (0) target = $region61
    $region60: #{autoencoder_lstm_forward.1} parent=1 // pred_region
      %119 = dma.done [#allocation7], 16
    $region61: #{autoencoder_lstm_forward.1} parent=1 // pred_fallthru
      _
    // Predicated region
    $region62: #{autoencoder_lstm_forward.1} parent=1 // pred_check
      _
    $region63: #{autoencoder_lstm_forward.1} parent=1 // pred_check_branch
      %121 = sbr.rel (0) target = $region65
    $region64: #{autoencoder_lstm_forward.1} parent=1 // pred_region
      %122 = dma.done [#allocation7], 256
    $region65: #{autoencoder_lstm_forward.1} parent=1 // pred_fallthru
      _
    // Predicated region
    $region66: #{autoencoder_lstm_forward.1} parent=1 // pred_check
      _
    $region67: #{autoencoder_lstm_forward.1} parent=1 // pred_check_branch
      %124 = sbr.rel (0) target = $region69
    $region68: #{autoencoder_lstm_forward.1} parent=1 // pred_region
      %125 = dma.done [#allocation10], 16
    $region69: #{autoencoder_lstm_forward.1} parent=1 // pred_fallthru
      _
    // Predicated region
    $region70: #{autoencoder_lstm_forward.1} parent=1 // pred_check
      _
    $region71: #{autoencoder_lstm_forward.1} parent=1 // pred_check_branch
      %127 = sbr.rel (0) target = $region73
    $region72: #{autoencoder_lstm_forward.1} parent=1 // pred_region
      %128 = dma.done [#allocation10], 256
    $region73: #{autoencoder_lstm_forward.1} parent=1 // pred_fallthru
      _
    // Predicated region
    $region74: #{autoencoder_lstm_forward.1} parent=1 // pred_check
      _
    $region75: #{autoencoder_lstm_forward.1} parent=1 // pred_check_branch
      %130 = sbr.rel (0) target = $region77
    $region76: #{autoencoder_lstm_forward.1} parent=1 // pred_region
      %131 = dma.done [#allocation13], 256
    $region77: #{autoencoder_lstm_forward.1} parent=1 // pred_fallthru
      _
    // Predicated region
    $region78: #{autoencoder_lstm_forward.1} parent=1 // pred_check
      _
    $region79: #{autoencoder_lstm_forward.1} parent=1 // pred_check_branch
      %133 = sbr.rel (0) target = $region81
    $region80: #{autoencoder_lstm_forward.1} parent=1 // pred_region
      %134 = dma.done [#allocation13], 256
    $region81: #{autoencoder_lstm_forward.1} parent=1 // pred_fallthru
      _
    %vm136 = vcmask 261120
    %137 = vst.msk [vmem:[#allocation3] sm:$0xff] %vm136, 0.0
    %138 = vst.msk [vmem:[#allocation3 + $0x8] sm:$0xff] %vm136, 0.0
    %139 = vst.msk [vmem:[#allocation3 + $0x10] sm:$0xff] %vm136, 0.0
    %140 = vst.msk [vmem:[#allocation3 + $0x18] sm:$0xff] %vm136, 0.0
    %141 = vst.msk [vmem:[#allocation3 + $0x20] sm:$0xff] %vm136, 0.0
    %142 = vst.msk [vmem:[#allocation3 + $0x28] sm:$0xff] %vm136, 0.0
    %143 = vst.msk [vmem:[#allocation3 + $0x30] sm:$0xff] %vm136, 0.0
    %144 = vst.msk [vmem:[#allocation3 + $0x38] sm:$0xff] %vm136, 0.0
    %v145 = vld [vmem:[%s0] sm:$0x3]
    %vm146 = vcmask 58368
    %147 = vst.msk [vmem:[#allocation3] sm:$0x3] %vm146, %v145
    %v148 = vld [vmem:[%s0] sm:$0x3]
    %150 = vrot.lane.b32.xlu0 %v148, 120
    %v151 = vpop.permute.xlu0 %150
    %153 = vst.msk [vmem:[#allocation3 + $0x8] sm:$0x3] %vm146, %v151
    %v154 = vld [vmem:[%s0] sm:$0x3]
    %156 = vrot.lane.b32.xlu0 %v154, 112
    %v157 = vpop.permute.xlu0 %156
    %159 = vst.msk [vmem:[#allocation3 + $0x10] sm:$0x3] %vm146, %v157
    %v160 = vld [vmem:[%s0] sm:$0x3]
    %162 = vrot.lane.b32.xlu0 %v160, 104
    %v163 = vpop.permute.xlu0 %162
    %165 = vst.msk [vmem:[#allocation3 + $0x18] sm:$0x3] %vm146, %v163
    %v166 = vld [vmem:[%s0] sm:$0x3]
    %168 = vrot.lane.b32.xlu0 %v166, 96
    %v169 = vpop.permute.xlu0 %168
    %171 = vst.msk [vmem:[#allocation3 + $0x20] sm:$0x3] %vm146, %v169
    %v172 = vld [vmem:[%s0] sm:$0x3]
    %174 = vrot.lane.b32.xlu0 %v172, 88
    %v175 = vpop.permute.xlu0 %174
    %177 = vst.msk [vmem:[#allocation3 + $0x28] sm:$0x3] %vm146, %v175
    %v178 = vld [vmem:[%s0] sm:$0x3]
    %180 = vrot.lane.b32.xlu0 %v178, 80
    %v181 = vpop.permute.xlu0 %180
    %183 = vst.msk [vmem:[#allocation3 + $0x30] sm:$0x3] %vm146, %v181
    %v184 = vld [vmem:[%s0] sm:$0x3]
    %186 = vrot.lane.b32.xlu0 %v184, 72
    %v187 = vpop.permute.xlu0 %186
    %189 = vst.msk [vmem:[#allocation3 + $0x38] sm:$0x3] %vm146, %v187
    %v190 = vld [vmem:[#allocation3] sm:$0xff]
    %v191 = vld [vmem:[#allocation3 + $0x8] sm:$0xff]
    %v192 = vld [vmem:[#allocation3 + $0x10] sm:$0xff]
    %v193 = vld [vmem:[#allocation3 + $0x18] sm:$0xff]
    %v194 = vld [vmem:[#allocation3 + $0x20] sm:$0xff]
    %v195 = vld [vmem:[#allocation3 + $0x28] sm:$0xff]
    %v196 = vld [vmem:[#allocation3 + $0x30] sm:$0xff]
    %v197 = vld [vmem:[#allocation3 + $0x38] sm:$0xff]
    %v198 = vpack.c.bf16 %v191, %v190
    %v199 = vpack.c.bf16 %v193, %v192
    %v200 = vpack.c.bf16 %v195, %v194
    %v201 = vpack.c.bf16 %v197, %v196
    %v202 = vld [vmem:[%s1] sm:$0xf]
    %v203 = vld [vmem:[%s1 + $0x4] sm:$0xf]
    %v204 = vld [vmem:[%s1 + $0x8] sm:$0xf]
    %v205 = vld [vmem:[%s1 + $0xc] sm:$0xf]
    %v206 = vld [vmem:[#allocation6] sm:$0x1]
    %v208 = vlaneseq
    %v209 = vshrl.u32 %v208, 7
    %v210 = vsub.s32 0, %v209
    %v211 = vrot.slane %v206, %v210
    %v217 = vunpack.c.l.b16 %v202
    %v218 = vunpack.c.l.b16 %v203
    %v219 = vunpack.c.l.b16 %v204
    %v220 = vunpack.c.l.b16 %v205
    %v221 = vpack.c.b16 %v218, %v217
    %v222 = vpack.c.b16 %v220, %v219
    %v226 = vsel %vm136, %v198, 0
    %v229 = vsel %vm136, %v199, 0
    %v232 = vsel %vm136, %v200, 0
    %v235 = vsel %vm136, %v201, 0
    %237 = vmatprep.subr.bf16.mxu0 0
    %238 = vmatpush1.bf16.msra.mxu0 %v221
    %239 = vmatprep.subr.bf16.mxu0 0
    %240 = vmatpush1.bf16.msra.mxu0 %v222
    %241 = vmatprep.subr.bf16.mxu0 0
    %242 = vmatpush1.bf16.msra.mxu0 0
    %243 = vmatprep.subr.bf16.mxu0 0
    %244 = vmatpush1.bf16.msra.mxu0 0
    %245 = vmatprep.subr.bf16.mxu0 0
    %246 = vmatpush1.bf16.msra.mxu0 0
    %247 = vmatprep.subr.bf16.mxu0 0
    %248 = vmatpush1.bf16.msra.mxu0 0
    %249 = vmatprep.subr.bf16.mxu0 0
    %250 = vmatpush1.bf16.msra.mxu0 0
    %251 = vmatprep.subr.bf16.mxu0 0
    %252 = vmatpush1.bf16.msra.mxu0 0
    %253 = vmatprep.subr.bf16.mxu0 0
    %254 = vmatpush1.bf16.msra.mxu0 0
    %255 = vmatprep.subr.bf16.mxu0 0
    %256 = vmatpush1.bf16.msra.mxu0 0
    %257 = vmatprep.subr.bf16.mxu0 0
    %258 = vmatpush1.bf16.msra.mxu0 0
    %259 = vmatprep.subr.bf16.mxu0 0
    %260 = vmatpush1.bf16.msra.mxu0 0
    %261 = vmatprep.subr.bf16.mxu0 0
    %262 = vmatpush1.bf16.msra.mxu0 0
    %263 = vmatprep.subr.bf16.mxu0 0
    %264 = vmatpush1.bf16.msra.mxu0 0
    %265 = vmatprep.subr.bf16.mxu0 0
    %266 = vmatpush1.bf16.msra.mxu0 0
    %267 = vmatprep.subr.bf16.mxu0 0
    %268 = vmatpush1.bf16.msra.mxu0 0
    %269 = vmatprep.mubr.bf16.mxu0 0
    %270 = vmatmul.mubr.bf16.gmra.mrb[0].mxu0 %v226
    %v271 = vpop.f32.mrb[0].mxu0
    %v272 = vadd.f32 %v211, %v271
    %v273 = vpop.f32.mrb[0].mxu0
    %v274 = vpop.f32.mrb[0].mxu0
    %v275 = vadd.f32 %v211, %v274
    %v276 = vpop.f32.mrb[0].mxu0
    %277 = vmatprep.mubr.bf16.mxu0 0
    %278 = vmatmul.mubr.bf16.gmra.mrb[0].mxu0 %v229
    %v279 = vpop.f32.mrb[0].mxu0
    %v280 = vadd.f32 %v211, %v279
    %v281 = vpop.f32.mrb[0].mxu0
    %v282 = vpop.f32.mrb[0].mxu0
    %v283 = vadd.f32 %v211, %v282
    %v284 = vpop.f32.mrb[0].mxu0
    %285 = vmatprep.mubr.bf16.mxu0 0
    %286 = vmatmul.mubr.bf16.gmra.mrb[0].mxu0 %v232
    %v287 = vpop.f32.mrb[0].mxu0
    %v288 = vadd.f32 %v211, %v287
    %v289 = vpop.f32.mrb[0].mxu0
    %v290 = vpop.f32.mrb[0].mxu0
    %v291 = vadd.f32 %v211, %v290
    %v292 = vpop.f32.mrb[0].mxu0
    %293 = vmatprep.mubr.bf16.mxu0 0
    %294 = vmatmul.mubr.bf16.gmra.mrb[0].mxu0 %v235
    %v295 = vpop.f32.mrb[0].mxu0
    %v296 = vadd.f32 %v211, %v295
    %v297 = vpop.f32.mrb[0].mxu0
    %v298 = vpop.f32.mrb[0].mxu0
    %v299 = vadd.f32 %v211, %v298
    %v300 = vpop.f32.mrb[0].mxu0
    %301 = vdwg.mxu0
    %302 = vst [vmem:[#allocation2] sm:$0xff] %v272
    %303 = vst [vmem:[#allocation2 + $0x8] sm:$0xff] %v275
    %304 = vst [vmem:[#allocation2 + $0x10] sm:$0xff] %v280
    %305 = vst [vmem:[#allocation2 + $0x18] sm:$0xff] %v283
    %306 = vst [vmem:[#allocation2 + $0x20] sm:$0xff] %v288
    %307 = vst [vmem:[#allocation2 + $0x28] sm:$0xff] %v291
    %308 = vst [vmem:[#allocation2 + $0x30] sm:$0xff] %v296
    %309 = vst [vmem:[#allocation2 + $0x38] sm:$0xff] %v299
    %v310 = vld [vmem:[#allocation2] sm:$0xff]
    %v311 = vld [vmem:[#allocation4] sm:$0xf]
    %v312 = vld [vmem:[#allocation4 + $0x4] sm:$0xf]
    %v313 = vld [vmem:[#allocation4 + $0x8] sm:$0xf]
    %v314 = vld [vmem:[#allocation4 + $0xc] sm:$0xf]
    %v319 = vunpack.c.l.b16 %v311
    %v320 = vunpack.c.l.b16 %v312
    %v321 = vunpack.c.l.b16 %v313
    %v322 = vunpack.c.l.b16 %v314
    %v323 = vpack.c.b16 %v320, %v319
    %v324 = vpack.c.b16 %v322, %v321
    %v328 = vsel %vm136, 0, 0
    %330 = vmatprep.subr.bf16.mxu0 0
    %331 = vmatpush1.bf16.msra.mxu0 %v323
    %332 = vmatprep.subr.bf16.mxu0 0
    %333 = vmatpush1.bf16.msra.mxu0 %v324
    %334 = vmatprep.subr.bf16.mxu0 0
    %335 = vmatpush1.bf16.msra.mxu0 0
    %336 = vmatprep.subr.bf16.mxu0 0
    %337 = vmatpush1.bf16.msra.mxu0 0
    %338 = vmatprep.subr.bf16.mxu0 0
    %339 = vmatpush1.bf16.msra.mxu0 0
    %340 = vmatprep.subr.bf16.mxu0 0
    %341 = vmatpush1.bf16.msra.mxu0 0
    %342 = vmatprep.subr.bf16.mxu0 0
    %343 = vmatpush1.bf16.msra.mxu0 0
    %344 = vmatprep.subr.bf16.mxu0 0
    %345 = vmatpush1.bf16.msra.mxu0 0
    %346 = vmatprep.subr.bf16.mxu0 0
    %347 = vmatpush1.bf16.msra.mxu0 0
    %348 = vmatprep.subr.bf16.mxu0 0
    %349 = vmatpush1.bf16.msra.mxu0 0
    %350 = vmatprep.subr.bf16.mxu0 0
    %351 = vmatpush1.bf16.msra.mxu0 0
    %352 = vmatprep.subr.bf16.mxu0 0
    %353 = vmatpush1.bf16.msra.mxu0 0
    %354 = vmatprep.subr.bf16.mxu0 0
    %355 = vmatpush1.bf16.msra.mxu0 0
    %356 = vmatprep.subr.bf16.mxu0 0
    %357 = vmatpush1.bf16.msra.mxu0 0
    %358 = vmatprep.subr.bf16.mxu0 0
    %359 = vmatpush1.bf16.msra.mxu0 0
    %360 = vmatprep.subr.bf16.mxu0 0
    %361 = vmatpush1.bf16.msra.mxu0 0
    %362 = vmatprep.mubr.bf16.mxu0 0
    %363 = vmatmul.mubr.bf16.gmra.mrb[0].mxu0 %v328
    %v364 = vpop.f32.mrb[0].mxu0
    %v365 = vadd.f32 0.0, %v364
    %v366 = vpop.f32.mrb[0].mxu0
    %v367 = vpop.f32.mrb[0].mxu0
    %v368 = vpop.f32.mrb[0].mxu0
    %369 = vdwg.mxu0
    %v370 = vadd.f32 %v310, %v365
    %v371 = vmul.f32 %v370, 0.5
    %v372 = vtanh.pop %v371
    %v373 = vmul.f32 %v372, 0.5
    %v374 = vadd.f32 %v373, 0.5
    %v375 = vtanh.pop %v370
    %v376 = vmul.f32 %v374, 0.0
    %378 = vrot.lane.b32.xlu0 %v375, 64
    %v379 = vpop.permute.xlu0 %378
    %v381 = vmul.f32 %v374, %v379
    %383 = vrot.lane.b32.xlu0 %v381, 32
    %v384 = vpop.permute.xlu0 %383
    %v386 = vadd.f32 %v376, %v384
    %v387 = vtanh.pop %v386
    %389 = vrot.lane.b32.xlu0 %v387, 64
    %v390 = vpop.permute.xlu0 %389
    %v392 = vmul.f32 %v374, %v390
    %394 = vrot.lane.b32.xlu0 %v392, 32
    %v395 = vpop.permute.xlu0 %394
    %397 = vst.msk [vmem:[#allocation3] sm:$0xff] %vm136, %v395
    %v398 = vld [vmem:[#allocation2 + $0x8] sm:$0xff]
    %v399 = vpack.c.bf16 %v392, %v392
    %v400 = vld [vmem:[#allocation4] sm:$0xf]
    %v401 = vld [vmem:[#allocation4 + $0x4] sm:$0xf]
    %v402 = vld [vmem:[#allocation4 + $0x8] sm:$0xf]
    %v403 = vld [vmem:[#allocation4 + $0xc] sm:$0xf]
    %405 = vrot.lane.b32.xlu0 %v399, 32
    %v406 = vpop.permute.xlu0 %405
    %v411 = vunpack.c.l.b16 %v400
    %v412 = vunpack.c.l.b16 %v401
    %v413 = vunpack.c.l.b16 %v402
    %v414 = vunpack.c.l.b16 %v403
    %v415 = vpack.c.b16 %v412, %v411
    %v416 = vpack.c.b16 %v414, %v413
    %v420 = vsel %vm136, %v406, 0
    %422 = vmatprep.subr.bf16.mxu0 0
    %423 = vmatpush1.bf16.msra.mxu0 %v415
    %424 = vmatprep.subr.bf16.mxu0 0
    %425 = vmatpush1.bf16.msra.mxu0 %v416
    %426 = vmatprep.subr.bf16.mxu0 0
    %427 = vmatpush1.bf16.msra.mxu0 0
    %428 = vmatprep.subr.bf16.mxu0 0
    %429 = vmatpush1.bf16.msra.mxu0 0
    %430 = vmatprep.subr.bf16.mxu0 0
    %431 = vmatpush1.bf16.msra.mxu0 0
    %432 = vmatprep.subr.bf16.mxu0 0
    %433 = vmatpush1.bf16.msra.mxu0 0
    %434 = vmatprep.subr.bf16.mxu0 0
    %435 = vmatpush1.bf16.msra.mxu0 0
    %436 = vmatprep.subr.bf16.mxu0 0
    %437 = vmatpush1.bf16.msra.mxu0 0
    %438 = vmatprep.subr.bf16.mxu0 0
    %439 = vmatpush1.bf16.msra.mxu0 0
    %440 = vmatprep.subr.bf16.mxu0 0
    %441 = vmatpush1.bf16.msra.mxu0 0
    %442 = vmatprep.subr.bf16.mxu0 0
    %443 = vmatpush1.bf16.msra.mxu0 0
    %444 = vmatprep.subr.bf16.mxu0 0
    %445 = vmatpush1.bf16.msra.mxu0 0
    %446 = vmatprep.subr.bf16.mxu0 0
    %447 = vmatpush1.bf16.msra.mxu0 0
    %448 = vmatprep.subr.bf16.mxu0 0
    %449 = vmatpush1.bf16.msra.mxu0 0
    %450 = vmatprep.subr.bf16.mxu0 0
    %451 = vmatpush1.bf16.msra.mxu0 0
    %452 = vmatprep.subr.bf16.mxu0 0
    %453 = vmatpush1.bf16.msra.mxu0 0
    %454 = vmatprep.mubr.bf16.mxu0 0
    %455 = vmatmul.mubr.bf16.gmra.mrb[0].mxu0 %v420
    %v456 = vpop.f32.mrb[0].mxu0
    %v457 = vadd.f32 0.0, %v456
    %v458 = vpop.f32.mrb[0].mxu0
    %v459 = vpop.f32.mrb[0].mxu0
    %v460 = vpop.f32.mrb[0].mxu0
    %461 = vdwg.mxu0
    %v462 = vadd.f32 %v398, %v457
    %v463 = vmul.f32 %v462, 0.5
    %v464 = vtanh.pop %v463
    %v465 = vmul.f32 %v464, 0.5
    %v466 = vadd.f32 %v465, 0.5
    %v467 = vtanh.pop %v462
    %v468 = vmul.f32 %v466, %v386
    %470 = vrot.lane.b32.xlu0 %v467, 64
    %v471 = vpop.permute.xlu0 %470
    %v473 = vmul.f32 %v466, %v471
    %475 = vrot.lane.b32.xlu0 %v473, 32
    %v476 = vpop.permute.xlu0 %475
    %v478 = vadd.f32 %v468, %v476
    %v479 = vtanh.pop %v478
    %481 = vrot.lane.b32.xlu0 %v479, 64
    %v482 = vpop.permute.xlu0 %481
    %v484 = vmul.f32 %v466, %v482
    %486 = vrot.lane.b32.xlu0 %v484, 32
    %v487 = vpop.permute.xlu0 %486
    %489 = vst.msk [vmem:[#allocation3 + $0x8] sm:$0xff] %vm136, %v487
    %v490 = vld [vmem:[#allocation2 + $0x10] sm:$0xff]
    %v491 = vpack.c.bf16 %v484, %v484
    %v492 = vld [vmem:[#allocation4] sm:$0xf]
    %v493 = vld [vmem:[#allocation4 + $0x4] sm:$0xf]
    %v494 = vld [vmem:[#allocation4 + $0x8] sm:$0xf]
    %v495 = vld [vmem:[#allocation4 + $0xc] sm:$0xf]
    %497 = vrot.lane.b32.xlu0 %v491, 32
    %v498 = vpop.permute.xlu0 %497
    %v503 = vunpack.c.l.b16 %v492
    %v504 = vunpack.c.l.b16 %v493
    %v505 = vunpack.c.l.b16 %v494
    %v506 = vunpack.c.l.b16 %v495
    %v507 = vpack.c.b16 %v504, %v503
    %v508 = vpack.c.b16 %v506, %v505
    %v512 = vsel %vm136, %v498, 0
    %514 = vmatprep.subr.bf16.mxu0 0
    %515 = vmatpush1.bf16.msra.mxu0 %v507
    %516 = vmatprep.subr.bf16.mxu0 0
    %517 = vmatpush1.bf16.msra.mxu0 %v508
    %518 = vmatprep.subr.bf16.mxu0 0
    %519 = vmatpush1.bf16.msra.mxu0 0
    %520 = vmatprep.subr.bf16.mxu0 0
    %521 = vmatpush1.bf16.msra.mxu0 0
    %522 = vmatprep.subr.bf16.mxu0 0
    %523 = vmatpush1.bf16.msra.mxu0 0
    %524 = vmatprep.subr.bf16.mxu0 0
    %525 = vmatpush1.bf16.msra.mxu0 0
    %526 = vmatprep.subr.bf16.mxu0 0
    %527 = vmatpush1.bf16.msra.mxu0 0
    %528 = vmatprep.subr.bf16.mxu0 0
    %529 = vmatpush1.bf16.msra.mxu0 0
    %530 = vmatprep.subr.bf16.mxu0 0
    %531 = vmatpush1.bf16.msra.mxu0 0
    %532 = vmatprep.subr.bf16.mxu0 0
    %533 = vmatpush1.bf16.msra.mxu0 0
    %534 = vmatprep.subr.bf16.mxu0 0
    %535 = vmatpush1.bf16.msra.mxu0 0
    %536 = vmatprep.subr.bf16.mxu0 0
    %537 = vmatpush1.bf16.msra.mxu0 0
    %538 = vmatprep.subr.bf16.mxu0 0
    %539 = vmatpush1.bf16.msra.mxu0 0
    %540 = vmatprep.subr.bf16.mxu0 0
    %541 = vmatpush1.bf16.msra.mxu0 0
    %542 = vmatprep.subr.bf16.mxu0 0
    %543 = vmatpush1.bf16.msra.mxu0 0
    %544 = vmatprep.subr.bf16.mxu0 0
    %545 = vmatpush1.bf16.msra.mxu0 0
    %546 = vmatprep.mubr.bf16.mxu0 0
    %547 = vmatmul.mubr.bf16.gmra.mrb[0].mxu0 %v512
    %v548 = vpop.f32.mrb[0].mxu0
    %v549 = vadd.f32 0.0, %v548
    %v550 = vpop.f32.mrb[0].mxu0
    %v551 = vpop.f32.mrb[0].mxu0
    %v552 = vpop.f32.mrb[0].mxu0
    %553 = vdwg.mxu0
    %v554 = vadd.f32 %v490, %v549
    %v555 = vmul.f32 %v554, 0.5
    %v556 = vtanh.pop %v555
    %v557 = vmul.f32 %v556, 0.5
    %v558 = vadd.f32 %v557, 0.5
    %v559 = vtanh.pop %v554
    %v560 = vmul.f32 %v558, %v478
    %562 = vrot.lane.b32.xlu0 %v559, 64
    %v563 = vpop.permute.xlu0 %562
    %v565 = vmul.f32 %v558, %v563
    %567 = vrot.lane.b32.xlu0 %v565, 32
    %v568 = vpop.permute.xlu0 %567
    %v570 = vadd.f32 %v560, %v568
    %v571 = vtanh.pop %v570
    %573 = vrot.lane.b32.xlu0 %v571, 64
    %v574 = vpop.permute.xlu0 %573
    %v576 = vmul.f32 %v558, %v574
    %578 = vrot.lane.b32.xlu0 %v576, 32
    %v579 = vpop.permute.xlu0 %578
    %581 = vst.msk [vmem:[#allocation3 + $0x10] sm:$0xff] %vm136, %v579
    %v582 = vld [vmem:[#allocation2 + $0x18] sm:$0xff]
    %v583 = vpack.c.bf16 %v576, %v576
    %v584 = vld [vmem:[#allocation4] sm:$0xf]
    %v585 = vld [vmem:[#allocation4 + $0x4] sm:$0xf]
    %v586 = vld [vmem:[#allocation4 + $0x8] sm:$0xf]
    %v587 = vld [vmem:[#allocation4 + $0xc] sm:$0xf]
    %589 = vrot.lane.b32.xlu0 %v583, 32
    %v590 = vpop.permute.xlu0 %589
    %v595 = vunpack.c.l.b16 %v584
    %v596 = vunpack.c.l.b16 %v585
    %v597 = vunpack.c.l.b16 %v586
    %v598 = vunpack.c.l.b16 %v587
    %v599 = vpack.c.b16 %v596, %v595
    %v600 = vpack.c.b16 %v598, %v597
    %v604 = vsel %vm136, %v590, 0
    %606 = vmatprep.subr.bf16.mxu0 0
    %607 = vmatpush1.bf16.msra.mxu0 %v599
    %608 = vmatprep.subr.bf16.mxu0 0
    %609 = vmatpush1.bf16.msra.mxu0 %v600
    %610 = vmatprep.subr.bf16.mxu0 0
    %611 = vmatpush1.bf16.msra.mxu0 0
    %612 = vmatprep.subr.bf16.mxu0 0
    %613 = vmatpush1.bf16.msra.mxu0 0
    %614 = vmatprep.subr.bf16.mxu0 0
    %615 = vmatpush1.bf16.msra.mxu0 0
    %616 = vmatprep.subr.bf16.mxu0 0
    %617 = vmatpush1.bf16.msra.mxu0 0
    %618 = vmatprep.subr.bf16.mxu0 0
    %619 = vmatpush1.bf16.msra.mxu0 0
    %620 = vmatprep.subr.bf16.mxu0 0
    %621 = vmatpush1.bf16.msra.mxu0 0
    %622 = vmatprep.subr.bf16.mxu0 0
    %623 = vmatpush1.bf16.msra.mxu0 0
    %624 = vmatprep.subr.bf16.mxu0 0
    %625 = vmatpush1.bf16.msra.mxu0 0
    %626 = vmatprep.subr.bf16.mxu0 0
    %627 = vmatpush1.bf16.msra.mxu0 0
    %628 = vmatprep.subr.bf16.mxu0 0
    %629 = vmatpush1.bf16.msra.mxu0 0
    %630 = vmatprep.subr.bf16.mxu0 0
    %631 = vmatpush1.bf16.msra.mxu0 0
    %632 = vmatprep.subr.bf16.mxu0 0
    %633 = vmatpush1.bf16.msra.mxu0 0
    %634 = vmatprep.subr.bf16.mxu0 0
    %635 = vmatpush1.bf16.msra.mxu0 0
    %636 = vmatprep.subr.bf16.mxu0 0
    %637 = vmatpush1.bf16.msra.mxu0 0
    %638 = vmatprep.mubr.bf16.mxu0 0
    %639 = vmatmul.mubr.bf16.gmra.mrb[0].mxu0 %v604
    %v640 = vpop.f32.mrb[0].mxu0
    %v641 = vadd.f32 0.0, %v640
    %v642 = vpop.f32.mrb[0].mxu0
    %v643 = vpop.f32.mrb[0].mxu0
    %v644 = vpop.f32.mrb[0].mxu0
    %645 = vdwg.mxu0
    %v646 = vadd.f32 %v582, %v641
    %v647 = vmul.f32 %v646, 0.5
    %v648 = vtanh.pop %v647
    %v649 = vmul.f32 %v648, 0.5
    %v650 = vadd.f32 %v649, 0.5
    %v651 = vtanh.pop %v646
    %v652 = vmul.f32 %v650, %v570
    %654 = vrot.lane.b32.xlu0 %v651, 64
    %v655 = vpop.permute.xlu0 %654
    %v657 = vmul.f32 %v650, %v655
    %659 = vrot.lane.b32.xlu0 %v657, 32
    %v660 = vpop.permute.xlu0 %659
    %v662 = vadd.f32 %v652, %v660
    %v663 = vtanh.pop %v662
    %665 = vrot.lane.b32.xlu0 %v663, 64
    %v666 = vpop.permute.xlu0 %665
    %v668 = vmul.f32 %v650, %v666
    %670 = vrot.lane.b32.xlu0 %v668, 32
    %v671 = vpop.permute.xlu0 %670
    %673 = vst.msk [vmem:[#allocation3 + $0x18] sm:$0xff] %vm136, %v671
    %v674 = vld [vmem:[#allocation2 + $0x20] sm:$0xff]
    %v675 = vpack.c.bf16 %v668, %v668
    %v676 = vld [vmem:[#allocation4] sm:$0xf]
    %v677 = vld [vmem:[#allocation4 + $0x4] sm:$0xf]
    %v678 = vld [vmem:[#allocation4 + $0x8] sm:$0xf]
    %v679 = vld [vmem:[#allocation4 + $0xc] sm:$0xf]
    %681 = vrot.lane.b32.xlu0 %v675, 32
    %v682 = vpop.permute.xlu0 %681
    %v687 = vunpack.c.l.b16 %v676
    %v688 = vunpack.c.l.b16 %v677
    %v689 = vunpack.c.l.b16 %v678
    %v690 = vunpack.c.l.b16 %v679
    %v691 = vpack.c.b16 %v688, %v687
    %v692 = vpack.c.b16 %v690, %v689
    %v696 = vsel %vm136, %v682, 0
    %698 = vmatprep.subr.bf16.mxu0 0
    %699 = vmatpush1.bf16.msra.mxu0 %v691
    %700 = vmatprep.subr.bf16.mxu0 0
    %701 = vmatpush1.bf16.msra.mxu0 %v692
    %702 = vmatprep.subr.bf16.mxu0 0
    %703 = vmatpush1.bf16.msra.mxu0 0
    %704 = vmatprep.subr.bf16.mxu0 0
    %705 = vmatpush1.bf16.msra.mxu0 0
    %706 = vmatprep.subr.bf16.mxu0 0
    %707 = vmatpush1.bf16.msra.mxu0 0
    %708 = vmatprep.subr.bf16.mxu0 0
    %709 = vmatpush1.bf16.msra.mxu0 0
    %710 = vmatprep.subr.bf16.mxu0 0
    %711 = vmatpush1.bf16.msra.mxu0 0
    %712 = vmatprep.subr.bf16.mxu0 0
    %713 = vmatpush1.bf16.msra.mxu0 0
    %714 = vmatprep.subr.bf16.mxu0 0
    %715 = vmatpush1.bf16.msra.mxu0 0
    %716 = vmatprep.subr.bf16.mxu0 0
    %717 = vmatpush1.bf16.msra.mxu0 0
    %718 = vmatprep.subr.bf16.mxu0 0
    %719 = vmatpush1.bf16.msra.mxu0 0
    %720 = vmatprep.subr.bf16.mxu0 0
    %721 = vmatpush1.bf16.msra.mxu0 0
    %722 = vmatprep.subr.bf16.mxu0 0
    %723 = vmatpush1.bf16.msra.mxu0 0
    %724 = vmatprep.subr.bf16.mxu0 0
    %725 = vmatpush1.bf16.msra.mxu0 0
    %726 = vmatprep.subr.bf16.mxu0 0
    %727 = vmatpush1.bf16.msra.mxu0 0
    %728 = vmatprep.subr.bf16.mxu0 0
    %729 = vmatpush1.bf16.msra.mxu0 0
    %730 = vmatprep.mubr.bf16.mxu0 0
    %731 = vmatmul.mubr.bf16.gmra.mrb[0].mxu0 %v696
    %v732 = vpop.f32.mrb[0].mxu0
    %v733 = vadd.f32 0.0, %v732
    %v734 = vpop.f32.mrb[0].mxu0
    %v735 = vpop.f32.mrb[0].mxu0
    %v736 = vpop.f32.mrb[0].mxu0
    %737 = vdwg.mxu0
    %v738 = vadd.f32 %v674, %v733
    %v739 = vmul.f32 %v738, 0.5
    %v740 = vtanh.pop %v739
    %v741 = vmul.f32 %v740, 0.5
    %v742 = vadd.f32 %v741, 0.5
    %v743 = vtanh.pop %v738
    %v744 = vmul.f32 %v742, %v662
    %746 = vrot.lane.b32.xlu0 %v743, 64
    %v747 = vpop.permute.xlu0 %746
    %v749 = vmul.f32 %v742, %v747
    %751 = vrot.lane.b32.xlu0 %v749, 32
    %v752 = vpop.permute.xlu0 %751
    %v754 = vadd.f32 %v744, %v752
    %v755 = vtanh.pop %v754
    %757 = vrot.lane.b32.xlu0 %v755, 64
    %v758 = vpop.permute.xlu0 %757
    %v760 = vmul.f32 %v742, %v758
    %762 = vrot.lane.b32.xlu0 %v760, 32
    %v763 = vpop.permute.xlu0 %762
    %765 = vst.msk [vmem:[#allocation3 + $0x20] sm:$0xff] %vm136, %v763
    %v766 = vld [vmem:[#allocation2 + $0x28] sm:$0xff]
    %v767 = vpack.c.bf16 %v760, %v760
    %v768 = vld [vmem:[#allocation4] sm:$0xf]
    %v769 = vld [vmem:[#allocation4 + $0x4] sm:$0xf]
    %v770 = vld [vmem:[#allocation4 + $0x8] sm:$0xf]
    %v771 = vld [vmem:[#allocation4 + $0xc] sm:$0xf]
    %773 = vrot.lane.b32.xlu0 %v767, 32
    %v774 = vpop.permute.xlu0 %773
    %v779 = vunpack.c.l.b16 %v768
    %v780 = vunpack.c.l.b16 %v769
    %v781 = vunpack.c.l.b16 %v770
    %v782 = vunpack.c.l.b16 %v771
    %v783 = vpack.c.b16 %v780, %v779
    %v784 = vpack.c.b16 %v782, %v781
    %v788 = vsel %vm136, %v774, 0
    %790 = vmatprep.subr.bf16.mxu0 0
    %791 = vmatpush1.bf16.msra.mxu0 %v783
    %792 = vmatprep.subr.bf16.mxu0 0
    %793 = vmatpush1.bf16.msra.mxu0 %v784
    %794 = vmatprep.subr.bf16.mxu0 0
    %795 = vmatpush1.bf16.msra.mxu0 0
    %796 = vmatprep.subr.bf16.mxu0 0
    %797 = vmatpush1.bf16.msra.mxu0 0
    %798 = vmatprep.subr.bf16.mxu0 0
    %799 = vmatpush1.bf16.msra.mxu0 0
    %800 = vmatprep.subr.bf16.mxu0 0
    %801 = vmatpush1.bf16.msra.mxu0 0
    %802 = vmatprep.subr.bf16.mxu0 0
    %803 = vmatpush1.bf16.msra.mxu0 0
    %804 = vmatprep.subr.bf16.mxu0 0
    %805 = vmatpush1.bf16.msra.mxu0 0
    %806 = vmatprep.subr.bf16.mxu0 0
    %807 = vmatpush1.bf16.msra.mxu0 0
    %808 = vmatprep.subr.bf16.mxu0 0
    %809 = vmatpush1.bf16.msra.mxu0 0
    %810 = vmatprep.subr.bf16.mxu0 0
    %811 = vmatpush1.bf16.msra.mxu0 0
    %812 = vmatprep.subr.bf16.mxu0 0
    %813 = vmatpush1.bf16.msra.mxu0 0
    %814 = vmatprep.subr.bf16.mxu0 0
    %815 = vmatpush1.bf16.msra.mxu0 0
    %816 = vmatprep.subr.bf16.mxu0 0
    %817 = vmatpush1.bf16.msra.mxu0 0
    %818 = vmatprep.subr.bf16.mxu0 0
    %819 = vmatpush1.bf16.msra.mxu0 0
    %820 = vmatprep.subr.bf16.mxu0 0
    %821 = vmatpush1.bf16.msra.mxu0 0
    %822 = vmatprep.mubr.bf16.mxu0 0
    %823 = vmatmul.mubr.bf16.gmra.mrb[0].mxu0 %v788
    %v824 = vpop.f32.mrb[0].mxu0
    %v825 = vadd.f32 0.0, %v824
    %v826 = vpop.f32.mrb[0].mxu0
    %v827 = vpop.f32.mrb[0].mxu0
    %v828 = vpop.f32.mrb[0].mxu0
    %829 = vdwg.mxu0
    %v830 = vadd.f32 %v766, %v825
    %v831 = vmul.f32 %v830, 0.5
    %v832 = vtanh.pop %v831
    %v833 = vmul.f32 %v832, 0.5
    %v834 = vadd.f32 %v833, 0.5
    %v835 = vtanh.pop %v830
    %v836 = vmul.f32 %v834, %v754
    %838 = vrot.lane.b32.xlu0 %v835, 64
    %v839 = vpop.permute.xlu0 %838
    %v841 = vmul.f32 %v834, %v839
    %843 = vrot.lane.b32.xlu0 %v841, 32
    %v844 = vpop.permute.xlu0 %843
    %v846 = vadd.f32 %v836, %v844
    %v847 = vtanh.pop %v846
    %849 = vrot.lane.b32.xlu0 %v847, 64
    %v850 = vpop.permute.xlu0 %849
    %v852 = vmul.f32 %v834, %v850
    %854 = vrot.lane.b32.xlu0 %v852, 32
    %v855 = vpop.permute.xlu0 %854
    %857 = vst.msk [vmem:[#allocation3 + $0x28] sm:$0xff] %vm136, %v855
    %v858 = vld [vmem:[#allocation2 + $0x30] sm:$0xff]
    %v859 = vpack.c.bf16 %v852, %v852
    %v860 = vld [vmem:[#allocation4] sm:$0xf]
    %v861 = vld [vmem:[#allocation4 + $0x4] sm:$0xf]
    %v862 = vld [vmem:[#allocation4 + $0x8] sm:$0xf]
    %v863 = vld [vmem:[#allocation4 + $0xc] sm:$0xf]
    %865 = vrot.lane.b32.xlu0 %v859, 32
    %v866 = vpop.permute.xlu0 %865
    %v871 = vunpack.c.l.b16 %v860
    %v872 = vunpack.c.l.b16 %v861
    %v873 = vunpack.c.l.b16 %v862
    %v874 = vunpack.c.l.b16 %v863
    %v875 = vpack.c.b16 %v872, %v871
    %v876 = vpack.c.b16 %v874, %v873
    %v880 = vsel %vm136, %v866, 0
    %882 = vmatprep.subr.bf16.mxu0 0
    %883 = vmatpush1.bf16.msra.mxu0 %v875
    %884 = vmatprep.subr.bf16.mxu0 0
    %885 = vmatpush1.bf16.msra.mxu0 %v876
    %886 = vmatprep.subr.bf16.mxu0 0
    %887 = vmatpush1.bf16.msra.mxu0 0
    %888 = vmatprep.subr.bf16.mxu0 0
    %889 = vmatpush1.bf16.msra.mxu0 0
    %890 = vmatprep.subr.bf16.mxu0 0
    %891 = vmatpush1.bf16.msra.mxu0 0
    %892 = vmatprep.subr.bf16.mxu0 0
    %893 = vmatpush1.bf16.msra.mxu0 0
    %894 = vmatprep.subr.bf16.mxu0 0
    %895 = vmatpush1.bf16.msra.mxu0 0
    %896 = vmatprep.subr.bf16.mxu0 0
    %897 = vmatpush1.bf16.msra.mxu0 0
    %898 = vmatprep.subr.bf16.mxu0 0
    %899 = vmatpush1.bf16.msra.mxu0 0
    %900 = vmatprep.subr.bf16.mxu0 0
    %901 = vmatpush1.bf16.msra.mxu0 0
    %902 = vmatprep.subr.bf16.mxu0 0
    %903 = vmatpush1.bf16.msra.mxu0 0
    %904 = vmatprep.subr.bf16.mxu0 0
    %905 = vmatpush1.bf16.msra.mxu0 0
    %906 = vmatprep.subr.bf16.mxu0 0
    %907 = vmatpush1.bf16.msra.mxu0 0
    %908 = vmatprep.subr.bf16.mxu0 0
    %909 = vmatpush1.bf16.msra.mxu0 0
    %910 = vmatprep.subr.bf16.mxu0 0
    %911 = vmatpush1.bf16.msra.mxu0 0
    %912 = vmatprep.subr.bf16.mxu0 0
    %913 = vmatpush1.bf16.msra.mxu0 0
    %914 = vmatprep.mubr.bf16.mxu0 0
    %915 = vmatmul.mubr.bf16.gmra.mrb[0].mxu0 %v880
    %v916 = vpop.f32.mrb[0].mxu0
    %v917 = vadd.f32 0.0, %v916
    %v918 = vpop.f32.mrb[0].mxu0
    %v919 = vpop.f32.mrb[0].mxu0
    %v920 = vpop.f32.mrb[0].mxu0
    %921 = vdwg.mxu0
    %v922 = vadd.f32 %v858, %v917
    %v923 = vmul.f32 %v922, 0.5
    %v924 = vtanh.pop %v923
    %v925 = vmul.f32 %v924, 0.5
    %v926 = vadd.f32 %v925, 0.5
    %v927 = vtanh.pop %v922
    %v928 = vmul.f32 %v926, %v846
    %930 = vrot.lane.b32.xlu0 %v927, 64
    %v931 = vpop.permute.xlu0 %930
    %v933 = vmul.f32 %v926, %v931
    %935 = vrot.lane.b32.xlu0 %v933, 32
    %v936 = vpop.permute.xlu0 %935
    %v938 = vadd.f32 %v928, %v936
    %v939 = vtanh.pop %v938
    %941 = vrot.lane.b32.xlu0 %v939, 64
    %v942 = vpop.permute.xlu0 %941
    %v944 = vmul.f32 %v926, %v942
    %946 = vrot.lane.b32.xlu0 %v944, 32
    %v947 = vpop.permute.xlu0 %946
    %949 = vst.msk [vmem:[#allocation3 + $0x30] sm:$0xff] %vm136, %v947
    %v950 = vld [vmem:[#allocation2 + $0x38] sm:$0xff]
    %v951 = vpack.c.bf16 %v944, %v944
    %v952 = vld [vmem:[#allocation4] sm:$0xf]
    %v953 = vld [vmem:[#allocation4 + $0x4] sm:$0xf]
    %v954 = vld [vmem:[#allocation4 + $0x8] sm:$0xf]
    %v955 = vld [vmem:[#allocation4 + $0xc] sm:$0xf]
    %957 = vrot.lane.b32.xlu0 %v951, 32
    %v958 = vpop.permute.xlu0 %957
    %v963 = vunpack.c.l.b16 %v952
    %v964 = vunpack.c.l.b16 %v953
    %v965 = vunpack.c.l.b16 %v954
    %v966 = vunpack.c.l.b16 %v955
    %v967 = vpack.c.b16 %v964, %v963
    %v968 = vpack.c.b16 %v966, %v965
    %v972 = vsel %vm136, %v958, 0
    %974 = vmatprep.subr.bf16.mxu0 0
    %975 = vmatpush1.bf16.msra.mxu0 %v967
    %976 = vmatprep.subr.bf16.mxu0 0
    %977 = vmatpush1.bf16.msra.mxu0 %v968
    %978 = vmatprep.subr.bf16.mxu0 0
    %979 = vmatpush1.bf16.msra.mxu0 0
    %980 = vmatprep.subr.bf16.mxu0 0
    %981 = vmatpush1.bf16.msra.mxu0 0
    %982 = vmatprep.subr.bf16.mxu0 0
    %983 = vmatpush1.bf16.msra.mxu0 0
    %984 = vmatprep.subr.bf16.mxu0 0
    %985 = vmatpush1.bf16.msra.mxu0 0
    %986 = vmatprep.subr.bf16.mxu0 0
    %987 = vmatpush1.bf16.msra.mxu0 0
    %988 = vmatprep.subr.bf16.mxu0 0
    %989 = vmatpush1.bf16.msra.mxu0 0
    %990 = vmatprep.subr.bf16.mxu0 0
    %991 = vmatpush1.bf16.msra.mxu0 0
    %992 = vmatprep.subr.bf16.mxu0 0
    %993 = vmatpush1.bf16.msra.mxu0 0
    %994 = vmatprep.subr.bf16.mxu0 0
    %995 = vmatpush1.bf16.msra.mxu0 0
    %996 = vmatprep.subr.bf16.mxu0 0
    %997 = vmatpush1.bf16.msra.mxu0 0
    %998 = vmatprep.subr.bf16.mxu0 0
    %999 = vmatpush1.bf16.msra.mxu0 0
    %1000 = vmatprep.subr.bf16.mxu0 0
    %1001 = vmatpush1.bf16.msra.mxu0 0
    %1002 = vmatprep.subr.bf16.mxu0 0
    %1003 = vmatpush1.bf16.msra.mxu0 0
    %1004 = vmatprep.subr.bf16.mxu0 0
    %1005 = vmatpush1.bf16.msra.mxu0 0
    %1006 = vmatprep.mubr.bf16.mxu0 0
    %1007 = vmatmul.mubr.bf16.gmra.mrb[0].mxu0 %v972
    %v1008 = vpop.f32.mrb[0].mxu0
    %v1009 = vadd.f32 0.0, %v1008
    %v1010 = vpop.f32.mrb[0].mxu0
    %v1011 = vpop.f32.mrb[0].mxu0
    %v1012 = vpop.f32.mrb[0].mxu0
    %1013 = vdwg.mxu0
    %v1014 = vadd.f32 %v950, %v1009
    %v1015 = vmul.f32 %v1014, 0.5
    %v1016 = vtanh.pop %v1015
    %v1017 = vmul.f32 %v1016, 0.5
    %v1018 = vadd.f32 %v1017, 0.5
    %v1019 = vtanh.pop %v1014
    %v1020 = vmul.f32 %v1018, %v938
    %1022 = vrot.lane.b32.xlu0 %v1019, 64
    %v1023 = vpop.permute.xlu0 %1022
    %v1025 = vmul.f32 %v1018, %v1023
    %1027 = vrot.lane.b32.xlu0 %v1025, 32
    %v1028 = vpop.permute.xlu0 %1027
    %v1030 = vadd.f32 %v1020, %v1028
    %v1031 = vtanh.pop %v1030
    %1033 = vrot.lane.b32.xlu0 %v1031, 64
    %v1034 = vpop.permute.xlu0 %1033
    %v1036 = vmul.f32 %v1018, %v1034
    %1038 = vrot.lane.b32.xlu0 %v1036, 32
    %v1039 = vpop.permute.xlu0 %1038
    %1041 = vst.msk [vmem:[#allocation3 + $0x38] sm:$0xff] %vm136, %v1039
    %v1042 = vld [vmem:[#allocation3] sm:$0xff]
    %v1043 = vld [vmem:[#allocation3 + $0x8] sm:$0xff]
    %v1044 = vld [vmem:[#allocation3 + $0x10] sm:$0xff]
    %v1045 = vld [vmem:[#allocation3 + $0x18] sm:$0xff]
    %v1046 = vld [vmem:[#allocation3 + $0x20] sm:$0xff]
    %v1047 = vld [vmem:[#allocation3 + $0x28] sm:$0xff]
    %v1048 = vld [vmem:[#allocation3 + $0x30] sm:$0xff]
    %v1049 = vld [vmem:[#allocation3 + $0x38] sm:$0xff]
    %v1050 = vpack.c.bf16 %v1043, %v1042
    %v1051 = vpack.c.bf16 %v1045, %v1044
    %v1052 = vpack.c.bf16 %v1047, %v1046
    %v1053 = vpack.c.bf16 %v1049, %v1048
    %v1054 = vld [vmem:[%s4] sm:$0xf]
    %v1055 = vld [vmem:[%s4 + $0x4] sm:$0xf]
    %v1056 = vld [vmem:[%s4 + $0x8] sm:$0xf]
    %v1057 = vld [vmem:[%s4 + $0xc] sm:$0xf]
    %v1058 = vld [vmem:[#allocation9] sm:$0x1]
    %v1060 = vlaneseq
    %v1061 = vshrl.u32 %v1060, 7
    %v1062 = vsub.s32 0, %v1061
    %v1063 = vrot.slane %v1058, %v1062
    %v1069 = vunpack.c.l.b16 %v1054
    %v1070 = vunpack.c.l.b16 %v1055
    %v1071 = vunpack.c.l.b16 %v1056
    %v1072 = vunpack.c.l.b16 %v1057
    %v1073 = vpack.c.b16 %v1070, %v1069
    %v1074 = vpack.c.b16 %v1072, %v1071
    %v1078 = vsel %vm136, %v1050, 0
    %v1081 = vsel %vm136, %v1051, 0
    %v1084 = vsel %vm136, %v1052, 0
    %v1087 = vsel %vm136, %v1053, 0
    %1089 = vmatprep.subr.bf16.mxu0 0
    %1090 = vmatpush1.bf16.msra.mxu0 %v1073
    %1091 = vmatprep.subr.bf16.mxu0 0
    %1092 = vmatpush1.bf16.msra.mxu0 %v1074
    %1093 = vmatprep.subr.bf16.mxu0 0
    %1094 = vmatpush1.bf16.msra.mxu0 0
    %1095 = vmatprep.subr.bf16.mxu0 0
    %1096 = vmatpush1.bf16.msra.mxu0 0
    %1097 = vmatprep.subr.bf16.mxu0 0
    %1098 = vmatpush1.bf16.msra.mxu0 0
    %1099 = vmatprep.subr.bf16.mxu0 0
    %1100 = vmatpush1.bf16.msra.mxu0 0
    %1101 = vmatprep.subr.bf16.mxu0 0
    %1102 = vmatpush1.bf16.msra.mxu0 0
    %1103 = vmatprep.subr.bf16.mxu0 0
    %1104 = vmatpush1.bf16.msra.mxu0 0
    %1105 = vmatprep.subr.bf16.mxu0 0
    %1106 = vmatpush1.bf16.msra.mxu0 0
    %1107 = vmatprep.subr.bf16.mxu0 0
    %1108 = vmatpush1.bf16.msra.mxu0 0
    %1109 = vmatprep.subr.bf16.mxu0 0
    %1110 = vmatpush1.bf16.msra.mxu0 0
    %1111 = vmatprep.subr.bf16.mxu0 0
    %1112 = vmatpush1.bf16.msra.mxu0 0
    %1113 = vmatprep.subr.bf16.mxu0 0
    %1114 = vmatpush1.bf16.msra.mxu0 0
    %1115 = vmatprep.subr.bf16.mxu0 0
    %1116 = vmatpush1.bf16.msra.mxu0 0
    %1117 = vmatprep.subr.bf16.mxu0 0
    %1118 = vmatpush1.bf16.msra.mxu0 0
    %1119 = vmatprep.subr.bf16.mxu0 0
    %1120 = vmatpush1.bf16.msra.mxu0 0
    %1121 = vmatprep.mubr.bf16.mxu0 0
    %1122 = vmatmul.mubr.bf16.gmra.mrb[0].mxu0 %v1078
    %v1123 = vpop.f32.mrb[0].mxu0
    %v1124 = vadd.f32 %v1063, %v1123
    %v1125 = vpop.f32.mrb[0].mxu0
    %v1126 = vpop.f32.mrb[0].mxu0
    %v1127 = vadd.f32 %v1063, %v1126
    %v1128 = vpop.f32.mrb[0].mxu0
    %1129 = vmatprep.mubr.bf16.mxu0 0
    %1130 = vmatmul.mubr.bf16.gmra.mrb[0].mxu0 %v1081
    %v1131 = vpop.f32.mrb[0].mxu0
    %v1132 = vadd.f32 %v1063, %v1131
    %v1133 = vpop.f32.mrb[0].mxu0
    %v1134 = vpop.f32.mrb[0].mxu0
    %v1135 = vadd.f32 %v1063, %v1134
    %v1136 = vpop.f32.mrb[0].mxu0
    %1137 = vmatprep.mubr.bf16.mxu0 0
    %1138 = vmatmul.mubr.bf16.gmra.mrb[0].mxu0 %v1084
    %v1139 = vpop.f32.mrb[0].mxu0
    %v1140 = vadd.f32 %v1063, %v1139
    %v1141 = vpop.f32.mrb[0].mxu0
    %v1142 = vpop.f32.mrb[0].mxu0
    %v1143 = vadd.f32 %v1063, %v1142
    %v1144 = vpop.f32.mrb[0].mxu0
    %1145 = vmatprep.mubr.bf16.mxu0 0
    %1146 = vmatmul.mubr.bf16.gmra.mrb[0].mxu0 %v1087
    %v1147 = vpop.f32.mrb[0].mxu0
    %v1148 = vadd.f32 %v1063, %v1147
    %v1149 = vpop.f32.mrb[0].mxu0
    %v1150 = vpop.f32.mrb[0].mxu0
    %v1151 = vadd.f32 %v1063, %v1150
    %v1152 = vpop.f32.mrb[0].mxu0
    %1153 = vdwg.mxu0
    %1154 = vst [vmem:[#allocation2] sm:$0xff] %v1124
    %1155 = vst [vmem:[#allocation2 + $0x8] sm:$0xff] %v1127
    %1156 = vst [vmem:[#allocation2 + $0x10] sm:$0xff] %v1132
    %1157 = vst [vmem:[#allocation2 + $0x18] sm:$0xff] %v1135
    %1158 = vst [vmem:[#allocation2 + $0x20] sm:$0xff] %v1140
    %1159 = vst [vmem:[#allocation2 + $0x28] sm:$0xff] %v1143
    %1160 = vst [vmem:[#allocation2 + $0x30] sm:$0xff] %v1148
    %1161 = vst [vmem:[#allocation2 + $0x38] sm:$0xff] %v1151
    %v1162 = vld [vmem:[#allocation2] sm:$0xff]
    %v1163 = vld [vmem:[#allocation8] sm:$0xf]
    %v1164 = vld [vmem:[#allocation8 + $0x4] sm:$0xf]
    %v1165 = vld [vmem:[#allocation8 + $0x8] sm:$0xf]
    %v1166 = vld [vmem:[#allocation8 + $0xc] sm:$0xf]
    %v1171 = vunpack.c.l.b16 %v1163
    %v1172 = vunpack.c.l.b16 %v1164
    %v1173 = vunpack.c.l.b16 %v1165
    %v1174 = vunpack.c.l.b16 %v1166
    %v1175 = vpack.c.b16 %v1172, %v1171
    %v1176 = vpack.c.b16 %v1174, %v1173
    %1179 = vmatprep.subr.bf16.mxu0 0
    %1180 = vmatpush1.bf16.msra.mxu0 %v1175
    %1181 = vmatprep.subr.bf16.mxu0 0
    %1182 = vmatpush1.bf16.msra.mxu0 %v1176
    %1183 = vmatprep.subr.bf16.mxu0 0
    %1184 = vmatpush1.bf16.msra.mxu0 0
    %1185 = vmatprep.subr.bf16.mxu0 0
    %1186 = vmatpush1.bf16.msra.mxu0 0
    %1187 = vmatprep.subr.bf16.mxu0 0
    %1188 = vmatpush1.bf16.msra.mxu0 0
    %1189 = vmatprep.subr.bf16.mxu0 0
    %1190 = vmatpush1.bf16.msra.mxu0 0
    %1191 = vmatprep.subr.bf16.mxu0 0
    %1192 = vmatpush1.bf16.msra.mxu0 0
    %1193 = vmatprep.subr.bf16.mxu0 0
    %1194 = vmatpush1.bf16.msra.mxu0 0
    %1195 = vmatprep.subr.bf16.mxu0 0
    %1196 = vmatpush1.bf16.msra.mxu0 0
    %1197 = vmatprep.subr.bf16.mxu0 0
    %1198 = vmatpush1.bf16.msra.mxu0 0
    %1199 = vmatprep.subr.bf16.mxu0 0
    %1200 = vmatpush1.bf16.msra.mxu0 0
    %1201 = vmatprep.subr.bf16.mxu0 0
    %1202 = vmatpush1.bf16.msra.mxu0 0
    %1203 = vmatprep.subr.bf16.mxu0 0
    %1204 = vmatpush1.bf16.msra.mxu0 0
    %1205 = vmatprep.subr.bf16.mxu0 0
    %1206 = vmatpush1.bf16.msra.mxu0 0
    %1207 = vmatprep.subr.bf16.mxu0 0
    %1208 = vmatpush1.bf16.msra.mxu0 0
    %1209 = vmatprep.subr.bf16.mxu0 0
    %1210 = vmatpush1.bf16.msra.mxu0 0
    %1211 = vmatprep.mubr.bf16.mxu0 0
    %1212 = vmatmul.mubr.bf16.gmra.mrb[0].mxu0 %v328
    %v1213 = vpop.f32.mrb[0].mxu0
    %v1214 = vadd.f32 0.0, %v1213
    %v1215 = vpop.f32.mrb[0].mxu0
    %v1216 = vpop.f32.mrb[0].mxu0
    %v1217 = vpop.f32.mrb[0].mxu0
    %1218 = vdwg.mxu0
    %v1219 = vadd.f32 %v1162, %v1214
    %v1220 = vmul.f32 %v1219, 0.5
    %v1221 = vtanh.pop %v1220
    %v1222 = vmul.f32 %v1221, 0.5
    %v1223 = vadd.f32 %v1222, 0.5
    %v1224 = vtanh.pop %v1219
    %v1225 = vmul.f32 %v1223, 0.0
    %1227 = vrot.lane.b32.xlu0 %v1224, 64
    %v1228 = vpop.permute.xlu0 %1227
    %v1230 = vmul.f32 %v1223, %v1228
    %1232 = vrot.lane.b32.xlu0 %v1230, 32
    %v1233 = vpop.permute.xlu0 %1232
    %v1235 = vadd.f32 %v1225, %v1233
    %v1236 = vtanh.pop %v1235
    %1238 = vrot.lane.b32.xlu0 %v1236, 64
    %v1239 = vpop.permute.xlu0 %1238
    %v1241 = vmul.f32 %v1223, %v1239
    %v1242 = vld [vmem:[#allocation2 + $0x8] sm:$0xff]
    %v1243 = vpack.c.bf16 %v1241, %v1241
    %1245 = vrot.lane.b32.xlu0 %v1243, 32
    %v1246 = vpop.permute.xlu0 %1245
    %v1248 = vsel %vm136, %v1246, 0
    %1250 = vmatprep.subr.bf16.mxu0 0
    %1251 = vmatpush1.bf16.msra.mxu0 %v1175
    %1252 = vmatprep.subr.bf16.mxu0 0
    %1253 = vmatpush1.bf16.msra.mxu0 %v1176
    %1254 = vmatprep.subr.bf16.mxu0 0
    %1255 = vmatpush1.bf16.msra.mxu0 0
    %1256 = vmatprep.subr.bf16.mxu0 0
    %1257 = vmatpush1.bf16.msra.mxu0 0
    %1258 = vmatprep.subr.bf16.mxu0 0
    %1259 = vmatpush1.bf16.msra.mxu0 0
    %1260 = vmatprep.subr.bf16.mxu0 0
    %1261 = vmatpush1.bf16.msra.mxu0 0
    %1262 = vmatprep.subr.bf16.mxu0 0
    %1263 = vmatpush1.bf16.msra.mxu0 0
    %1264 = vmatprep.subr.bf16.mxu0 0
    %1265 = vmatpush1.bf16.msra.mxu0 0
    %1266 = vmatprep.subr.bf16.mxu0 0
    %1267 = vmatpush1.bf16.msra.mxu0 0
    %1268 = vmatprep.subr.bf16.mxu0 0
    %1269 = vmatpush1.bf16.msra.mxu0 0
    %1270 = vmatprep.subr.bf16.mxu0 0
    %1271 = vmatpush1.bf16.msra.mxu0 0
    %1272 = vmatprep.subr.bf16.mxu0 0
    %1273 = vmatpush1.bf16.msra.mxu0 0
    %1274 = vmatprep.subr.bf16.mxu0 0
    %1275 = vmatpush1.bf16.msra.mxu0 0
    %1276 = vmatprep.subr.bf16.mxu0 0
    %1277 = vmatpush1.bf16.msra.mxu0 0
    %1278 = vmatprep.subr.bf16.mxu0 0
    %1279 = vmatpush1.bf16.msra.mxu0 0
    %1280 = vmatprep.subr.bf16.mxu0 0
    %1281 = vmatpush1.bf16.msra.mxu0 0
    %1282 = vmatprep.mubr.bf16.mxu0 0
    %1283 = vmatmul.mubr.bf16.gmra.mrb[0].mxu0 %v1248
    %v1284 = vpop.f32.mrb[0].mxu0
    %v1285 = vadd.f32 0.0, %v1284
    %v1286 = vpop.f32.mrb[0].mxu0
    %v1287 = vpop.f32.mrb[0].mxu0
    %v1288 = vpop.f32.mrb[0].mxu0
    %1289 = vdwg.mxu0
    %v1290 = vadd.f32 %v1242, %v1285
    %v1291 = vmul.f32 %v1290, 0.5
    %v1292 = vtanh.pop %v1291
    %v1293 = vmul.f32 %v1292, 0.5
    %v1294 = vadd.f32 %v1293, 0.5
    %v1295 = vtanh.pop %v1290
    %v1296 = vmul.f32 %v1294, %v1235
    %1298 = vrot.lane.b32.xlu0 %v1295, 64
    %v1299 = vpop.permute.xlu0 %1298
    %v1301 = vmul.f32 %v1294, %v1299
    %1303 = vrot.lane.b32.xlu0 %v1301, 32
    %v1304 = vpop.permute.xlu0 %1303
    %v1306 = vadd.f32 %v1296, %v1304
    %v1307 = vtanh.pop %v1306
    %1309 = vrot.lane.b32.xlu0 %v1307, 64
    %v1310 = vpop.permute.xlu0 %1309
    %v1312 = vmul.f32 %v1294, %v1310
    %v1313 = vld [vmem:[#allocation2 + $0x10] sm:$0xff]
    %v1314 = vpack.c.bf16 %v1312, %v1312
    %1316 = vrot.lane.b32.xlu0 %v1314, 32
    %v1317 = vpop.permute.xlu0 %1316
    %v1319 = vsel %vm136, %v1317, 0
    %1321 = vmatprep.subr.bf16.mxu0 0
    %1322 = vmatpush1.bf16.msra.mxu0 %v1175
    %1323 = vmatprep.subr.bf16.mxu0 0
    %1324 = vmatpush1.bf16.msra.mxu0 %v1176
    %1325 = vmatprep.subr.bf16.mxu0 0
    %1326 = vmatpush1.bf16.msra.mxu0 0
    %1327 = vmatprep.subr.bf16.mxu0 0
    %1328 = vmatpush1.bf16.msra.mxu0 0
    %1329 = vmatprep.subr.bf16.mxu0 0
    %1330 = vmatpush1.bf16.msra.mxu0 0
    %1331 = vmatprep.subr.bf16.mxu0 0
    %1332 = vmatpush1.bf16.msra.mxu0 0
    %1333 = vmatprep.subr.bf16.mxu0 0
    %1334 = vmatpush1.bf16.msra.mxu0 0
    %1335 = vmatprep.subr.bf16.mxu0 0
    %1336 = vmatpush1.bf16.msra.mxu0 0
    %1337 = vmatprep.subr.bf16.mxu0 0
    %1338 = vmatpush1.bf16.msra.mxu0 0
    %1339 = vmatprep.subr.bf16.mxu0 0
    %1340 = vmatpush1.bf16.msra.mxu0 0
    %1341 = vmatprep.subr.bf16.mxu0 0
    %1342 = vmatpush1.bf16.msra.mxu0 0
    %1343 = vmatprep.subr.bf16.mxu0 0
    %1344 = vmatpush1.bf16.msra.mxu0 0
    %1345 = vmatprep.subr.bf16.mxu0 0
    %1346 = vmatpush1.bf16.msra.mxu0 0
    %1347 = vmatprep.subr.bf16.mxu0 0
    %1348 = vmatpush1.bf16.msra.mxu0 0
    %1349 = vmatprep.subr.bf16.mxu0 0
    %1350 = vmatpush1.bf16.msra.mxu0 0
    %1351 = vmatprep.subr.bf16.mxu0 0
    %1352 = vmatpush1.bf16.msra.mxu0 0
    %1353 = vmatprep.mubr.bf16.mxu0 0
    %1354 = vmatmul.mubr.bf16.gmra.mrb[0].mxu0 %v1319
    %v1355 = vpop.f32.mrb[0].mxu0
    %v1356 = vadd.f32 0.0, %v1355
    %v1357 = vpop.f32.mrb[0].mxu0
    %v1358 = vpop.f32.mrb[0].mxu0
    %v1359 = vpop.f32.mrb[0].mxu0
    %1360 = vdwg.mxu0
    %v1361 = vadd.f32 %v1313, %v1356
    %v1362 = vmul.f32 %v1361, 0.5
    %v1363 = vtanh.pop %v1362
    %v1364 = vmul.f32 %v1363, 0.5
    %v1365 = vadd.f32 %v1364, 0.5
    %v1366 = vtanh.pop %v1361
    %v1367 = vmul.f32 %v1365, %v1306
    %1369 = vrot.lane.b32.xlu0 %v1366, 64
    %v1370 = vpop.permute.xlu0 %1369
    %v1372 = vmul.f32 %v1365, %v1370
    %1374 = vrot.lane.b32.xlu0 %v1372, 32
    %v1375 = vpop.permute.xlu0 %1374
    %v1377 = vadd.f32 %v1367, %v1375
    %v1378 = vtanh.pop %v1377
    %1380 = vrot.lane.b32.xlu0 %v1378, 64
    %v1381 = vpop.permute.xlu0 %1380
    %v1383 = vmul.f32 %v1365, %v1381
    %v1384 = vld [vmem:[#allocation2 + $0x18] sm:$0xff]
    %v1385 = vpack.c.bf16 %v1383, %v1383
    %1387 = vrot.lane.b32.xlu0 %v1385, 32
    %v1388 = vpop.permute.xlu0 %1387
    %v1390 = vsel %vm136, %v1388, 0
    %1392 = vmatprep.subr.bf16.mxu0 0
    %1393 = vmatpush1.bf16.msra.mxu0 %v1175
    %1394 = vmatprep.subr.bf16.mxu0 0
    %1395 = vmatpush1.bf16.msra.mxu0 %v1176
    %1396 = vmatprep.subr.bf16.mxu0 0
    %1397 = vmatpush1.bf16.msra.mxu0 0
    %1398 = vmatprep.subr.bf16.mxu0 0
    %1399 = vmatpush1.bf16.msra.mxu0 0
    %1400 = vmatprep.subr.bf16.mxu0 0
    %1401 = vmatpush1.bf16.msra.mxu0 0
    %1402 = vmatprep.subr.bf16.mxu0 0
    %1403 = vmatpush1.bf16.msra.mxu0 0
    %1404 = vmatprep.subr.bf16.mxu0 0
    %1405 = vmatpush1.bf16.msra.mxu0 0
    %1406 = vmatprep.subr.bf16.mxu0 0
    %1407 = vmatpush1.bf16.msra.mxu0 0
    %1408 = vmatprep.subr.bf16.mxu0 0
    %1409 = vmatpush1.bf16.msra.mxu0 0
    %1410 = vmatprep.subr.bf16.mxu0 0
    %1411 = vmatpush1.bf16.msra.mxu0 0
    %1412 = vmatprep.subr.bf16.mxu0 0
    %1413 = vmatpush1.bf16.msra.mxu0 0
    %1414 = vmatprep.subr.bf16.mxu0 0
    %1415 = vmatpush1.bf16.msra.mxu0 0
    %1416 = vmatprep.subr.bf16.mxu0 0
    %1417 = vmatpush1.bf16.msra.mxu0 0
    %1418 = vmatprep.subr.bf16.mxu0 0
    %1419 = vmatpush1.bf16.msra.mxu0 0
    %1420 = vmatprep.subr.bf16.mxu0 0
    %1421 = vmatpush1.bf16.msra.mxu0 0
    %1422 = vmatprep.subr.bf16.mxu0 0
    %1423 = vmatpush1.bf16.msra.mxu0 0
    %1424 = vmatprep.mubr.bf16.mxu0 0
    %1425 = vmatmul.mubr.bf16.gmra.mrb[0].mxu0 %v1390
    %v1426 = vpop.f32.mrb[0].mxu0
    %v1427 = vadd.f32 0.0, %v1426
    %v1428 = vpop.f32.mrb[0].mxu0
    %v1429 = vpop.f32.mrb[0].mxu0
    %v1430 = vpop.f32.mrb[0].mxu0
    %1431 = vdwg.mxu0
    %v1432 = vadd.f32 %v1384, %v1427
    %v1433 = vmul.f32 %v1432, 0.5
    %v1434 = vtanh.pop %v1433
    %v1435 = vmul.f32 %v1434, 0.5
    %v1436 = vadd.f32 %v1435, 0.5
    %v1437 = vtanh.pop %v1432
    %v1438 = vmul.f32 %v1436, %v1377
    %1440 = vrot.lane.b32.xlu0 %v1437, 64
    %v1441 = vpop.permute.xlu0 %1440
    %v1443 = vmul.f32 %v1436, %v1441
    %1445 = vrot.lane.b32.xlu0 %v1443, 32
    %v1446 = vpop.permute.xlu0 %1445
    %v1448 = vadd.f32 %v1438, %v1446
    %v1449 = vtanh.pop %v1448
    %1451 = vrot.lane.b32.xlu0 %v1449, 64
    %v1452 = vpop.permute.xlu0 %1451
    %v1454 = vmul.f32 %v1436, %v1452
    %v1455 = vld [vmem:[#allocation2 + $0x20] sm:$0xff]
    %v1456 = vpack.c.bf16 %v1454, %v1454
    %1458 = vrot.lane.b32.xlu0 %v1456, 32
    %v1459 = vpop.permute.xlu0 %1458
    %v1461 = vsel %vm136, %v1459, 0
    %1463 = vmatprep.subr.bf16.mxu0 0
    %1464 = vmatpush1.bf16.msra.mxu0 %v1175
    %1465 = vmatprep.subr.bf16.mxu0 0
    %1466 = vmatpush1.bf16.msra.mxu0 %v1176
    %1467 = vmatprep.subr.bf16.mxu0 0
    %1468 = vmatpush1.bf16.msra.mxu0 0
    %1469 = vmatprep.subr.bf16.mxu0 0
    %1470 = vmatpush1.bf16.msra.mxu0 0
    %1471 = vmatprep.subr.bf16.mxu0 0
    %1472 = vmatpush1.bf16.msra.mxu0 0
    %1473 = vmatprep.subr.bf16.mxu0 0
    %1474 = vmatpush1.bf16.msra.mxu0 0
    %1475 = vmatprep.subr.bf16.mxu0 0
    %1476 = vmatpush1.bf16.msra.mxu0 0
    %1477 = vmatprep.subr.bf16.mxu0 0
    %1478 = vmatpush1.bf16.msra.mxu0 0
    %1479 = vmatprep.subr.bf16.mxu0 0
    %1480 = vmatpush1.bf16.msra.mxu0 0
    %1481 = vmatprep.subr.bf16.mxu0 0
    %1482 = vmatpush1.bf16.msra.mxu0 0
    %1483 = vmatprep.subr.bf16.mxu0 0
    %1484 = vmatpush1.bf16.msra.mxu0 0
    %1485 = vmatprep.subr.bf16.mxu0 0
    %1486 = vmatpush1.bf16.msra.mxu0 0
    %1487 = vmatprep.subr.bf16.mxu0 0
    %1488 = vmatpush1.bf16.msra.mxu0 0
    %1489 = vmatprep.subr.bf16.mxu0 0
    %1490 = vmatpush1.bf16.msra.mxu0 0
    %1491 = vmatprep.subr.bf16.mxu0 0
    %1492 = vmatpush1.bf16.msra.mxu0 0
    %1493 = vmatprep.subr.bf16.mxu0 0
    %1494 = vmatpush1.bf16.msra.mxu0 0
    %1495 = vmatprep.mubr.bf16.mxu0 0
    %1496 = vmatmul.mubr.bf16.gmra.mrb[0].mxu0 %v1461
    %v1497 = vpop.f32.mrb[0].mxu0
    %v1498 = vadd.f32 0.0, %v1497
    %v1499 = vpop.f32.mrb[0].mxu0
    %v1500 = vpop.f32.mrb[0].mxu0
    %v1501 = vpop.f32.mrb[0].mxu0
    %1502 = vdwg.mxu0
    %v1503 = vadd.f32 %v1455, %v1498
    %v1504 = vmul.f32 %v1503, 0.5
    %v1505 = vtanh.pop %v1504
    %v1506 = vmul.f32 %v1505, 0.5
    %v1507 = vadd.f32 %v1506, 0.5
    %v1508 = vtanh.pop %v1503
    %v1509 = vmul.f32 %v1507, %v1448
    %1511 = vrot.lane.b32.xlu0 %v1508, 64
    %v1512 = vpop.permute.xlu0 %1511
    %v1514 = vmul.f32 %v1507, %v1512
    %1516 = vrot.lane.b32.xlu0 %v1514, 32
    %v1517 = vpop.permute.xlu0 %1516
    %v1519 = vadd.f32 %v1509, %v1517
    %v1520 = vtanh.pop %v1519
    %1522 = vrot.lane.b32.xlu0 %v1520, 64
    %v1523 = vpop.permute.xlu0 %1522
    %v1525 = vmul.f32 %v1507, %v1523
    %v1526 = vld [vmem:[#allocation2 + $0x28] sm:$0xff]
    %v1527 = vpack.c.bf16 %v1525, %v1525
    %1529 = vrot.lane.b32.xlu0 %v1527, 32
    %v1530 = vpop.permute.xlu0 %1529
    %v1532 = vsel %vm136, %v1530, 0
    %1534 = vmatprep.subr.bf16.mxu0 0
    %1535 = vmatpush1.bf16.msra.mxu0 %v1175
    %1536 = vmatprep.subr.bf16.mxu0 0
    %1537 = vmatpush1.bf16.msra.mxu0 %v1176
    %1538 = vmatprep.subr.bf16.mxu0 0
    %1539 = vmatpush1.bf16.msra.mxu0 0
    %1540 = vmatprep.subr.bf16.mxu0 0
    %1541 = vmatpush1.bf16.msra.mxu0 0
    %1542 = vmatprep.subr.bf16.mxu0 0
    %1543 = vmatpush1.bf16.msra.mxu0 0
    %1544 = vmatprep.subr.bf16.mxu0 0
    %1545 = vmatpush1.bf16.msra.mxu0 0
    %1546 = vmatprep.subr.bf16.mxu0 0
    %1547 = vmatpush1.bf16.msra.mxu0 0
    %1548 = vmatprep.subr.bf16.mxu0 0
    %1549 = vmatpush1.bf16.msra.mxu0 0
    %1550 = vmatprep.subr.bf16.mxu0 0
    %1551 = vmatpush1.bf16.msra.mxu0 0
    %1552 = vmatprep.subr.bf16.mxu0 0
    %1553 = vmatpush1.bf16.msra.mxu0 0
    %1554 = vmatprep.subr.bf16.mxu0 0
    %1555 = vmatpush1.bf16.msra.mxu0 0
    %1556 = vmatprep.subr.bf16.mxu0 0
    %1557 = vmatpush1.bf16.msra.mxu0 0
    %1558 = vmatprep.subr.bf16.mxu0 0
    %1559 = vmatpush1.bf16.msra.mxu0 0
    %1560 = vmatprep.subr.bf16.mxu0 0
    %1561 = vmatpush1.bf16.msra.mxu0 0
    %1562 = vmatprep.subr.bf16.mxu0 0
    %1563 = vmatpush1.bf16.msra.mxu0 0
    %1564 = vmatprep.subr.bf16.mxu0 0
    %1565 = vmatpush1.bf16.msra.mxu0 0
    %1566 = vmatprep.mubr.bf16.mxu0 0
    %1567 = vmatmul.mubr.bf16.gmra.mrb[0].mxu0 %v1532
    %v1568 = vpop.f32.mrb[0].mxu0
    %v1569 = vadd.f32 0.0, %v1568
    %v1570 = vpop.f32.mrb[0].mxu0
    %v1571 = vpop.f32.mrb[0].mxu0
    %v1572 = vpop.f32.mrb[0].mxu0
    %1573 = vdwg.mxu0
    %v1574 = vadd.f32 %v1526, %v1569
    %v1575 = vmul.f32 %v1574, 0.5
    %v1576 = vtanh.pop %v1575
    %v1577 = vmul.f32 %v1576, 0.5
    %v1578 = vadd.f32 %v1577, 0.5
    %v1579 = vtanh.pop %v1574
    %v1580 = vmul.f32 %v1578, %v1519
    %1582 = vrot.lane.b32.xlu0 %v1579, 64
    %v1583 = vpop.permute.xlu0 %1582
    %v1585 = vmul.f32 %v1578, %v1583
    %1587 = vrot.lane.b32.xlu0 %v1585, 32
    %v1588 = vpop.permute.xlu0 %1587
    %v1590 = vadd.f32 %v1580, %v1588
    %v1591 = vtanh.pop %v1590
    %1593 = vrot.lane.b32.xlu0 %v1591, 64
    %v1594 = vpop.permute.xlu0 %1593
    %v1596 = vmul.f32 %v1578, %v1594
    %v1597 = vld [vmem:[#allocation2 + $0x30] sm:$0xff]
    %v1598 = vpack.c.bf16 %v1596, %v1596
    %1600 = vrot.lane.b32.xlu0 %v1598, 32
    %v1601 = vpop.permute.xlu0 %1600
    %v1603 = vsel %vm136, %v1601, 0
    %1605 = vmatprep.subr.bf16.mxu0 0
    %1606 = vmatpush1.bf16.msra.mxu0 %v1175
    %1607 = vmatprep.subr.bf16.mxu0 0
    %1608 = vmatpush1.bf16.msra.mxu0 %v1176
    %1609 = vmatprep.subr.bf16.mxu0 0
    %1610 = vmatpush1.bf16.msra.mxu0 0
    %1611 = vmatprep.subr.bf16.mxu0 0
    %1612 = vmatpush1.bf16.msra.mxu0 0
    %1613 = vmatprep.subr.bf16.mxu0 0
    %1614 = vmatpush1.bf16.msra.mxu0 0
    %1615 = vmatprep.subr.bf16.mxu0 0
    %1616 = vmatpush1.bf16.msra.mxu0 0
    %1617 = vmatprep.subr.bf16.mxu0 0
    %1618 = vmatpush1.bf16.msra.mxu0 0
    %1619 = vmatprep.subr.bf16.mxu0 0
    %1620 = vmatpush1.bf16.msra.mxu0 0
    %1621 = vmatprep.subr.bf16.mxu0 0
    %1622 = vmatpush1.bf16.msra.mxu0 0
    %1623 = vmatprep.subr.bf16.mxu0 0
    %1624 = vmatpush1.bf16.msra.mxu0 0
    %1625 = vmatprep.subr.bf16.mxu0 0
    %1626 = vmatpush1.bf16.msra.mxu0 0
    %1627 = vmatprep.subr.bf16.mxu0 0
    %1628 = vmatpush1.bf16.msra.mxu0 0
    %1629 = vmatprep.subr.bf16.mxu0 0
    %1630 = vmatpush1.bf16.msra.mxu0 0
    %1631 = vmatprep.subr.bf16.mxu0 0
    %1632 = vmatpush1.bf16.msra.mxu0 0
    %1633 = vmatprep.subr.bf16.mxu0 0
    %1634 = vmatpush1.bf16.msra.mxu0 0
    %1635 = vmatprep.subr.bf16.mxu0 0
    %1636 = vmatpush1.bf16.msra.mxu0 0
    %1637 = vmatprep.mubr.bf16.mxu0 0
    %1638 = vmatmul.mubr.bf16.gmra.mrb[0].mxu0 %v1603
    %v1639 = vpop.f32.mrb[0].mxu0
    %v1640 = vadd.f32 0.0, %v1639
    %v1641 = vpop.f32.mrb[0].mxu0
    %v1642 = vpop.f32.mrb[0].mxu0
    %v1643 = vpop.f32.mrb[0].mxu0
    %1644 = vdwg.mxu0
    %v1645 = vadd.f32 %v1597, %v1640
    %v1646 = vmul.f32 %v1645, 0.5
    %v1647 = vtanh.pop %v1646
    %v1648 = vmul.f32 %v1647, 0.5
    %v1649 = vadd.f32 %v1648, 0.5
    %v1650 = vtanh.pop %v1645
    %v1651 = vmul.f32 %v1649, %v1590
    %1653 = vrot.lane.b32.xlu0 %v1650, 64
    %v1654 = vpop.permute.xlu0 %1653
    %v1656 = vmul.f32 %v1649, %v1654
    %1658 = vrot.lane.b32.xlu0 %v1656, 32
    %v1659 = vpop.permute.xlu0 %1658
    %v1661 = vadd.f32 %v1651, %v1659
    %v1662 = vtanh.pop %v1661
    %1664 = vrot.lane.b32.xlu0 %v1662, 64
    %v1665 = vpop.permute.xlu0 %1664
    %v1667 = vmul.f32 %v1649, %v1665
    %v1668 = vld [vmem:[#allocation2 + $0x38] sm:$0xff]
    %v1669 = vpack.c.bf16 %v1667, %v1667
    %1671 = vrot.lane.b32.xlu0 %v1669, 32
    %v1672 = vpop.permute.xlu0 %1671
    %v1674 = vsel %vm136, %v1672, 0
    %1676 = vmatprep.subr.bf16.mxu0 0
    %1677 = vmatpush1.bf16.msra.mxu0 %v1175
    %1678 = vmatprep.subr.bf16.mxu0 0
    %1679 = vmatpush1.bf16.msra.mxu0 %v1176
    %1680 = vmatprep.subr.bf16.mxu0 0
    %1681 = vmatpush1.bf16.msra.mxu0 0
    %1682 = vmatprep.subr.bf16.mxu0 0
    %1683 = vmatpush1.bf16.msra.mxu0 0
    %1684 = vmatprep.subr.bf16.mxu0 0
    %1685 = vmatpush1.bf16.msra.mxu0 0
    %1686 = vmatprep.subr.bf16.mxu0 0
    %1687 = vmatpush1.bf16.msra.mxu0 0
    %1688 = vmatprep.subr.bf16.mxu0 0
    %1689 = vmatpush1.bf16.msra.mxu0 0
    %1690 = vmatprep.subr.bf16.mxu0 0
    %1691 = vmatpush1.bf16.msra.mxu0 0
    %1692 = vmatprep.subr.bf16.mxu0 0
    %1693 = vmatpush1.bf16.msra.mxu0 0
    %1694 = vmatprep.subr.bf16.mxu0 0
    %1695 = vmatpush1.bf16.msra.mxu0 0
    %1696 = vmatprep.subr.bf16.mxu0 0
    %1697 = vmatpush1.bf16.msra.mxu0 0
    %1698 = vmatprep.subr.bf16.mxu0 0
    %1699 = vmatpush1.bf16.msra.mxu0 0
    %1700 = vmatprep.subr.bf16.mxu0 0
    %1701 = vmatpush1.bf16.msra.mxu0 0
    %1702 = vmatprep.subr.bf16.mxu0 0
    %1703 = vmatpush1.bf16.msra.mxu0 0
    %1704 = vmatprep.subr.bf16.mxu0 0
    %1705 = vmatpush1.bf16.msra.mxu0 0
    %1706 = vmatprep.subr.bf16.mxu0 0
    %1707 = vmatpush1.bf16.msra.mxu0 0
    %1708 = vmatprep.mubr.bf16.mxu0 0
    %1709 = vmatmul.mubr.bf16.gmra.mrb[0].mxu0 %v1674
    %v1710 = vpop.f32.mrb[0].mxu0
    %v1711 = vadd.f32 0.0, %v1710
    %v1712 = vpop.f32.mrb[0].mxu0
    %v1713 = vpop.f32.mrb[0].mxu0
    %v1714 = vpop.f32.mrb[0].mxu0
    %1715 = vdwg.mxu0
    %v1716 = vadd.f32 %v1668, %v1711
    %v1717 = vmul.f32 %v1716, 0.5
    %v1718 = vtanh.pop %v1717
    %v1719 = vmul.f32 %v1718, 0.5
    %v1720 = vadd.f32 %v1719, 0.5
    %v1721 = vtanh.pop %v1716
    %v1722 = vmul.f32 %v1720, %v1661
    %1724 = vrot.lane.b32.xlu0 %v1721, 64
    %v1725 = vpop.permute.xlu0 %1724
    %v1727 = vmul.f32 %v1720, %v1725
    %1729 = vrot.lane.b32.xlu0 %v1727, 32
    %v1730 = vpop.permute.xlu0 %1729
    %v1732 = vadd.f32 %v1722, %v1730
    %v1733 = vtanh.pop %v1732
    %1735 = vrot.lane.b32.xlu0 %v1733, 64
    %v1736 = vpop.permute.xlu0 %1735
    %v1738 = vmul.f32 %v1720, %v1736
    %v1739 = vpack.c.bf16 %v1738, %v1738
    %v1740 = vld [vmem:[#allocation11] sm:$0xf]
    %v1741 = vld [vmem:[#allocation11 + $0x4] sm:$0xf]
    %v1742 = vld [vmem:[#allocation11 + $0x8] sm:$0xf]
    %v1743 = vld [vmem:[#allocation11 + $0xc] sm:$0xf]
    %v1744 = vld [vmem:[%s9] sm:$0x1]
    %v1746 = vlaneseq
    %v1747 = vshrl.u32 %v1746, 7
    %v1748 = vsub.s32 0, %v1747
    %v1749 = vrot.slane %v1744, %v1748
    %1752 = vrot.lane.b32.xlu0 %v1739, 32
    %v1753 = vpop.permute.xlu0 %1752
    %v1758 = vunpack.c.l.b16 %v1740
    %v1759 = vunpack.c.l.b16 %v1741
    %v1760 = vunpack.c.l.b16 %v1742
    %v1761 = vunpack.c.l.b16 %v1743
    %v1762 = vpack.c.b16 %v1759, %v1758
    %v1763 = vpack.c.b16 %v1761, %v1760
    %v1767 = vsel %vm136, %v1753, 0
    %1769 = vmatprep.subr.bf16.mxu0 0
    %1770 = vmatpush1.bf16.msra.mxu0 %v1762
    %1771 = vmatprep.subr.bf16.mxu0 0
    %1772 = vmatpush1.bf16.msra.mxu0 %v1763
    %1773 = vmatprep.subr.bf16.mxu0 0
    %1774 = vmatpush1.bf16.msra.mxu0 0
    %1775 = vmatprep.subr.bf16.mxu0 0
    %1776 = vmatpush1.bf16.msra.mxu0 0
    %1777 = vmatprep.subr.bf16.mxu0 0
    %1778 = vmatpush1.bf16.msra.mxu0 0
    %1779 = vmatprep.subr.bf16.mxu0 0
    %1780 = vmatpush1.bf16.msra.mxu0 0
    %1781 = vmatprep.subr.bf16.mxu0 0
    %1782 = vmatpush1.bf16.msra.mxu0 0
    %1783 = vmatprep.subr.bf16.mxu0 0
    %1784 = vmatpush1.bf16.msra.mxu0 0
    %1785 = vmatprep.subr.bf16.mxu0 0
    %1786 = vmatpush1.bf16.msra.mxu0 0
    %1787 = vmatprep.subr.bf16.mxu0 0
    %1788 = vmatpush1.bf16.msra.mxu0 0
    %1789 = vmatprep.subr.bf16.mxu0 0
    %1790 = vmatpush1.bf16.msra.mxu0 0
    %1791 = vmatprep.subr.bf16.mxu0 0
    %1792 = vmatpush1.bf16.msra.mxu0 0
    %1793 = vmatprep.subr.bf16.mxu0 0
    %1794 = vmatpush1.bf16.msra.mxu0 0
    %1795 = vmatprep.subr.bf16.mxu0 0
    %1796 = vmatpush1.bf16.msra.mxu0 0
    %1797 = vmatprep.subr.bf16.mxu0 0
    %1798 = vmatpush1.bf16.msra.mxu0 0
    %1799 = vmatprep.subr.bf16.mxu0 0
    %1800 = vmatpush1.bf16.msra.mxu0 0
    %1801 = vmatprep.mubr.bf16.mxu0 0
    %1802 = vmatmul.mubr.bf16.gmra.mrb[0].mxu0 %v1767
    %v1803 = vpop.f32.mrb[0].mxu0
    %v1804 = vadd.f32 %v1749, %v1803
    %v1805 = vpop.f32.mrb[0].mxu0
    %v1806 = vpop.f32.mrb[0].mxu0
    %v1807 = vpop.f32.mrb[0].mxu0
    %1808 = vdwg.mxu0
    %v1809 = vld [vmem:[%s8] sm:$0xf]
    %v1810 = vld [vmem:[%s8 + $0x4] sm:$0xf]
    %v1811 = vld [vmem:[%s8 + $0x8] sm:$0xf]
    %v1812 = vld [vmem:[%s8 + $0xc] sm:$0xf]
    %v1817 = vunpack.c.l.b16 %v1809
    %v1818 = vunpack.c.l.b16 %v1810
    %v1819 = vunpack.c.l.b16 %v1811
    %v1820 = vunpack.c.l.b16 %v1812
    %v1821 = vpack.c.b16 %v1818, %v1817
    %v1822 = vpack.c.b16 %v1820, %v1819
    %1825 = vmatprep.subr.bf16.mxu0 0
    %1826 = vmatpush1.bf16.msra.mxu0 %v1821
    %1827 = vmatprep.subr.bf16.mxu0 0
    %1828 = vmatpush1.bf16.msra.mxu0 %v1822
    %1829 = vmatprep.subr.bf16.mxu0 0
    %1830 = vmatpush1.bf16.msra.mxu0 0
    %1831 = vmatprep.subr.bf16.mxu0 0
    %1832 = vmatpush1.bf16.msra.mxu0 0
    %1833 = vmatprep.subr.bf16.mxu0 0
    %1834 = vmatpush1.bf16.msra.mxu0 0
    %1835 = vmatprep.subr.bf16.mxu0 0
    %1836 = vmatpush1.bf16.msra.mxu0 0
    %1837 = vmatprep.subr.bf16.mxu0 0
    %1838 = vmatpush1.bf16.msra.mxu0 0
    %1839 = vmatprep.subr.bf16.mxu0 0
    %1840 = vmatpush1.bf16.msra.mxu0 0
    %1841 = vmatprep.subr.bf16.mxu0 0
    %1842 = vmatpush1.bf16.msra.mxu0 0
    %1843 = vmatprep.subr.bf16.mxu0 0
    %1844 = vmatpush1.bf16.msra.mxu0 0
    %1845 = vmatprep.subr.bf16.mxu0 0
    %1846 = vmatpush1.bf16.msra.mxu0 0
    %1847 = vmatprep.subr.bf16.mxu0 0
    %1848 = vmatpush1.bf16.msra.mxu0 0
    %1849 = vmatprep.subr.bf16.mxu0 0
    %1850 = vmatpush1.bf16.msra.mxu0 0
    %1851 = vmatprep.subr.bf16.mxu0 0
    %1852 = vmatpush1.bf16.msra.mxu0 0
    %1853 = vmatprep.subr.bf16.mxu0 0
    %1854 = vmatpush1.bf16.msra.mxu0 0
    %1855 = vmatprep.subr.bf16.mxu0 0
    %1856 = vmatpush1.bf16.msra.mxu0 0
    %1857 = vmatprep.mubr.bf16.mxu0 0
    %1858 = vmatmul.mubr.bf16.gmra.mrb[0].mxu0 %v328
    %v1859 = vpop.f32.mrb[0].mxu0
    %v1860 = vadd.f32 0.0, %v1859
    %v1861 = vpop.f32.mrb[0].mxu0
    %v1862 = vpop.f32.mrb[0].mxu0
    %v1863 = vpop.f32.mrb[0].mxu0
    %1864 = vdwg.mxu0
    %v1865 = vadd.f32 %v1804, %v1860
    %v1866 = vmul.f32 %v1865, 0.5
    %v1867 = vtanh.pop %v1866
    %v1868 = vmul.f32 %v1867, 0.5
    %v1869 = vadd.f32 %v1868, 0.5
    %v1870 = vtanh.pop %v1865
    %v1871 = vmul.f32 %v1869, 0.0
    %1873 = vrot.lane.b32.xlu0 %v1870, 64
    %v1874 = vpop.permute.xlu0 %1873
    %v1876 = vmul.f32 %v1869, %v1874
    %1878 = vrot.lane.b32.xlu0 %v1876, 32
    %v1879 = vpop.permute.xlu0 %1878
    %v1881 = vadd.f32 %v1871, %v1879
    %v1882 = vtanh.pop %v1881
    %1884 = vrot.lane.b32.xlu0 %v1882, 64
    %v1885 = vpop.permute.xlu0 %1884
    %v1887 = vmul.f32 %v1869, %v1885
    %1889 = vrot.lane.b32.xlu0 %v1887, 32
    %v1890 = vpop.permute.xlu0 %1889
    %1892 = vst.msk [vmem:[#allocation3] sm:$0xff] %vm136, %v1890
    %v1893 = vpack.c.bf16 %v1887, %v1887
    %v1894 = vld [vmem:[%s8] sm:$0xf]
    %v1895 = vld [vmem:[%s8 + $0x4] sm:$0xf]
    %v1896 = vld [vmem:[%s8 + $0x8] sm:$0xf]
    %v1897 = vld [vmem:[%s8 + $0xc] sm:$0xf]
    %1899 = vrot.lane.b32.xlu0 %v1893, 32
    %v1900 = vpop.permute.xlu0 %1899
    %v1905 = vunpack.c.l.b16 %v1894
    %v1906 = vunpack.c.l.b16 %v1895
    %v1907 = vunpack.c.l.b16 %v1896
    %v1908 = vunpack.c.l.b16 %v1897
    %v1909 = vpack.c.b16 %v1906, %v1905
    %v1910 = vpack.c.b16 %v1908, %v1907
    %v1914 = vsel %vm136, %v1900, 0
    %1916 = vmatprep.subr.bf16.mxu0 0
    %1917 = vmatpush1.bf16.msra.mxu0 %v1909
    %1918 = vmatprep.subr.bf16.mxu0 0
    %1919 = vmatpush1.bf16.msra.mxu0 %v1910
    %1920 = vmatprep.subr.bf16.mxu0 0
    %1921 = vmatpush1.bf16.msra.mxu0 0
    %1922 = vmatprep.subr.bf16.mxu0 0
    %1923 = vmatpush1.bf16.msra.mxu0 0
    %1924 = vmatprep.subr.bf16.mxu0 0
    %1925 = vmatpush1.bf16.msra.mxu0 0
    %1926 = vmatprep.subr.bf16.mxu0 0
    %1927 = vmatpush1.bf16.msra.mxu0 0
    %1928 = vmatprep.subr.bf16.mxu0 0
    %1929 = vmatpush1.bf16.msra.mxu0 0
    %1930 = vmatprep.subr.bf16.mxu0 0
    %1931 = vmatpush1.bf16.msra.mxu0 0
    %1932 = vmatprep.subr.bf16.mxu0 0
    %1933 = vmatpush1.bf16.msra.mxu0 0
    %1934 = vmatprep.subr.bf16.mxu0 0
    %1935 = vmatpush1.bf16.msra.mxu0 0
    %1936 = vmatprep.subr.bf16.mxu0 0
    %1937 = vmatpush1.bf16.msra.mxu0 0
    %1938 = vmatprep.subr.bf16.mxu0 0
    %1939 = vmatpush1.bf16.msra.mxu0 0
    %1940 = vmatprep.subr.bf16.mxu0 0
    %1941 = vmatpush1.bf16.msra.mxu0 0
    %1942 = vmatprep.subr.bf16.mxu0 0
    %1943 = vmatpush1.bf16.msra.mxu0 0
    %1944 = vmatprep.subr.bf16.mxu0 0
    %1945 = vmatpush1.bf16.msra.mxu0 0
    %1946 = vmatprep.subr.bf16.mxu0 0
    %1947 = vmatpush1.bf16.msra.mxu0 0
    %1948 = vmatprep.mubr.bf16.mxu0 0
    %1949 = vmatmul.mubr.bf16.gmra.mrb[0].mxu0 %v1914
    %v1950 = vpop.f32.mrb[0].mxu0
    %v1951 = vadd.f32 0.0, %v1950
    %v1952 = vpop.f32.mrb[0].mxu0
    %v1953 = vpop.f32.mrb[0].mxu0
    %v1954 = vpop.f32.mrb[0].mxu0
    %1955 = vdwg.mxu0
    %v1956 = vadd.f32 %v1804, %v1951
    %v1957 = vmul.f32 %v1956, 0.5
    %v1958 = vtanh.pop %v1957
    %v1959 = vmul.f32 %v1958, 0.5
    %v1960 = vadd.f32 %v1959, 0.5
    %v1961 = vtanh.pop %v1956
    %v1962 = vmul.f32 %v1960, %v1881
    %1964 = vrot.lane.b32.xlu0 %v1961, 64
    %v1965 = vpop.permute.xlu0 %1964
    %v1967 = vmul.f32 %v1960, %v1965
    %1969 = vrot.lane.b32.xlu0 %v1967, 32
    %v1970 = vpop.permute.xlu0 %1969
    %v1972 = vadd.f32 %v1962, %v1970
    %v1973 = vtanh.pop %v1972
    %1975 = vrot.lane.b32.xlu0 %v1973, 64
    %v1976 = vpop.permute.xlu0 %1975
    %v1978 = vmul.f32 %v1960, %v1976
    %1980 = vrot.lane.b32.xlu0 %v1978, 32
    %v1981 = vpop.permute.xlu0 %1980
    %1983 = vst.msk [vmem:[#allocation3 + $0x8] sm:$0xff] %vm136, %v1981
    %v1984 = vpack.c.bf16 %v1978, %v1978
    %v1985 = vld [vmem:[%s8] sm:$0xf]
    %v1986 = vld [vmem:[%s8 + $0x4] sm:$0xf]
    %v1987 = vld [vmem:[%s8 + $0x8] sm:$0xf]
    %v1988 = vld [vmem:[%s8 + $0xc] sm:$0xf]
    %1990 = vrot.lane.b32.xlu0 %v1984, 32
    %v1991 = vpop.permute.xlu0 %1990
    %v1996 = vunpack.c.l.b16 %v1985
    %v1997 = vunpack.c.l.b16 %v1986
    %v1998 = vunpack.c.l.b16 %v1987
    %v1999 = vunpack.c.l.b16 %v1988
    %v2000 = vpack.c.b16 %v1997, %v1996
    %v2001 = vpack.c.b16 %v1999, %v1998
    %v2005 = vsel %vm136, %v1991, 0
    %2007 = vmatprep.subr.bf16.mxu0 0
    %2008 = vmatpush1.bf16.msra.mxu0 %v2000
    %2009 = vmatprep.subr.bf16.mxu0 0
    %2010 = vmatpush1.bf16.msra.mxu0 %v2001
    %2011 = vmatprep.subr.bf16.mxu0 0
    %2012 = vmatpush1.bf16.msra.mxu0 0
    %2013 = vmatprep.subr.bf16.mxu0 0
    %2014 = vmatpush1.bf16.msra.mxu0 0
    %2015 = vmatprep.subr.bf16.mxu0 0
    %2016 = vmatpush1.bf16.msra.mxu0 0
    %2017 = vmatprep.subr.bf16.mxu0 0
    %2018 = vmatpush1.bf16.msra.mxu0 0
    %2019 = vmatprep.subr.bf16.mxu0 0
    %2020 = vmatpush1.bf16.msra.mxu0 0
    %2021 = vmatprep.subr.bf16.mxu0 0
    %2022 = vmatpush1.bf16.msra.mxu0 0
    %2023 = vmatprep.subr.bf16.mxu0 0
    %2024 = vmatpush1.bf16.msra.mxu0 0
    %2025 = vmatprep.subr.bf16.mxu0 0
    %2026 = vmatpush1.bf16.msra.mxu0 0
    %2027 = vmatprep.subr.bf16.mxu0 0
    %2028 = vmatpush1.bf16.msra.mxu0 0
    %2029 = vmatprep.subr.bf16.mxu0 0
    %2030 = vmatpush1.bf16.msra.mxu0 0
    %2031 = vmatprep.subr.bf16.mxu0 0
    %2032 = vmatpush1.bf16.msra.mxu0 0
    %2033 = vmatprep.subr.bf16.mxu0 0
    %2034 = vmatpush1.bf16.msra.mxu0 0
    %2035 = vmatprep.subr.bf16.mxu0 0
    %2036 = vmatpush1.bf16.msra.mxu0 0
    %2037 = vmatprep.subr.bf16.mxu0 0
    %2038 = vmatpush1.bf16.msra.mxu0 0
    %2039 = vmatprep.mubr.bf16.mxu0 0
    %2040 = vmatmul.mubr.bf16.gmra.mrb[0].mxu0 %v2005
    %v2041 = vpop.f32.mrb[0].mxu0
    %v2042 = vadd.f32 0.0, %v2041
    %v2043 = vpop.f32.mrb[0].mxu0
    %v2044 = vpop.f32.mrb[0].mxu0
    %v2045 = vpop.f32.mrb[0].mxu0
    %2046 = vdwg.mxu0
    %v2047 = vadd.f32 %v1804, %v2042
    %v2048 = vmul.f32 %v2047, 0.5
    %v2049 = vtanh.pop %v2048
    %v2050 = vmul.f32 %v2049, 0.5
    %v2051 = vadd.f32 %v2050, 0.5
    %v2052 = vtanh.pop %v2047
    %v2053 = vmul.f32 %v2051, %v1972
    %2055 = vrot.lane.b32.xlu0 %v2052, 64
    %v2056 = vpop.permute.xlu0 %2055
    %v2058 = vmul.f32 %v2051, %v2056
    %2060 = vrot.lane.b32.xlu0 %v2058, 32
    %v2061 = vpop.permute.xlu0 %2060
    %v2063 = vadd.f32 %v2053, %v2061
    %v2064 = vtanh.pop %v2063
    %2066 = vrot.lane.b32.xlu0 %v2064, 64
    %v2067 = vpop.permute.xlu0 %2066
    %v2069 = vmul.f32 %v2051, %v2067
    %2071 = vrot.lane.b32.xlu0 %v2069, 32
    %v2072 = vpop.permute.xlu0 %2071
    %2074 = vst.msk [vmem:[#allocation3 + $0x10] sm:$0xff] %vm136, %v2072
    %v2075 = vpack.c.bf16 %v2069, %v2069
    %v2076 = vld [vmem:[%s8] sm:$0xf]
    %v2077 = vld [vmem:[%s8 + $0x4] sm:$0xf]
    %v2078 = vld [vmem:[%s8 + $0x8] sm:$0xf]
    %v2079 = vld [vmem:[%s8 + $0xc] sm:$0xf]
    %2081 = vrot.lane.b32.xlu0 %v2075, 32
    %v2082 = vpop.permute.xlu0 %2081
    %v2087 = vunpack.c.l.b16 %v2076
    %v2088 = vunpack.c.l.b16 %v2077
    %v2089 = vunpack.c.l.b16 %v2078
    %v2090 = vunpack.c.l.b16 %v2079
    %v2091 = vpack.c.b16 %v2088, %v2087
    %v2092 = vpack.c.b16 %v2090, %v2089
    %v2096 = vsel %vm136, %v2082, 0
    %2098 = vmatprep.subr.bf16.mxu0 0
    %2099 = vmatpush1.bf16.msra.mxu0 %v2091
    %2100 = vmatprep.subr.bf16.mxu0 0
    %2101 = vmatpush1.bf16.msra.mxu0 %v2092
    %2102 = vmatprep.subr.bf16.mxu0 0
    %2103 = vmatpush1.bf16.msra.mxu0 0
    %2104 = vmatprep.subr.bf16.mxu0 0
    %2105 = vmatpush1.bf16.msra.mxu0 0
    %2106 = vmatprep.subr.bf16.mxu0 0
    %2107 = vmatpush1.bf16.msra.mxu0 0
    %2108 = vmatprep.subr.bf16.mxu0 0
    %2109 = vmatpush1.bf16.msra.mxu0 0
    %2110 = vmatprep.subr.bf16.mxu0 0
    %2111 = vmatpush1.bf16.msra.mxu0 0
    %2112 = vmatprep.subr.bf16.mxu0 0
    %2113 = vmatpush1.bf16.msra.mxu0 0
    %2114 = vmatprep.subr.bf16.mxu0 0
    %2115 = vmatpush1.bf16.msra.mxu0 0
    %2116 = vmatprep.subr.bf16.mxu0 0
    %2117 = vmatpush1.bf16.msra.mxu0 0
    %2118 = vmatprep.subr.bf16.mxu0 0
    %2119 = vmatpush1.bf16.msra.mxu0 0
    %2120 = vmatprep.subr.bf16.mxu0 0
    %2121 = vmatpush1.bf16.msra.mxu0 0
    %2122 = vmatprep.subr.bf16.mxu0 0
    %2123 = vmatpush1.bf16.msra.mxu0 0
    %2124 = vmatprep.subr.bf16.mxu0 0
    %2125 = vmatpush1.bf16.msra.mxu0 0
    %2126 = vmatprep.subr.bf16.mxu0 0
    %2127 = vmatpush1.bf16.msra.mxu0 0
    %2128 = vmatprep.subr.bf16.mxu0 0
    %2129 = vmatpush1.bf16.msra.mxu0 0
    %2130 = vmatprep.mubr.bf16.mxu0 0
    %2131 = vmatmul.mubr.bf16.gmra.mrb[0].mxu0 %v2096
    %v2132 = vpop.f32.mrb[0].mxu0
    %v2133 = vadd.f32 0.0, %v2132
    %v2134 = vpop.f32.mrb[0].mxu0
    %v2135 = vpop.f32.mrb[0].mxu0
    %v2136 = vpop.f32.mrb[0].mxu0
    %2137 = vdwg.mxu0
    %v2138 = vadd.f32 %v1804, %v2133
    %v2139 = vmul.f32 %v2138, 0.5
    %v2140 = vtanh.pop %v2139
    %v2141 = vmul.f32 %v2140, 0.5
    %v2142 = vadd.f32 %v2141, 0.5
    %v2143 = vtanh.pop %v2138
    %v2144 = vmul.f32 %v2142, %v2063
    %2146 = vrot.lane.b32.xlu0 %v2143, 64
    %v2147 = vpop.permute.xlu0 %2146
    %v2149 = vmul.f32 %v2142, %v2147
    %2151 = vrot.lane.b32.xlu0 %v2149, 32
    %v2152 = vpop.permute.xlu0 %2151
    %v2154 = vadd.f32 %v2144, %v2152
    %v2155 = vtanh.pop %v2154
    %2157 = vrot.lane.b32.xlu0 %v2155, 64
    %v2158 = vpop.permute.xlu0 %2157
    %v2160 = vmul.f32 %v2142, %v2158
    %2162 = vrot.lane.b32.xlu0 %v2160, 32
    %v2163 = vpop.permute.xlu0 %2162
    %2165 = vst.msk [vmem:[#allocation3 + $0x18] sm:$0xff] %vm136, %v2163
    %v2166 = vpack.c.bf16 %v2160, %v2160
    %v2167 = vld [vmem:[%s8] sm:$0xf]
    %v2168 = vld [vmem:[%s8 + $0x4] sm:$0xf]
    %v2169 = vld [vmem:[%s8 + $0x8] sm:$0xf]
    %v2170 = vld [vmem:[%s8 + $0xc] sm:$0xf]
    %2172 = vrot.lane.b32.xlu0 %v2166, 32
    %v2173 = vpop.permute.xlu0 %2172
    %v2178 = vunpack.c.l.b16 %v2167
    %v2179 = vunpack.c.l.b16 %v2168
    %v2180 = vunpack.c.l.b16 %v2169
    %v2181 = vunpack.c.l.b16 %v2170
    %v2182 = vpack.c.b16 %v2179, %v2178
    %v2183 = vpack.c.b16 %v2181, %v2180
    %v2187 = vsel %vm136, %v2173, 0
    %2189 = vmatprep.subr.bf16.mxu0 0
    %2190 = vmatpush1.bf16.msra.mxu0 %v2182
    %2191 = vmatprep.subr.bf16.mxu0 0
    %2192 = vmatpush1.bf16.msra.mxu0 %v2183
    %2193 = vmatprep.subr.bf16.mxu0 0
    %2194 = vmatpush1.bf16.msra.mxu0 0
    %2195 = vmatprep.subr.bf16.mxu0 0
    %2196 = vmatpush1.bf16.msra.mxu0 0
    %2197 = vmatprep.subr.bf16.mxu0 0
    %2198 = vmatpush1.bf16.msra.mxu0 0
    %2199 = vmatprep.subr.bf16.mxu0 0
    %2200 = vmatpush1.bf16.msra.mxu0 0
    %2201 = vmatprep.subr.bf16.mxu0 0
    %2202 = vmatpush1.bf16.msra.mxu0 0
    %2203 = vmatprep.subr.bf16.mxu0 0
    %2204 = vmatpush1.bf16.msra.mxu0 0
    %2205 = vmatprep.subr.bf16.mxu0 0
    %2206 = vmatpush1.bf16.msra.mxu0 0
    %2207 = vmatprep.subr.bf16.mxu0 0
    %2208 = vmatpush1.bf16.msra.mxu0 0
    %2209 = vmatprep.subr.bf16.mxu0 0
    %2210 = vmatpush1.bf16.msra.mxu0 0
    %2211 = vmatprep.subr.bf16.mxu0 0
    %2212 = vmatpush1.bf16.msra.mxu0 0
    %2213 = vmatprep.subr.bf16.mxu0 0
    %2214 = vmatpush1.bf16.msra.mxu0 0
    %2215 = vmatprep.subr.bf16.mxu0 0
    %2216 = vmatpush1.bf16.msra.mxu0 0
    %2217 = vmatprep.subr.bf16.mxu0 0
    %2218 = vmatpush1.bf16.msra.mxu0 0
    %2219 = vmatprep.subr.bf16.mxu0 0
    %2220 = vmatpush1.bf16.msra.mxu0 0
    %2221 = vmatprep.mubr.bf16.mxu0 0
    %2222 = vmatmul.mubr.bf16.gmra.mrb[0].mxu0 %v2187
    %v2223 = vpop.f32.mrb[0].mxu0
    %v2224 = vadd.f32 0.0, %v2223
    %v2225 = vpop.f32.mrb[0].mxu0
    %v2226 = vpop.f32.mrb[0].mxu0
    %v2227 = vpop.f32.mrb[0].mxu0
    %2228 = vdwg.mxu0
    %v2229 = vadd.f32 %v1804, %v2224
    %v2230 = vmul.f32 %v2229, 0.5
    %v2231 = vtanh.pop %v2230
    %v2232 = vmul.f32 %v2231, 0.5
    %v2233 = vadd.f32 %v2232, 0.5
    %v2234 = vtanh.pop %v2229
    %v2235 = vmul.f32 %v2233, %v2154
    %2237 = vrot.lane.b32.xlu0 %v2234, 64
    %v2238 = vpop.permute.xlu0 %2237
    %v2240 = vmul.f32 %v2233, %v2238
    %2242 = vrot.lane.b32.xlu0 %v2240, 32
    %v2243 = vpop.permute.xlu0 %2242
    %v2245 = vadd.f32 %v2235, %v2243
    %v2246 = vtanh.pop %v2245
    %2248 = vrot.lane.b32.xlu0 %v2246, 64
    %v2249 = vpop.permute.xlu0 %2248
    %v2251 = vmul.f32 %v2233, %v2249
    %2253 = vrot.lane.b32.xlu0 %v2251, 32
    %v2254 = vpop.permute.xlu0 %2253
    %2256 = vst.msk [vmem:[#allocation3 + $0x20] sm:$0xff] %vm136, %v2254
    %v2257 = vpack.c.bf16 %v2251, %v2251
    %v2258 = vld [vmem:[%s8] sm:$0xf]
    %v2259 = vld [vmem:[%s8 + $0x4] sm:$0xf]
    %v2260 = vld [vmem:[%s8 + $0x8] sm:$0xf]
    %v2261 = vld [vmem:[%s8 + $0xc] sm:$0xf]
    %2263 = vrot.lane.b32.xlu0 %v2257, 32
    %v2264 = vpop.permute.xlu0 %2263
    %v2269 = vunpack.c.l.b16 %v2258
    %v2270 = vunpack.c.l.b16 %v2259
    %v2271 = vunpack.c.l.b16 %v2260
    %v2272 = vunpack.c.l.b16 %v2261
    %v2273 = vpack.c.b16 %v2270, %v2269
    %v2274 = vpack.c.b16 %v2272, %v2271
    %v2278 = vsel %vm136, %v2264, 0
    %2280 = vmatprep.subr.bf16.mxu0 0
    %2281 = vmatpush1.bf16.msra.mxu0 %v2273
    %2282 = vmatprep.subr.bf16.mxu0 0
    %2283 = vmatpush1.bf16.msra.mxu0 %v2274
    %2284 = vmatprep.subr.bf16.mxu0 0
    %2285 = vmatpush1.bf16.msra.mxu0 0
    %2286 = vmatprep.subr.bf16.mxu0 0
    %2287 = vmatpush1.bf16.msra.mxu0 0
    %2288 = vmatprep.subr.bf16.mxu0 0
    %2289 = vmatpush1.bf16.msra.mxu0 0
    %2290 = vmatprep.subr.bf16.mxu0 0
    %2291 = vmatpush1.bf16.msra.mxu0 0
    %2292 = vmatprep.subr.bf16.mxu0 0
    %2293 = vmatpush1.bf16.msra.mxu0 0
    %2294 = vmatprep.subr.bf16.mxu0 0
    %2295 = vmatpush1.bf16.msra.mxu0 0
    %2296 = vmatprep.subr.bf16.mxu0 0
    %2297 = vmatpush1.bf16.msra.mxu0 0
    %2298 = vmatprep.subr.bf16.mxu0 0
    %2299 = vmatpush1.bf16.msra.mxu0 0
    %2300 = vmatprep.subr.bf16.mxu0 0
    %2301 = vmatpush1.bf16.msra.mxu0 0
    %2302 = vmatprep.subr.bf16.mxu0 0
    %2303 = vmatpush1.bf16.msra.mxu0 0
    %2304 = vmatprep.subr.bf16.mxu0 0
    %2305 = vmatpush1.bf16.msra.mxu0 0
    %2306 = vmatprep.subr.bf16.mxu0 0
    %2307 = vmatpush1.bf16.msra.mxu0 0
    %2308 = vmatprep.subr.bf16.mxu0 0
    %2309 = vmatpush1.bf16.msra.mxu0 0
    %2310 = vmatprep.subr.bf16.mxu0 0
    %2311 = vmatpush1.bf16.msra.mxu0 0
    %2312 = vmatprep.mubr.bf16.mxu0 0
    %2313 = vmatmul.mubr.bf16.gmra.mrb[0].mxu0 %v2278
    %v2314 = vpop.f32.mrb[0].mxu0
    %v2315 = vadd.f32 0.0, %v2314
    %v2316 = vpop.f32.mrb[0].mxu0
    %v2317 = vpop.f32.mrb[0].mxu0
    %v2318 = vpop.f32.mrb[0].mxu0
    %2319 = vdwg.mxu0
    %v2320 = vadd.f32 %v1804, %v2315
    %v2321 = vmul.f32 %v2320, 0.5
    %v2322 = vtanh.pop %v2321
    %v2323 = vmul.f32 %v2322, 0.5
    %v2324 = vadd.f32 %v2323, 0.5
    %v2325 = vtanh.pop %v2320
    %v2326 = vmul.f32 %v2324, %v2245
    %2328 = vrot.lane.b32.xlu0 %v2325, 64
    %v2329 = vpop.permute.xlu0 %2328
    %v2331 = vmul.f32 %v2324, %v2329
    %2333 = vrot.lane.b32.xlu0 %v2331, 32
    %v2334 = vpop.permute.xlu0 %2333
    %v2336 = vadd.f32 %v2326, %v2334
    %v2337 = vtanh.pop %v2336
    %2339 = vrot.lane.b32.xlu0 %v2337, 64
    %v2340 = vpop.permute.xlu0 %2339
    %v2342 = vmul.f32 %v2324, %v2340
    %2344 = vrot.lane.b32.xlu0 %v2342, 32
    %v2345 = vpop.permute.xlu0 %2344
    %2347 = vst.msk [vmem:[#allocation3 + $0x28] sm:$0xff] %vm136, %v2345
    %v2348 = vpack.c.bf16 %v2342, %v2342
    %v2349 = vld [vmem:[%s8] sm:$0xf]
    %v2350 = vld [vmem:[%s8 + $0x4] sm:$0xf]
    %v2351 = vld [vmem:[%s8 + $0x8] sm:$0xf]
    %v2352 = vld [vmem:[%s8 + $0xc] sm:$0xf]
    %2354 = vrot.lane.b32.xlu0 %v2348, 32
    %v2355 = vpop.permute.xlu0 %2354
    %v2360 = vunpack.c.l.b16 %v2349
    %v2361 = vunpack.c.l.b16 %v2350
    %v2362 = vunpack.c.l.b16 %v2351
    %v2363 = vunpack.c.l.b16 %v2352
    %v2364 = vpack.c.b16 %v2361, %v2360
    %v2365 = vpack.c.b16 %v2363, %v2362
    %v2369 = vsel %vm136, %v2355, 0
    %2371 = vmatprep.subr.bf16.mxu0 0
    %2372 = vmatpush1.bf16.msra.mxu0 %v2364
    %2373 = vmatprep.subr.bf16.mxu0 0
    %2374 = vmatpush1.bf16.msra.mxu0 %v2365
    %2375 = vmatprep.subr.bf16.mxu0 0
    %2376 = vmatpush1.bf16.msra.mxu0 0
    %2377 = vmatprep.subr.bf16.mxu0 0
    %2378 = vmatpush1.bf16.msra.mxu0 0
    %2379 = vmatprep.subr.bf16.mxu0 0
    %2380 = vmatpush1.bf16.msra.mxu0 0
    %2381 = vmatprep.subr.bf16.mxu0 0
    %2382 = vmatpush1.bf16.msra.mxu0 0
    %2383 = vmatprep.subr.bf16.mxu0 0
    %2384 = vmatpush1.bf16.msra.mxu0 0
    %2385 = vmatprep.subr.bf16.mxu0 0
    %2386 = vmatpush1.bf16.msra.mxu0 0
    %2387 = vmatprep.subr.bf16.mxu0 0
    %2388 = vmatpush1.bf16.msra.mxu0 0
    %2389 = vmatprep.subr.bf16.mxu0 0
    %2390 = vmatpush1.bf16.msra.mxu0 0
    %2391 = vmatprep.subr.bf16.mxu0 0
    %2392 = vmatpush1.bf16.msra.mxu0 0
    %2393 = vmatprep.subr.bf16.mxu0 0
    %2394 = vmatpush1.bf16.msra.mxu0 0
    %2395 = vmatprep.subr.bf16.mxu0 0
    %2396 = vmatpush1.bf16.msra.mxu0 0
    %2397 = vmatprep.subr.bf16.mxu0 0
    %2398 = vmatpush1.bf16.msra.mxu0 0
    %2399 = vmatprep.subr.bf16.mxu0 0
    %2400 = vmatpush1.bf16.msra.mxu0 0
    %2401 = vmatprep.subr.bf16.mxu0 0
    %2402 = vmatpush1.bf16.msra.mxu0 0
    %2403 = vmatprep.mubr.bf16.mxu0 0
    %2404 = vmatmul.mubr.bf16.gmra.mrb[0].mxu0 %v2369
    %v2405 = vpop.f32.mrb[0].mxu0
    %v2406 = vadd.f32 0.0, %v2405
    %v2407 = vpop.f32.mrb[0].mxu0
    %v2408 = vpop.f32.mrb[0].mxu0
    %v2409 = vpop.f32.mrb[0].mxu0
    %2410 = vdwg.mxu0
    %v2411 = vadd.f32 %v1804, %v2406
    %v2412 = vmul.f32 %v2411, 0.5
    %v2413 = vtanh.pop %v2412
    %v2414 = vmul.f32 %v2413, 0.5
    %v2415 = vadd.f32 %v2414, 0.5
    %v2416 = vtanh.pop %v2411
    %v2417 = vmul.f32 %v2415, %v2336
    %2419 = vrot.lane.b32.xlu0 %v2416, 64
    %v2420 = vpop.permute.xlu0 %2419
    %v2422 = vmul.f32 %v2415, %v2420
    %2424 = vrot.lane.b32.xlu0 %v2422, 32
    %v2425 = vpop.permute.xlu0 %2424
    %v2427 = vadd.f32 %v2417, %v2425
    %v2428 = vtanh.pop %v2427
    %2430 = vrot.lane.b32.xlu0 %v2428, 64
    %v2431 = vpop.permute.xlu0 %2430
    %v2433 = vmul.f32 %v2415, %v2431
    %2435 = vrot.lane.b32.xlu0 %v2433, 32
    %v2436 = vpop.permute.xlu0 %2435
    %2438 = vst.msk [vmem:[#allocation3 + $0x30] sm:$0xff] %vm136, %v2436
    %v2439 = vpack.c.bf16 %v2433, %v2433
    %v2440 = vld [vmem:[%s8] sm:$0xf]
    %v2441 = vld [vmem:[%s8 + $0x4] sm:$0xf]
    %v2442 = vld [vmem:[%s8 + $0x8] sm:$0xf]
    %v2443 = vld [vmem:[%s8 + $0xc] sm:$0xf]
    %2445 = vrot.lane.b32.xlu0 %v2439, 32
    %v2446 = vpop.permute.xlu0 %2445
    %v2451 = vunpack.c.l.b16 %v2440
    %v2452 = vunpack.c.l.b16 %v2441
    %v2453 = vunpack.c.l.b16 %v2442
    %v2454 = vunpack.c.l.b16 %v2443
    %v2455 = vpack.c.b16 %v2452, %v2451
    %v2456 = vpack.c.b16 %v2454, %v2453
    %v2460 = vsel %vm136, %v2446, 0
    %2462 = vmatprep.subr.bf16.mxu0 0
    %2463 = vmatpush1.bf16.msra.mxu0 %v2455
    %2464 = vmatprep.subr.bf16.mxu0 0
    %2465 = vmatpush1.bf16.msra.mxu0 %v2456
    %2466 = vmatprep.subr.bf16.mxu0 0
    %2467 = vmatpush1.bf16.msra.mxu0 0
    %2468 = vmatprep.subr.bf16.mxu0 0
    %2469 = vmatpush1.bf16.msra.mxu0 0
    %2470 = vmatprep.subr.bf16.mxu0 0
    %2471 = vmatpush1.bf16.msra.mxu0 0
    %2472 = vmatprep.subr.bf16.mxu0 0
    %2473 = vmatpush1.bf16.msra.mxu0 0
    %2474 = vmatprep.subr.bf16.mxu0 0
    %2475 = vmatpush1.bf16.msra.mxu0 0
    %2476 = vmatprep.subr.bf16.mxu0 0
    %2477 = vmatpush1.bf16.msra.mxu0 0
    %2478 = vmatprep.subr.bf16.mxu0 0
    %2479 = vmatpush1.bf16.msra.mxu0 0
    %2480 = vmatprep.subr.bf16.mxu0 0
    %2481 = vmatpush1.bf16.msra.mxu0 0
    %2482 = vmatprep.subr.bf16.mxu0 0
    %2483 = vmatpush1.bf16.msra.mxu0 0
    %2484 = vmatprep.subr.bf16.mxu0 0
    %2485 = vmatpush1.bf16.msra.mxu0 0
    %2486 = vmatprep.subr.bf16.mxu0 0
    %2487 = vmatpush1.bf16.msra.mxu0 0
    %2488 = vmatprep.subr.bf16.mxu0 0
    %2489 = vmatpush1.bf16.msra.mxu0 0
    %2490 = vmatprep.subr.bf16.mxu0 0
    %2491 = vmatpush1.bf16.msra.mxu0 0
    %2492 = vmatprep.subr.bf16.mxu0 0
    %2493 = vmatpush1.bf16.msra.mxu0 0
    %2494 = vmatprep.mubr.bf16.mxu0 0
    %2495 = vmatmul.mubr.bf16.gmra.mrb[0].mxu0 %v2460
    %v2496 = vpop.f32.mrb[0].mxu0
    %v2497 = vadd.f32 0.0, %v2496
    %v2498 = vpop.f32.mrb[0].mxu0
    %v2499 = vpop.f32.mrb[0].mxu0
    %v2500 = vpop.f32.mrb[0].mxu0
    %2501 = vdwg.mxu0
    %v2502 = vadd.f32 %v1804, %v2497
    %v2503 = vmul.f32 %v2502, 0.5
    %v2504 = vtanh.pop %v2503
    %v2505 = vmul.f32 %v2504, 0.5
    %v2506 = vadd.f32 %v2505, 0.5
    %v2507 = vtanh.pop %v2502
    %v2508 = vmul.f32 %v2506, %v2427
    %2510 = vrot.lane.b32.xlu0 %v2507, 64
    %v2511 = vpop.permute.xlu0 %2510
    %v2513 = vmul.f32 %v2506, %v2511
    %2515 = vrot.lane.b32.xlu0 %v2513, 32
    %v2516 = vpop.permute.xlu0 %2515
    %v2518 = vadd.f32 %v2508, %v2516
    %v2519 = vtanh.pop %v2518
    %2521 = vrot.lane.b32.xlu0 %v2519, 64
    %v2522 = vpop.permute.xlu0 %2521
    %v2524 = vmul.f32 %v2506, %v2522
    %2526 = vrot.lane.b32.xlu0 %v2524, 32
    %v2527 = vpop.permute.xlu0 %2526
    %2529 = vst.msk [vmem:[#allocation3 + $0x38] sm:$0xff] %vm136, %v2527
    %v2530 = vld [vmem:[#allocation3] sm:$0xff]
    %v2531 = vld [vmem:[#allocation3 + $0x8] sm:$0xff]
    %v2532 = vld [vmem:[#allocation3 + $0x10] sm:$0xff]
    %v2533 = vld [vmem:[#allocation3 + $0x18] sm:$0xff]
    %v2534 = vld [vmem:[#allocation3 + $0x20] sm:$0xff]
    %v2535 = vld [vmem:[#allocation3 + $0x28] sm:$0xff]
    %v2536 = vld [vmem:[#allocation3 + $0x30] sm:$0xff]
    %v2537 = vld [vmem:[#allocation3 + $0x38] sm:$0xff]
    %v2538 = vpack.c.bf16 %v2531, %v2530
    %v2539 = vpack.c.bf16 %v2533, %v2532
    %v2540 = vpack.c.bf16 %v2535, %v2534
    %v2541 = vpack.c.bf16 %v2537, %v2536
    %v2542 = vld [vmem:[#allocation12] sm:$0xf]
    %v2543 = vld [vmem:[#allocation12 + $0x4] sm:$0xf]
    %v2544 = vld [vmem:[#allocation12 + $0x8] sm:$0xf]
    %v2545 = vld [vmem:[#allocation12 + $0xc] sm:$0xf]
    %v2546 = vld [vmem:[%s12] sm:$0x1]
    %v2548 = vlaneseq
    %v2549 = vshrl.u32 %v2548, 7
    %v2550 = vsub.s32 0, %v2549
    %v2551 = vrot.slane %v2546, %v2550
    %v2557 = vunpack.c.l.b16 %v2542
    %v2558 = vunpack.c.l.b16 %v2543
    %v2559 = vunpack.c.l.b16 %v2544
    %v2560 = vunpack.c.l.b16 %v2545
    %v2561 = vpack.c.b16 %v2558, %v2557
    %v2562 = vpack.c.b16 %v2560, %v2559
    %v2566 = vsel %vm136, %v2538, 0
    %v2569 = vsel %vm136, %v2539, 0
    %v2572 = vsel %vm136, %v2540, 0
    %v2575 = vsel %vm136, %v2541, 0
    %2577 = vmatprep.subr.bf16.mxu0 0
    %2578 = vmatpush1.bf16.msra.mxu0 %v2561
    %2579 = vmatprep.subr.bf16.mxu0 0
    %2580 = vmatpush1.bf16.msra.mxu0 %v2562
    %2581 = vmatprep.subr.bf16.mxu0 0
    %2582 = vmatpush1.bf16.msra.mxu0 0
    %2583 = vmatprep.subr.bf16.mxu0 0
    %2584 = vmatpush1.bf16.msra.mxu0 0
    %2585 = vmatprep.subr.bf16.mxu0 0
    %2586 = vmatpush1.bf16.msra.mxu0 0
    %2587 = vmatprep.subr.bf16.mxu0 0
    %2588 = vmatpush1.bf16.msra.mxu0 0
    %2589 = vmatprep.subr.bf16.mxu0 0
    %2590 = vmatpush1.bf16.msra.mxu0 0
    %2591 = vmatprep.subr.bf16.mxu0 0
    %2592 = vmatpush1.bf16.msra.mxu0 0
    %2593 = vmatprep.subr.bf16.mxu0 0
    %2594 = vmatpush1.bf16.msra.mxu0 0
    %2595 = vmatprep.subr.bf16.mxu0 0
    %2596 = vmatpush1.bf16.msra.mxu0 0
    %2597 = vmatprep.subr.bf16.mxu0 0
    %2598 = vmatpush1.bf16.msra.mxu0 0
    %2599 = vmatprep.subr.bf16.mxu0 0
    %2600 = vmatpush1.bf16.msra.mxu0 0
    %2601 = vmatprep.subr.bf16.mxu0 0
    %2602 = vmatpush1.bf16.msra.mxu0 0
    %2603 = vmatprep.subr.bf16.mxu0 0
    %2604 = vmatpush1.bf16.msra.mxu0 0
    %2605 = vmatprep.subr.bf16.mxu0 0
    %2606 = vmatpush1.bf16.msra.mxu0 0
    %2607 = vmatprep.subr.bf16.mxu0 0
    %2608 = vmatpush1.bf16.msra.mxu0 0
    %2609 = vmatprep.mubr.bf16.mxu0 0
    %2610 = vmatmul.mubr.bf16.gmra.mrb[0].mxu0 %v2566
    %v2611 = vpop.f32.mrb[0].mxu0
    %v2612 = vadd.f32 %v2551, %v2611
    %v2613 = vpop.f32.mrb[0].mxu0
    %v2614 = vpop.f32.mrb[0].mxu0
    %v2615 = vadd.f32 %v2551, %v2614
    %v2616 = vpop.f32.mrb[0].mxu0
    %2617 = vmatprep.mubr.bf16.mxu0 0
    %2618 = vmatmul.mubr.bf16.gmra.mrb[0].mxu0 %v2569
    %v2619 = vpop.f32.mrb[0].mxu0
    %v2620 = vadd.f32 %v2551, %v2619
    %v2621 = vpop.f32.mrb[0].mxu0
    %v2622 = vpop.f32.mrb[0].mxu0
    %v2623 = vadd.f32 %v2551, %v2622
    %v2624 = vpop.f32.mrb[0].mxu0
    %2625 = vmatprep.mubr.bf16.mxu0 0
    %2626 = vmatmul.mubr.bf16.gmra.mrb[0].mxu0 %v2572
    %v2627 = vpop.f32.mrb[0].mxu0
    %v2628 = vadd.f32 %v2551, %v2627
    %v2629 = vpop.f32.mrb[0].mxu0
    %v2630 = vpop.f32.mrb[0].mxu0
    %v2631 = vadd.f32 %v2551, %v2630
    %v2632 = vpop.f32.mrb[0].mxu0
    %2633 = vmatprep.mubr.bf16.mxu0 0
    %2634 = vmatmul.mubr.bf16.gmra.mrb[0].mxu0 %v2575
    %v2635 = vpop.f32.mrb[0].mxu0
    %v2636 = vadd.f32 %v2551, %v2635
    %v2637 = vpop.f32.mrb[0].mxu0
    %v2638 = vpop.f32.mrb[0].mxu0
    %v2639 = vadd.f32 %v2551, %v2638
    %v2640 = vpop.f32.mrb[0].mxu0
    %2641 = vdwg.mxu0
    %2642 = vst [vmem:[#allocation2] sm:$0xff] %v2612
    %2643 = vst [vmem:[#allocation2 + $0x8] sm:$0xff] %v2615
    %2644 = vst [vmem:[#allocation2 + $0x10] sm:$0xff] %v2620
    %2645 = vst [vmem:[#allocation2 + $0x18] sm:$0xff] %v2623
    %2646 = vst [vmem:[#allocation2 + $0x20] sm:$0xff] %v2628
    %2647 = vst [vmem:[#allocation2 + $0x28] sm:$0xff] %v2631
    %2648 = vst [vmem:[#allocation2 + $0x30] sm:$0xff] %v2636
    %2649 = vst [vmem:[#allocation2 + $0x38] sm:$0xff] %v2639
    %v2650 = vld [vmem:[#allocation2] sm:$0xff]
    %v2651 = vld [vmem:[#allocation14] sm:$0xf]
    %v2652 = vld [vmem:[#allocation14 + $0x4] sm:$0xf]
    %v2653 = vld [vmem:[#allocation14 + $0x8] sm:$0xf]
    %v2654 = vld [vmem:[#allocation14 + $0xc] sm:$0xf]
    %v2659 = vunpack.c.l.b16 %v2651
    %v2660 = vunpack.c.l.b16 %v2652
    %v2661 = vunpack.c.l.b16 %v2653
    %v2662 = vunpack.c.l.b16 %v2654
    %v2663 = vpack.c.b16 %v2660, %v2659
    %v2664 = vpack.c.b16 %v2662, %v2661
    %2667 = vmatprep.subr.bf16.mxu0 0
    %2668 = vmatpush1.bf16.msra.mxu0 %v2663
    %2669 = vmatprep.subr.bf16.mxu0 0
    %2670 = vmatpush1.bf16.msra.mxu0 %v2664
    %2671 = vmatprep.subr.bf16.mxu0 0
    %2672 = vmatpush1.bf16.msra.mxu0 0
    %2673 = vmatprep.subr.bf16.mxu0 0
    %2674 = vmatpush1.bf16.msra.mxu0 0
    %2675 = vmatprep.subr.bf16.mxu0 0
    %2676 = vmatpush1.bf16.msra.mxu0 0
    %2677 = vmatprep.subr.bf16.mxu0 0
    %2678 = vmatpush1.bf16.msra.mxu0 0
    %2679 = vmatprep.subr.bf16.mxu0 0
    %2680 = vmatpush1.bf16.msra.mxu0 0
    %2681 = vmatprep.subr.bf16.mxu0 0
    %2682 = vmatpush1.bf16.msra.mxu0 0
    %2683 = vmatprep.subr.bf16.mxu0 0
    %2684 = vmatpush1.bf16.msra.mxu0 0
    %2685 = vmatprep.subr.bf16.mxu0 0
    %2686 = vmatpush1.bf16.msra.mxu0 0
    %2687 = vmatprep.subr.bf16.mxu0 0
    %2688 = vmatpush1.bf16.msra.mxu0 0
    %2689 = vmatprep.subr.bf16.mxu0 0
    %2690 = vmatpush1.bf16.msra.mxu0 0
    %2691 = vmatprep.subr.bf16.mxu0 0
    %2692 = vmatpush1.bf16.msra.mxu0 0
    %2693 = vmatprep.subr.bf16.mxu0 0
    %2694 = vmatpush1.bf16.msra.mxu0 0
    %2695 = vmatprep.subr.bf16.mxu0 0
    %2696 = vmatpush1.bf16.msra.mxu0 0
    %2697 = vmatprep.subr.bf16.mxu0 0
    %2698 = vmatpush1.bf16.msra.mxu0 0
    %2699 = vmatprep.mubr.bf16.mxu0 0
    %2700 = vmatmul.mubr.bf16.gmra.mrb[0].mxu0 %v328
    %v2701 = vpop.f32.mrb[0].mxu0
    %v2702 = vadd.f32 0.0, %v2701
    %v2703 = vpop.f32.mrb[0].mxu0
    %v2704 = vpop.f32.mrb[0].mxu0
    %v2705 = vpop.f32.mrb[0].mxu0
    %2706 = vdwg.mxu0
    %v2707 = vadd.f32 %v2650, %v2702
    %v2708 = vmul.f32 %v2707, 0.5
    %v2709 = vtanh.pop %v2708
    %v2710 = vmul.f32 %v2709, 0.5
    %v2711 = vadd.f32 %v2710, 0.5
    %v2712 = vtanh.pop %v2707
    %v2713 = vmul.f32 %v2711, 0.0
    %2715 = vrot.lane.b32.xlu0 %v2712, 64
    %v2716 = vpop.permute.xlu0 %2715
    %v2718 = vmul.f32 %v2711, %v2716
    %2720 = vrot.lane.b32.xlu0 %v2718, 32
    %v2721 = vpop.permute.xlu0 %2720
    %v2723 = vadd.f32 %v2713, %v2721
    %v2724 = vtanh.pop %v2723
    %2726 = vrot.lane.b32.xlu0 %v2724, 64
    %v2727 = vpop.permute.xlu0 %2726
    %v2729 = vmul.f32 %v2711, %v2727
    %2731 = vrot.lane.b32.xlu0 %v2729, 32
    %v2732 = vpop.permute.xlu0 %2731
    %2734 = vst.msk [vmem:[%s13] sm:$0x3] %vm146, %v2732
    %v2735 = vld [vmem:[#allocation2 + $0x8] sm:$0xff]
    %v2736 = vpack.c.bf16 %v2729, %v2729
    %v2737 = vld [vmem:[#allocation14] sm:$0xf]
    %v2738 = vld [vmem:[#allocation14 + $0x4] sm:$0xf]
    %v2739 = vld [vmem:[#allocation14 + $0x8] sm:$0xf]
    %v2740 = vld [vmem:[#allocation14 + $0xc] sm:$0xf]
    %2742 = vrot.lane.b32.xlu0 %v2736, 32
    %v2743 = vpop.permute.xlu0 %2742
    %v2748 = vunpack.c.l.b16 %v2737
    %v2749 = vunpack.c.l.b16 %v2738
    %v2750 = vunpack.c.l.b16 %v2739
    %v2751 = vunpack.c.l.b16 %v2740
    %v2752 = vpack.c.b16 %v2749, %v2748
    %v2753 = vpack.c.b16 %v2751, %v2750
    %v2757 = vsel %vm136, %v2743, 0
    %2759 = vmatprep.subr.bf16.mxu0 0
    %2760 = vmatpush1.bf16.msra.mxu0 %v2752
    %2761 = vmatprep.subr.bf16.mxu0 0
    %2762 = vmatpush1.bf16.msra.mxu0 %v2753
    %2763 = vmatprep.subr.bf16.mxu0 0
    %2764 = vmatpush1.bf16.msra.mxu0 0
    %2765 = vmatprep.subr.bf16.mxu0 0
    %2766 = vmatpush1.bf16.msra.mxu0 0
    %2767 = vmatprep.subr.bf16.mxu0 0
    %2768 = vmatpush1.bf16.msra.mxu0 0
    %2769 = vmatprep.subr.bf16.mxu0 0
    %2770 = vmatpush1.bf16.msra.mxu0 0
    %2771 = vmatprep.subr.bf16.mxu0 0
    %2772 = vmatpush1.bf16.msra.mxu0 0
    %2773 = vmatprep.subr.bf16.mxu0 0
    %2774 = vmatpush1.bf16.msra.mxu0 0
    %2775 = vmatprep.subr.bf16.mxu0 0
    %2776 = vmatpush1.bf16.msra.mxu0 0
    %2777 = vmatprep.subr.bf16.mxu0 0
    %2778 = vmatpush1.bf16.msra.mxu0 0
    %2779 = vmatprep.subr.bf16.mxu0 0
    %2780 = vmatpush1.bf16.msra.mxu0 0
    %2781 = vmatprep.subr.bf16.mxu0 0
    %2782 = vmatpush1.bf16.msra.mxu0 0
    %2783 = vmatprep.subr.bf16.mxu0 0
    %2784 = vmatpush1.bf16.msra.mxu0 0
    %2785 = vmatprep.subr.bf16.mxu0 0
    %2786 = vmatpush1.bf16.msra.mxu0 0
    %2787 = vmatprep.subr.bf16.mxu0 0
    %2788 = vmatpush1.bf16.msra.mxu0 0
    %2789 = vmatprep.subr.bf16.mxu0 0
    %2790 = vmatpush1.bf16.msra.mxu0 0
    %2791 = vmatprep.mubr.bf16.mxu0 0
    %2792 = vmatmul.mubr.bf16.gmra.mrb[0].mxu0 %v2757
    %v2793 = vpop.f32.mrb[0].mxu0
    %v2794 = vadd.f32 0.0, %v2793
    %v2795 = vpop.f32.mrb[0].mxu0
    %v2796 = vpop.f32.mrb[0].mxu0
    %v2797 = vpop.f32.mrb[0].mxu0
    %2798 = vdwg.mxu0
    %v2799 = vadd.f32 %v2735, %v2794
    %v2800 = vmul.f32 %v2799, 0.5
    %v2801 = vtanh.pop %v2800
    %v2802 = vmul.f32 %v2801, 0.5
    %v2803 = vadd.f32 %v2802, 0.5
    %v2804 = vtanh.pop %v2799
    %v2805 = vmul.f32 %v2803, %v2723
    %2807 = vrot.lane.b32.xlu0 %v2804, 64
    %v2808 = vpop.permute.xlu0 %2807
    %v2810 = vmul.f32 %v2803, %v2808
    %2812 = vrot.lane.b32.xlu0 %v2810, 32
    %v2813 = vpop.permute.xlu0 %2812
    %v2815 = vadd.f32 %v2805, %v2813
    %v2816 = vtanh.pop %v2815
    %2818 = vrot.lane.b32.xlu0 %v2816, 64
    %v2819 = vpop.permute.xlu0 %2818
    %v2821 = vmul.f32 %v2803, %v2819
    %2823 = vrot.lane.b32.xlu0 %v2821, 40
    %v2824 = vpop.permute.xlu0 %2823
    %vm2826 = vcmask 123968
    %2827 = vst.msk [vmem:[%s13] sm:$0x3] %vm2826, %v2824
    %v2828 = vld [vmem:[#allocation2 + $0x10] sm:$0xff]
    %v2829 = vpack.c.bf16 %v2821, %v2821
    %v2830 = vld [vmem:[#allocation14] sm:$0xf]
    %v2831 = vld [vmem:[#allocation14 + $0x4] sm:$0xf]
    %v2832 = vld [vmem:[#allocation14 + $0x8] sm:$0xf]
    %v2833 = vld [vmem:[#allocation14 + $0xc] sm:$0xf]
    %2835 = vrot.lane.b32.xlu0 %v2829, 32
    %v2836 = vpop.permute.xlu0 %2835
    %v2841 = vunpack.c.l.b16 %v2830
    %v2842 = vunpack.c.l.b16 %v2831
    %v2843 = vunpack.c.l.b16 %v2832
    %v2844 = vunpack.c.l.b16 %v2833
    %v2845 = vpack.c.b16 %v2842, %v2841
    %v2846 = vpack.c.b16 %v2844, %v2843
    %v2850 = vsel %vm136, %v2836, 0
    %2852 = vmatprep.subr.bf16.mxu0 0
    %2853 = vmatpush1.bf16.msra.mxu0 %v2845
    %2854 = vmatprep.subr.bf16.mxu0 0
    %2855 = vmatpush1.bf16.msra.mxu0 %v2846
    %2856 = vmatprep.subr.bf16.mxu0 0
    %2857 = vmatpush1.bf16.msra.mxu0 0
    %2858 = vmatprep.subr.bf16.mxu0 0
    %2859 = vmatpush1.bf16.msra.mxu0 0
    %2860 = vmatprep.subr.bf16.mxu0 0
    %2861 = vmatpush1.bf16.msra.mxu0 0
    %2862 = vmatprep.subr.bf16.mxu0 0
    %2863 = vmatpush1.bf16.msra.mxu0 0
    %2864 = vmatprep.subr.bf16.mxu0 0
    %2865 = vmatpush1.bf16.msra.mxu0 0
    %2866 = vmatprep.subr.bf16.mxu0 0
    %2867 = vmatpush1.bf16.msra.mxu0 0
    %2868 = vmatprep.subr.bf16.mxu0 0
    %2869 = vmatpush1.bf16.msra.mxu0 0
    %2870 = vmatprep.subr.bf16.mxu0 0
    %2871 = vmatpush1.bf16.msra.mxu0 0
    %2872 = vmatprep.subr.bf16.mxu0 0
    %2873 = vmatpush1.bf16.msra.mxu0 0
    %2874 = vmatprep.subr.bf16.mxu0 0
    %2875 = vmatpush1.bf16.msra.mxu0 0
    %2876 = vmatprep.subr.bf16.mxu0 0
    %2877 = vmatpush1.bf16.msra.mxu0 0
    %2878 = vmatprep.subr.bf16.mxu0 0
    %2879 = vmatpush1.bf16.msra.mxu0 0
    %2880 = vmatprep.subr.bf16.mxu0 0
    %2881 = vmatpush1.bf16.msra.mxu0 0
    %2882 = vmatprep.subr.bf16.mxu0 0
    %2883 = vmatpush1.bf16.msra.mxu0 0
    %2884 = vmatprep.mubr.bf16.mxu0 0
    %2885 = vmatmul.mubr.bf16.gmra.mrb[0].mxu0 %v2850
    %v2886 = vpop.f32.mrb[0].mxu0
    %v2887 = vadd.f32 0.0, %v2886
    %v2888 = vpop.f32.mrb[0].mxu0
    %v2889 = vpop.f32.mrb[0].mxu0
    %v2890 = vpop.f32.mrb[0].mxu0
    %2891 = vdwg.mxu0
    %v2892 = vadd.f32 %v2828, %v2887
    %v2893 = vmul.f32 %v2892, 0.5
    %v2894 = vtanh.pop %v2893
    %v2895 = vmul.f32 %v2894, 0.5
    %v2896 = vadd.f32 %v2895, 0.5
    %v2897 = vtanh.pop %v2892
    %v2898 = vmul.f32 %v2896, %v2815
    %2900 = vrot.lane.b32.xlu0 %v2897, 64
    %v2901 = vpop.permute.xlu0 %2900
    %v2903 = vmul.f32 %v2896, %v2901
    %2905 = vrot.lane.b32.xlu0 %v2903, 32
    %v2906 = vpop.permute.xlu0 %2905
    %v2908 = vadd.f32 %v2898, %v2906
    %v2909 = vtanh.pop %v2908
    %2911 = vrot.lane.b32.xlu0 %v2909, 64
    %v2912 = vpop.permute.xlu0 %2911
    %v2914 = vmul.f32 %v2896, %v2912
    %2916 = vrot.lane.b32.xlu0 %v2914, 48
    %v2917 = vpop.permute.xlu0 %2916
    %vm2919 = vcmask 189568
    %2920 = vst.msk [vmem:[%s13] sm:$0x3] %vm2919, %v2917
    %v2921 = vld [vmem:[#allocation2 + $0x18] sm:$0xff]
    %v2922 = vpack.c.bf16 %v2914, %v2914
    %v2923 = vld [vmem:[#allocation14] sm:$0xf]
    %v2924 = vld [vmem:[#allocation14 + $0x4] sm:$0xf]
    %v2925 = vld [vmem:[#allocation14 + $0x8] sm:$0xf]
    %v2926 = vld [vmem:[#allocation14 + $0xc] sm:$0xf]
    %2928 = vrot.lane.b32.xlu0 %v2922, 32
    %v2929 = vpop.permute.xlu0 %2928
    %v2934 = vunpack.c.l.b16 %v2923
    %v2935 = vunpack.c.l.b16 %v2924
    %v2936 = vunpack.c.l.b16 %v2925
    %v2937 = vunpack.c.l.b16 %v2926
    %v2938 = vpack.c.b16 %v2935, %v2934
    %v2939 = vpack.c.b16 %v2937, %v2936
    %v2943 = vsel %vm136, %v2929, 0
    %2945 = vmatprep.subr.bf16.mxu0 0
    %2946 = vmatpush1.bf16.msra.mxu0 %v2938
    %2947 = vmatprep.subr.bf16.mxu0 0
    %2948 = vmatpush1.bf16.msra.mxu0 %v2939
    %2949 = vmatprep.subr.bf16.mxu0 0
    %2950 = vmatpush1.bf16.msra.mxu0 0
    %2951 = vmatprep.subr.bf16.mxu0 0
    %2952 = vmatpush1.bf16.msra.mxu0 0
    %2953 = vmatprep.subr.bf16.mxu0 0
    %2954 = vmatpush1.bf16.msra.mxu0 0
    %2955 = vmatprep.subr.bf16.mxu0 0
    %2956 = vmatpush1.bf16.msra.mxu0 0
    %2957 = vmatprep.subr.bf16.mxu0 0
    %2958 = vmatpush1.bf16.msra.mxu0 0
    %2959 = vmatprep.subr.bf16.mxu0 0
    %2960 = vmatpush1.bf16.msra.mxu0 0
    %2961 = vmatprep.subr.bf16.mxu0 0
    %2962 = vmatpush1.bf16.msra.mxu0 0
    %2963 = vmatprep.subr.bf16.mxu0 0
    %2964 = vmatpush1.bf16.msra.mxu0 0
    %2965 = vmatprep.subr.bf16.mxu0 0
    %2966 = vmatpush1.bf16.msra.mxu0 0
    %2967 = vmatprep.subr.bf16.mxu0 0
    %2968 = vmatpush1.bf16.msra.mxu0 0
    %2969 = vmatprep.subr.bf16.mxu0 0
    %2970 = vmatpush1.bf16.msra.mxu0 0
    %2971 = vmatprep.subr.bf16.mxu0 0
    %2972 = vmatpush1.bf16.msra.mxu0 0
    %2973 = vmatprep.subr.bf16.mxu0 0
    %2974 = vmatpush1.bf16.msra.mxu0 0
    %2975 = vmatprep.subr.bf16.mxu0 0
    %2976 = vmatpush1.bf16.msra.mxu0 0
    %2977 = vmatprep.mubr.bf16.mxu0 0
    %2978 = vmatmul.mubr.bf16.gmra.mrb[0].mxu0 %v2943
    %v2979 = vpop.f32.mrb[0].mxu0
    %v2980 = vadd.f32 0.0, %v2979
    %v2981 = vpop.f32.mrb[0].mxu0
    %v2982 = vpop.f32.mrb[0].mxu0
    %v2983 = vpop.f32.mrb[0].mxu0
    %2984 = vdwg.mxu0
    %v2985 = vadd.f32 %v2921, %v2980
    %v2986 = vmul.f32 %v2985, 0.5
    %v2987 = vtanh.pop %v2986
    %v2988 = vmul.f32 %v2987, 0.5
    %v2989 = vadd.f32 %v2988, 0.5
    %v2990 = vtanh.pop %v2985
    %v2991 = vmul.f32 %v2989, %v2908
    %2993 = vrot.lane.b32.xlu0 %v2990, 64
    %v2994 = vpop.permute.xlu0 %2993
    %v2996 = vmul.f32 %v2989, %v2994
    %2998 = vrot.lane.b32.xlu0 %v2996, 32
    %v2999 = vpop.permute.xlu0 %2998
    %v3001 = vadd.f32 %v2991, %v2999
    %v3002 = vtanh.pop %v3001
    %3004 = vrot.lane.b32.xlu0 %v3002, 64
    %v3005 = vpop.permute.xlu0 %3004
    %v3007 = vmul.f32 %v2989, %v3005
    %3009 = vrot.lane.b32.xlu0 %v3007, 56
    %v3010 = vpop.permute.xlu0 %3009
    %vm3012 = vcmask 255168
    %3013 = vst.msk [vmem:[%s13] sm:$0x3] %vm3012, %v3010
    %v3014 = vld [vmem:[#allocation2 + $0x20] sm:$0xff]
    %v3015 = vpack.c.bf16 %v3007, %v3007
    %v3016 = vld [vmem:[#allocation14] sm:$0xf]
    %v3017 = vld [vmem:[#allocation14 + $0x4] sm:$0xf]
    %v3018 = vld [vmem:[#allocation14 + $0x8] sm:$0xf]
    %v3019 = vld [vmem:[#allocation14 + $0xc] sm:$0xf]
    %3021 = vrot.lane.b32.xlu0 %v3015, 32
    %v3022 = vpop.permute.xlu0 %3021
    %v3027 = vunpack.c.l.b16 %v3016
    %v3028 = vunpack.c.l.b16 %v3017
    %v3029 = vunpack.c.l.b16 %v3018
    %v3030 = vunpack.c.l.b16 %v3019
    %v3031 = vpack.c.b16 %v3028, %v3027
    %v3032 = vpack.c.b16 %v3030, %v3029
    %v3036 = vsel %vm136, %v3022, 0
    %3038 = vmatprep.subr.bf16.mxu0 0
    %3039 = vmatpush1.bf16.msra.mxu0 %v3031
    %3040 = vmatprep.subr.bf16.mxu0 0
    %3041 = vmatpush1.bf16.msra.mxu0 %v3032
    %3042 = vmatprep.subr.bf16.mxu0 0
    %3043 = vmatpush1.bf16.msra.mxu0 0
    %3044 = vmatprep.subr.bf16.mxu0 0
    %3045 = vmatpush1.bf16.msra.mxu0 0
    %3046 = vmatprep.subr.bf16.mxu0 0
    %3047 = vmatpush1.bf16.msra.mxu0 0
    %3048 = vmatprep.subr.bf16.mxu0 0
    %3049 = vmatpush1.bf16.msra.mxu0 0
    %3050 = vmatprep.subr.bf16.mxu0 0
    %3051 = vmatpush1.bf16.msra.mxu0 0
    %3052 = vmatprep.subr.bf16.mxu0 0
    %3053 = vmatpush1.bf16.msra.mxu0 0
    %3054 = vmatprep.subr.bf16.mxu0 0
    %3055 = vmatpush1.bf16.msra.mxu0 0
    %3056 = vmatprep.subr.bf16.mxu0 0
    %3057 = vmatpush1.bf16.msra.mxu0 0
    %3058 = vmatprep.subr.bf16.mxu0 0
    %3059 = vmatpush1.bf16.msra.mxu0 0
    %3060 = vmatprep.subr.bf16.mxu0 0
    %3061 = vmatpush1.bf16.msra.mxu0 0
    %3062 = vmatprep.subr.bf16.mxu0 0
    %3063 = vmatpush1.bf16.msra.mxu0 0
    %3064 = vmatprep.subr.bf16.mxu0 0
    %3065 = vmatpush1.bf16.msra.mxu0 0
    %3066 = vmatprep.subr.bf16.mxu0 0
    %3067 = vmatpush1.bf16.msra.mxu0 0
    %3068 = vmatprep.subr.bf16.mxu0 0
    %3069 = vmatpush1.bf16.msra.mxu0 0
    %3070 = vmatprep.mubr.bf16.mxu0 0
    %3071 = vmatmul.mubr.bf16.gmra.mrb[0].mxu0 %v3036
    %v3072 = vpop.f32.mrb[0].mxu0
    %v3073 = vadd.f32 0.0, %v3072
    %v3074 = vpop.f32.mrb[0].mxu0
    %v3075 = vpop.f32.mrb[0].mxu0
    %v3076 = vpop.f32.mrb[0].mxu0
    %3077 = vdwg.mxu0
    %v3078 = vadd.f32 %v3014, %v3073
    %v3079 = vmul.f32 %v3078, 0.5
    %v3080 = vtanh.pop %v3079
    %v3081 = vmul.f32 %v3080, 0.5
    %v3082 = vadd.f32 %v3081, 0.5
    %v3083 = vtanh.pop %v3078
    %v3084 = vmul.f32 %v3082, %v3001
    %3086 = vrot.lane.b32.xlu0 %v3083, 64
    %v3087 = vpop.permute.xlu0 %3086
    %v3089 = vmul.f32 %v3082, %v3087
    %3091 = vrot.lane.b32.xlu0 %v3089, 32
    %v3092 = vpop.permute.xlu0 %3091
    %v3094 = vadd.f32 %v3084, %v3092
    %v3095 = vtanh.pop %v3094
    %3097 = vrot.lane.b32.xlu0 %v3095, 64
    %v3098 = vpop.permute.xlu0 %3097
    %v3100 = vmul.f32 %v3082, %v3098
    %3102 = vrot.lane.b32.xlu0 %v3100, 64
    %v3103 = vpop.permute.xlu0 %3102
    %vm3105 = vcmask 320768
    %3106 = vst.msk [vmem:[%s13] sm:$0x3] %vm3105, %v3103
    %v3107 = vld [vmem:[#allocation2 + $0x28] sm:$0xff]
    %v3108 = vpack.c.bf16 %v3100, %v3100
    %v3109 = vld [vmem:[#allocation14] sm:$0xf]
    %v3110 = vld [vmem:[#allocation14 + $0x4] sm:$0xf]
    %v3111 = vld [vmem:[#allocation14 + $0x8] sm:$0xf]
    %v3112 = vld [vmem:[#allocation14 + $0xc] sm:$0xf]
    %3114 = vrot.lane.b32.xlu0 %v3108, 32
    %v3115 = vpop.permute.xlu0 %3114
    %v3120 = vunpack.c.l.b16 %v3109
    %v3121 = vunpack.c.l.b16 %v3110
    %v3122 = vunpack.c.l.b16 %v3111
    %v3123 = vunpack.c.l.b16 %v3112
    %v3124 = vpack.c.b16 %v3121, %v3120
    %v3125 = vpack.c.b16 %v3123, %v3122
    %v3129 = vsel %vm136, %v3115, 0
    %3131 = vmatprep.subr.bf16.mxu0 0
    %3132 = vmatpush1.bf16.msra.mxu0 %v3124
    %3133 = vmatprep.subr.bf16.mxu0 0
    %3134 = vmatpush1.bf16.msra.mxu0 %v3125
    %3135 = vmatprep.subr.bf16.mxu0 0
    %3136 = vmatpush1.bf16.msra.mxu0 0
    %3137 = vmatprep.subr.bf16.mxu0 0
    %3138 = vmatpush1.bf16.msra.mxu0 0
    %3139 = vmatprep.subr.bf16.mxu0 0
    %3140 = vmatpush1.bf16.msra.mxu0 0
    %3141 = vmatprep.subr.bf16.mxu0 0
    %3142 = vmatpush1.bf16.msra.mxu0 0
    %3143 = vmatprep.subr.bf16.mxu0 0
    %3144 = vmatpush1.bf16.msra.mxu0 0
    %3145 = vmatprep.subr.bf16.mxu0 0
    %3146 = vmatpush1.bf16.msra.mxu0 0
    %3147 = vmatprep.subr.bf16.mxu0 0
    %3148 = vmatpush1.bf16.msra.mxu0 0
    %3149 = vmatprep.subr.bf16.mxu0 0
    %3150 = vmatpush1.bf16.msra.mxu0 0
    %3151 = vmatprep.subr.bf16.mxu0 0
    %3152 = vmatpush1.bf16.msra.mxu0 0
    %3153 = vmatprep.subr.bf16.mxu0 0
    %3154 = vmatpush1.bf16.msra.mxu0 0
    %3155 = vmatprep.subr.bf16.mxu0 0
    %3156 = vmatpush1.bf16.msra.mxu0 0
    %3157 = vmatprep.subr.bf16.mxu0 0
    %3158 = vmatpush1.bf16.msra.mxu0 0
    %3159 = vmatprep.subr.bf16.mxu0 0
    %3160 = vmatpush1.bf16.msra.mxu0 0
    %3161 = vmatprep.subr.bf16.mxu0 0
    %3162 = vmatpush1.bf16.msra.mxu0 0
    %3163 = vmatprep.mubr.bf16.mxu0 0
    %3164 = vmatmul.mubr.bf16.gmra.mrb[0].mxu0 %v3129
    %v3165 = vpop.f32.mrb[0].mxu0
    %v3166 = vadd.f32 0.0, %v3165
    %v3167 = vpop.f32.mrb[0].mxu0
    %v3168 = vpop.f32.mrb[0].mxu0
    %v3169 = vpop.f32.mrb[0].mxu0
    %3170 = vdwg.mxu0
    %v3171 = vadd.f32 %v3107, %v3166
    %v3172 = vmul.f32 %v3171, 0.5
    %v3173 = vtanh.pop %v3172
    %v3174 = vmul.f32 %v3173, 0.5
    %v3175 = vadd.f32 %v3174, 0.5
    %v3176 = vtanh.pop %v3171
    %v3177 = vmul.f32 %v3175, %v3094
    %3179 = vrot.lane.b32.xlu0 %v3176, 64
    %v3180 = vpop.permute.xlu0 %3179
    %v3182 = vmul.f32 %v3175, %v3180
    %3184 = vrot.lane.b32.xlu0 %v3182, 32
    %v3185 = vpop.permute.xlu0 %3184
    %v3187 = vadd.f32 %v3177, %v3185
    %v3188 = vtanh.pop %v3187
    %3190 = vrot.lane.b32.xlu0 %v3188, 64
    %v3191 = vpop.permute.xlu0 %3190
    %v3193 = vmul.f32 %v3175, %v3191
    %3195 = vrot.lane.b32.xlu0 %v3193, 72
    %v3196 = vpop.permute.xlu0 %3195
    %vm3198 = vcmask 386368
    %3199 = vst.msk [vmem:[%s13] sm:$0x3] %vm3198, %v3196
    %v3200 = vld [vmem:[#allocation2 + $0x30] sm:$0xff]
    %v3201 = vpack.c.bf16 %v3193, %v3193
    %v3202 = vld [vmem:[#allocation14] sm:$0xf]
    %v3203 = vld [vmem:[#allocation14 + $0x4] sm:$0xf]
    %v3204 = vld [vmem:[#allocation14 + $0x8] sm:$0xf]
    %v3205 = vld [vmem:[#allocation14 + $0xc] sm:$0xf]
    %3207 = vrot.lane.b32.xlu0 %v3201, 32
    %v3208 = vpop.permute.xlu0 %3207
    %v3213 = vunpack.c.l.b16 %v3202
    %v3214 = vunpack.c.l.b16 %v3203
    %v3215 = vunpack.c.l.b16 %v3204
    %v3216 = vunpack.c.l.b16 %v3205
    %v3217 = vpack.c.b16 %v3214, %v3213
    %v3218 = vpack.c.b16 %v3216, %v3215
    %v3222 = vsel %vm136, %v3208, 0
    %3224 = vmatprep.subr.bf16.mxu0 0
    %3225 = vmatpush1.bf16.msra.mxu0 %v3217
    %3226 = vmatprep.subr.bf16.mxu0 0
    %3227 = vmatpush1.bf16.msra.mxu0 %v3218
    %3228 = vmatprep.subr.bf16.mxu0 0
    %3229 = vmatpush1.bf16.msra.mxu0 0
    %3230 = vmatprep.subr.bf16.mxu0 0
    %3231 = vmatpush1.bf16.msra.mxu0 0
    %3232 = vmatprep.subr.bf16.mxu0 0
    %3233 = vmatpush1.bf16.msra.mxu0 0
    %3234 = vmatprep.subr.bf16.mxu0 0
    %3235 = vmatpush1.bf16.msra.mxu0 0
    %3236 = vmatprep.subr.bf16.mxu0 0
    %3237 = vmatpush1.bf16.msra.mxu0 0
    %3238 = vmatprep.subr.bf16.mxu0 0
    %3239 = vmatpush1.bf16.msra.mxu0 0
    %3240 = vmatprep.subr.bf16.mxu0 0
    %3241 = vmatpush1.bf16.msra.mxu0 0
    %3242 = vmatprep.subr.bf16.mxu0 0
    %3243 = vmatpush1.bf16.msra.mxu0 0
    %3244 = vmatprep.subr.bf16.mxu0 0
    %3245 = vmatpush1.bf16.msra.mxu0 0
    %3246 = vmatprep.subr.bf16.mxu0 0
    %3247 = vmatpush1.bf16.msra.mxu0 0
    %3248 = vmatprep.subr.bf16.mxu0 0
    %3249 = vmatpush1.bf16.msra.mxu0 0
    %3250 = vmatprep.subr.bf16.mxu0 0
    %3251 = vmatpush1.bf16.msra.mxu0 0
    %3252 = vmatprep.subr.bf16.mxu0 0
    %3253 = vmatpush1.bf16.msra.mxu0 0
    %3254 = vmatprep.subr.bf16.mxu0 0
    %3255 = vmatpush1.bf16.msra.mxu0 0
    %3256 = vmatprep.mubr.bf16.mxu0 0
    %3257 = vmatmul.mubr.bf16.gmra.mrb[0].mxu0 %v3222
    %v3258 = vpop.f32.mrb[0].mxu0
    %v3259 = vadd.f32 0.0, %v3258
    %v3260 = vpop.f32.mrb[0].mxu0
    %v3261 = vpop.f32.mrb[0].mxu0
    %v3262 = vpop.f32.mrb[0].mxu0
    %3263 = vdwg.mxu0
    %v3264 = vadd.f32 %v3200, %v3259
    %v3265 = vmul.f32 %v3264, 0.5
    %v3266 = vtanh.pop %v3265
    %v3267 = vmul.f32 %v3266, 0.5
    %v3268 = vadd.f32 %v3267, 0.5
    %v3269 = vtanh.pop %v3264
    %v3270 = vmul.f32 %v3268, %v3187
    %3272 = vrot.lane.b32.xlu0 %v3269, 64
    %v3273 = vpop.permute.xlu0 %3272
    %v3275 = vmul.f32 %v3268, %v3273
    %3277 = vrot.lane.b32.xlu0 %v3275, 32
    %v3278 = vpop.permute.xlu0 %3277
    %v3280 = vadd.f32 %v3270, %v3278
    %v3281 = vtanh.pop %v3280
    %3283 = vrot.lane.b32.xlu0 %v3281, 64
    %v3284 = vpop.permute.xlu0 %3283
    %v3286 = vmul.f32 %v3268, %v3284
    %3288 = vrot.lane.b32.xlu0 %v3286, 80
    %v3289 = vpop.permute.xlu0 %3288
    %vm3291 = vcmask 451968
    %3292 = vst.msk [vmem:[%s13] sm:$0x3] %vm3291, %v3289
    %v3293 = vld [vmem:[#allocation2 + $0x38] sm:$0xff]
    %v3294 = vpack.c.bf16 %v3286, %v3286
    %v3295 = vld [vmem:[#allocation14] sm:$0xf]
    %v3296 = vld [vmem:[#allocation14 + $0x4] sm:$0xf]
    %v3297 = vld [vmem:[#allocation14 + $0x8] sm:$0xf]
    %v3298 = vld [vmem:[#allocation14 + $0xc] sm:$0xf]
    %3300 = vrot.lane.b32.xlu0 %v3294, 32
    %v3301 = vpop.permute.xlu0 %3300
    %v3306 = vunpack.c.l.b16 %v3295
    %v3307 = vunpack.c.l.b16 %v3296
    %v3308 = vunpack.c.l.b16 %v3297
    %v3309 = vunpack.c.l.b16 %v3298
    %v3310 = vpack.c.b16 %v3307, %v3306
    %v3311 = vpack.c.b16 %v3309, %v3308
    %v3315 = vsel %vm136, %v3301, 0
    %3317 = vmatprep.subr.bf16.mxu0 0
    %3318 = vmatpush1.bf16.msra.mxu0 %v3310
    %3319 = vmatprep.subr.bf16.mxu0 0
    %3320 = vmatpush1.bf16.msra.mxu0 %v3311
    %3321 = vmatprep.subr.bf16.mxu0 0
    %3322 = vmatpush1.bf16.msra.mxu0 0
    %3323 = vmatprep.subr.bf16.mxu0 0
    %3324 = vmatpush1.bf16.msra.mxu0 0
    %3325 = vmatprep.subr.bf16.mxu0 0
    %3326 = vmatpush1.bf16.msra.mxu0 0
    %3327 = vmatprep.subr.bf16.mxu0 0
    %3328 = vmatpush1.bf16.msra.mxu0 0
    %3329 = vmatprep.subr.bf16.mxu0 0
    %3330 = vmatpush1.bf16.msra.mxu0 0
    %3331 = vmatprep.subr.bf16.mxu0 0
    %3332 = vmatpush1.bf16.msra.mxu0 0
    %3333 = vmatprep.subr.bf16.mxu0 0
    %3334 = vmatpush1.bf16.msra.mxu0 0
    %3335 = vmatprep.subr.bf16.mxu0 0
    %3336 = vmatpush1.bf16.msra.mxu0 0
    %3337 = vmatprep.subr.bf16.mxu0 0
    %3338 = vmatpush1.bf16.msra.mxu0 0
    %3339 = vmatprep.subr.bf16.mxu0 0
    %3340 = vmatpush1.bf16.msra.mxu0 0
    %3341 = vmatprep.subr.bf16.mxu0 0
    %3342 = vmatpush1.bf16.msra.mxu0 0
    %3343 = vmatprep.subr.bf16.mxu0 0
    %3344 = vmatpush1.bf16.msra.mxu0 0
    %3345 = vmatprep.subr.bf16.mxu0 0
    %3346 = vmatpush1.bf16.msra.mxu0 0
    %3347 = vmatprep.subr.bf16.mxu0 0
    %3348 = vmatpush1.bf16.msra.mxu0 0
    %3349 = vmatprep.mubr.bf16.mxu0 0
    %3350 = vmatmul.mubr.bf16.gmra.mrb[0].mxu0 %v3315
    %v3351 = vpop.f32.mrb[0].mxu0
    %v3352 = vadd.f32 0.0, %v3351
    %v3353 = vpop.f32.mrb[0].mxu0
    %v3354 = vpop.f32.mrb[0].mxu0
    %v3355 = vpop.f32.mrb[0].mxu0
    %3356 = vdwg.mxu0
    %v3357 = vadd.f32 %v3293, %v3352
    %v3358 = vmul.f32 %v3357, 0.5
    %v3359 = vtanh.pop %v3358
    %v3360 = vmul.f32 %v3359, 0.5
    %v3361 = vadd.f32 %v3360, 0.5
    %v3362 = vtanh.pop %v3357
    %v3363 = vmul.f32 %v3361, %v3280
    %3365 = vrot.lane.b32.xlu0 %v3362, 64
    %v3366 = vpop.permute.xlu0 %3365
    %v3368 = vmul.f32 %v3361, %v3366
    %3370 = vrot.lane.b32.xlu0 %v3368, 32
    %v3371 = vpop.permute.xlu0 %3370
    %v3373 = vadd.f32 %v3363, %v3371
    %v3374 = vtanh.pop %v3373
    %3376 = vrot.lane.b32.xlu0 %v3374, 64
    %v3377 = vpop.permute.xlu0 %3376
    %v3379 = vmul.f32 %v3361, %v3377
    %3381 = vrot.lane.b32.xlu0 %v3379, 88
    %v3382 = vpop.permute.xlu0 %3381
    %vm3384 = vcmask 517568
    %3385 = vst.msk [vmem:[%s13] sm:$0x3] %vm3384, %v3382
    // Predicated region
    $region82: #{autoencoder_lstm_forward.1} parent=1 // pred_check
      _
    $region83: #{autoencoder_lstm_forward.1} parent=1 // pred_check_branch
      %3387 = sbr.rel (0) target = $region85
    $region84: #{autoencoder_lstm_forward.1} parent=1 // pred_region
      _
    $region85: #{autoencoder_lstm_forward.1} parent=1 // pred_fallthru
      _
    // Predicated region
    $region86: #{autoencoder_lstm_forward.1} parent=1 // pred_check
      _
    $region87: #{autoencoder_lstm_forward.1} parent=1 // pred_check_branch
      %3389 = sbr.rel (0) target = $region89
    $region88: #{autoencoder_lstm_forward.1} parent=1 // pred_region
      _
    $region89: #{autoencoder_lstm_forward.1} parent=1 // pred_fallthru
      _
    %3390 = vsyncpa [#allocation5], 1
    %3391 = vsyncpa [#allocation7], 1
    %3392 = vsyncpa [#allocation10], 1
    %3393 = vsyncpa [#allocation13], 1

</llo_original>
